<compile_context>
chip_gen: v5e
topology: v5e:2x2
jax: 0.10.0
libtpu: 0.0.40
codegen_flags: <defaults>
</compile_context>

<pallas_src>
import jax
import jax.numpy as jnp
from jax.experimental import pallas as pl
from jax.experimental.pallas import tpu as pltpu


# ---------------------------------------------------------------------------
# Fused kernel: conv3x3+IN+ReLU -> conv3x3+IN -> residual add, one batch sample
# ---------------------------------------------------------------------------
def _make_resblock_kernel(C, H, W):
    HW = H * W

    def reflect_pad(a3):
        # (C, H, W) -> (C, H+2, W+2), ReflectionPad2d(1) semantics.
        a3 = jnp.concatenate(
            [a3[:, 1:2, :], a3, a3[:, H - 2:H - 1, :]], axis=1)
        a3 = jnp.concatenate(
            [a3[:, :, 1:2], a3, a3[:, :, W - 2:W - 1]], axis=2)
        return a3

    def conv3x3_instancenorm(a2, w_ref):
        # a2: (C, H*W) f32 activations; w_ref: (C_out, 9*C_in) packed weights.
        apad = reflect_pad(a2.reshape(C, H, W))              # (C, H+2, W+2)
        # im2col: contraction axis ordered (tap = dy*3+dx, c_in) to match the
        # wrapper-side weight packing.
        cols = jnp.concatenate(
            [apad[:, dy:dy + H, dx:dx + W].reshape(C, HW)
             for dy in range(3) for dx in range(3)],
            axis=0)                                          # (9*C, H*W)
        acc = jnp.dot(w_ref[...], cols,
                      preferred_element_type=jnp.float32)    # (C, H*W)
        # InstanceNorm2d (affine=False, eps=1e-5, biased variance over H*W).
        # Conv bias omitted: it is a per-channel constant and cancels exactly
        # under the mean subtraction below.
        mean = jnp.mean(acc, axis=1, keepdims=True)
        var = jnp.mean(acc * acc, axis=1, keepdims=True) - mean * mean
        return (acc - mean) * jax.lax.rsqrt(var + 1e-5)

    def kernel(x_ref, w1_ref, w2_ref, o_ref):
        # x_ref/o_ref: (1, C, H*W) lane-dense per-sample blocks.
        x2 = x_ref[0].astype(jnp.float32)                    # (C, H*W)
        h = jnp.maximum(conv3x3_instancenorm(x2, w1_ref), 0.0)
        y = conv3x3_instancenorm(h, w2_ref)
        o_ref[0] = (x2 + y).astype(o_ref.dtype)

    return kernel


# ---------------------------------------------------------------------------
# Wrapper
# ---------------------------------------------------------------------------
def residual_block(x, w1, b1, w2, b2):
    """x: (N, C, H, W) float32; w*: (C, C, 3, 3); b*: (C,)."""
    N, C, H, W = x.shape
    HW = H * W

    # Pack weights for the single im2col matmul:
    # (C_out, C_in, 3, 3) -> (C_out, ky, kx, C_in) -> (C_out, 9*C_in).
    w1c = jnp.transpose(w1, (0, 2, 3, 1)).reshape(C, 9 * C)
    w2c = jnp.transpose(w2, (0, 2, 3, 1)).reshape(C, 9 * C)
    # b1/b2 are mathematically cancelled by InstanceNorm's mean subtraction
    # (affine=False), so they are intentionally not passed to the kernel.
    del b1, b2

    x_flat = x.reshape(N, C, HW)  # lane-dense view (free reshape in XLA)

    out_flat = pl.pallas_call(
        _make_resblock_kernel(C, H, W),
        out_shape=jax.ShapeDtypeStruct((N, C, HW), x.dtype),
        grid=(N,),
        in_specs=[
            pl.BlockSpec((1, C, HW), lambda n: (n, 0, 0)),
            pl.BlockSpec((C, 9 * C), lambda n: (0, 0)),
            pl.BlockSpec((C, 9 * C), lambda n: (0, 0)),
        ],
        out_specs=pl.BlockSpec((1, C, HW), lambda n: (n, 0, 0)),
        compiler_params=pltpu.CompilerParams(
            dimension_semantics=("parallel",)),
    )(x_flat, w1c, w2c)

    return out_flat.reshape(N, C, H, W)


# ---------------------------------------------------------------------------
# Pure-JAX reference (mirrors the PyTorch module exactly, bias included)
# ---------------------------------------------------------------------------
def residual_block_ref(x, w1, b1, w2, b2):
    def conv3x3(inp, w, b):
        pad = jnp.pad(inp, ((0, 0), (0, 0), (1, 1), (1, 1)), mode="reflect")
        out = jax.lax.conv_general_dilated(
            pad, w, window_strides=(1, 1), padding="VALID",
            dimension_numbers=("NCHW", "OIHW", "NCHW"))
        return out + b[None, :, None, None]

    def inorm(y):
        m = jnp.mean(y, axis=(2, 3), keepdims=True)
        v = jnp.mean((y - m) ** 2, axis=(2, 3), keepdims=True)
        return (y - m) * jax.lax.rsqrt(v + 1e-5)

    h = jax.nn.relu(inorm(conv3x3(x, w1, b1)))
    h = inorm(conv3x3(h, w2, b2))
    return x + h


# ---------------------------------------------------------------------------
if __name__ == "__main__":
    N, C, H, W = 2, 4, 16, 16

    key = jax.random.PRNGKey(0)
    kx, kw1, kb1, kw2, kb2 = jax.random.split(key, 5)

    x = jax.random.normal(kx, (N, C, H, W), dtype=jnp.float32)
    # Deterministic synthetic parameters (Conv2d(C, C, kernel_size=3) shapes).
    w1 = 0.2 * jax.random.normal(kw1, (C, C, 3, 3), dtype=jnp.float32)
    b1 = 0.1 * jax.random.normal(kb1, (C,), dtype=jnp.float32)
    w2 = 0.2 * jax.random.normal(kw2, (C, C, 3, 3), dtype=jnp.float32)
    b2 = 0.1 * jax.random.normal(kb2, (C,), dtype=jnp.float32)

    out = residual_block(x, w1, b1, w2, b2)
    out = jax.block_until_ready(out)

    ref = residual_block_ref(x, w1, b1, w2, b2)
    assert out.shape == (N, C, H, W) and out.dtype == jnp.float32
    assert jnp.allclose(out, ref, rtol=2e-3, atol=2e-3), "mismatch vs reference"

    print("KERNEL_OK")
</pallas_src>

<mosaic_0001>
module attributes {stable_mosaic.version = 11 : i64} {
  func.func @kernel(%arg0: i32, %arg1: memref<1x4x256xf32, #tpu.memory_space<vmem>>, %arg2: memref<4x36xf32, #tpu.memory_space<vmem>>, %arg3: memref<4x36xf32, #tpu.memory_space<vmem>>, %arg4: memref<1x4x256xf32, #tpu.memory_space<vmem>>) attributes {dimension_semantics = [#tpu.dimension_semantics<parallel>], iteration_bounds = array<i64: 2>, scalar_prefetch = 0 : i64, scratch_operands = 0 : i64, tpu.core_type = #tpu.core_type<tc>, window_params = [{transform_indices = @transform_0, window_bounds = array<i64: 1, 4, 256>}, {pipeline_mode = #tpu.pipeline_mode<synchronous>, transform_indices = @transform_1, window_bounds = array<i64: 4, 36>}, {pipeline_mode = #tpu.pipeline_mode<synchronous>, transform_indices = @transform_2, window_bounds = array<i64: 4, 36>}, {transform_indices = @transform_3, window_bounds = array<i64: 1, 4, 256>}]} {
    %c0 = arith.constant 0 : index
    %c0_0 = arith.constant 0 : index
    %c0_1 = arith.constant 0 : index
    %0 = vector.load %arg1[%c0, %c0_0, %c0_1] : memref<1x4x256xf32, #tpu.memory_space<vmem>>, vector<1x4x256xf32>
    %1 = vector.shape_cast %0 : vector<1x4x256xf32> to vector<4x256xf32>
    %2 = vector.shape_cast %1 : vector<4x256xf32> to vector<4x16x16xf32>
    %3 = vector.extract_strided_slice %2 {offsets = [0, 1, 0], sizes = [4, 1, 16], strides = [1, 1, 1]} : vector<4x16x16xf32> to vector<4x1x16xf32>
    %4 = vector.extract_strided_slice %2 {offsets = [0, 14, 0], sizes = [4, 1, 16], strides = [1, 1, 1]} : vector<4x16x16xf32> to vector<4x1x16xf32>
    %5 = tpu.concatenate %3, %2, %4 in 1 : vector<4x1x16xf32>, vector<4x16x16xf32>, vector<4x1x16xf32> -> vector<4x18x16xf32>
    %6 = vector.extract_strided_slice %5 {offsets = [0, 0, 1], sizes = [4, 18, 1], strides = [1, 1, 1]} : vector<4x18x16xf32> to vector<4x18x1xf32>
    %7 = vector.extract_strided_slice %5 {offsets = [0, 0, 14], sizes = [4, 18, 1], strides = [1, 1, 1]} : vector<4x18x16xf32> to vector<4x18x1xf32>
    %8 = tpu.concatenate %6, %5, %7 in 2 : vector<4x18x1xf32>, vector<4x18x16xf32>, vector<4x18x1xf32> -> vector<4x18x18xf32>
    %9 = vector.extract_strided_slice %8 {offsets = [0, 0, 0], sizes = [4, 16, 16], strides = [1, 1, 1]} : vector<4x18x18xf32> to vector<4x16x16xf32>
    %10 = vector.shape_cast %9 : vector<4x16x16xf32> to vector<4x256xf32>
    %11 = vector.extract_strided_slice %8 {offsets = [0, 0, 1], sizes = [4, 16, 16], strides = [1, 1, 1]} : vector<4x18x18xf32> to vector<4x16x16xf32>
    %12 = vector.shape_cast %11 : vector<4x16x16xf32> to vector<4x256xf32>
    %13 = vector.extract_strided_slice %8 {offsets = [0, 0, 2], sizes = [4, 16, 16], strides = [1, 1, 1]} : vector<4x18x18xf32> to vector<4x16x16xf32>
    %14 = vector.shape_cast %13 : vector<4x16x16xf32> to vector<4x256xf32>
    %15 = vector.extract_strided_slice %8 {offsets = [0, 1, 0], sizes = [4, 16, 16], strides = [1, 1, 1]} : vector<4x18x18xf32> to vector<4x16x16xf32>
    %16 = vector.shape_cast %15 : vector<4x16x16xf32> to vector<4x256xf32>
    %17 = vector.extract_strided_slice %8 {offsets = [0, 1, 1], sizes = [4, 16, 16], strides = [1, 1, 1]} : vector<4x18x18xf32> to vector<4x16x16xf32>
    %18 = vector.shape_cast %17 : vector<4x16x16xf32> to vector<4x256xf32>
    %19 = vector.extract_strided_slice %8 {offsets = [0, 1, 2], sizes = [4, 16, 16], strides = [1, 1, 1]} : vector<4x18x18xf32> to vector<4x16x16xf32>
    %20 = vector.shape_cast %19 : vector<4x16x16xf32> to vector<4x256xf32>
    %21 = vector.extract_strided_slice %8 {offsets = [0, 2, 0], sizes = [4, 16, 16], strides = [1, 1, 1]} : vector<4x18x18xf32> to vector<4x16x16xf32>
    %22 = vector.shape_cast %21 : vector<4x16x16xf32> to vector<4x256xf32>
    %23 = vector.extract_strided_slice %8 {offsets = [0, 2, 1], sizes = [4, 16, 16], strides = [1, 1, 1]} : vector<4x18x18xf32> to vector<4x16x16xf32>
    %24 = vector.shape_cast %23 : vector<4x16x16xf32> to vector<4x256xf32>
    %25 = vector.extract_strided_slice %8 {offsets = [0, 2, 2], sizes = [4, 16, 16], strides = [1, 1, 1]} : vector<4x18x18xf32> to vector<4x16x16xf32>
    %26 = vector.shape_cast %25 : vector<4x16x16xf32> to vector<4x256xf32>
    %27 = tpu.concatenate %10, %12, %14, %16, %18, %20, %22, %24, %26 in 0 : vector<4x256xf32>, vector<4x256xf32>, vector<4x256xf32>, vector<4x256xf32>, vector<4x256xf32>, vector<4x256xf32>, vector<4x256xf32>, vector<4x256xf32>, vector<4x256xf32> -> vector<36x256xf32>
    %c0_2 = arith.constant 0 : index
    %c0_3 = arith.constant 0 : index
    %28 = vector.load %arg2[%c0_2, %c0_3] : memref<4x36xf32, #tpu.memory_space<vmem>>, vector<4x36xf32>
    %cst = arith.constant dense<0.000000e+00> : vector<4x256xf32>
    %29 = tpu.matmul %28, %27, %cst {dimension_numbers = #tpu.dot_dimension_numbers<[1], [0], [0], [1], [0, 0, 1, 1], [], []>} : vector<4x36xf32>, vector<36x256xf32>, vector<4x256xf32> -> vector<4x256xf32>
    %cst_4 = arith.constant dense<0.000000e+00> : vector<4xf32>
    %30 = vector.multi_reduction <add>, %29, %cst_4 [1] : vector<4x256xf32> to vector<4xf32>
    %31 = vector.shape_cast %30 : vector<4xf32> to vector<4x1xf32>
    %cst_5 = arith.constant 2.560000e+02 : f32
    %32 = vector.broadcast %cst_5 : f32 to vector<4x1xf32>
    %33 = arith.divf %31, %32 : vector<4x1xf32>
    %34 = arith.mulf %29, %29 : vector<4x256xf32>
    %cst_6 = arith.constant dense<0.000000e+00> : vector<4xf32>
    %35 = vector.multi_reduction <add>, %34, %cst_6 [1] : vector<4x256xf32> to vector<4xf32>
    %36 = vector.shape_cast %35 : vector<4xf32> to vector<4x1xf32>
    %cst_7 = arith.constant 2.560000e+02 : f32
    %37 = vector.broadcast %cst_7 : f32 to vector<4x1xf32>
    %38 = arith.divf %36, %37 : vector<4x1xf32>
    %39 = arith.mulf %33, %33 : vector<4x1xf32>
    %40 = arith.subf %38, %39 : vector<4x1xf32>
    %41 = vector.broadcast %33 : vector<4x1xf32> to vector<4x256xf32>
    %42 = arith.subf %29, %41 : vector<4x256xf32>
    %cst_8 = arith.constant 9.99999974E-6 : f32
    %43 = vector.broadcast %cst_8 : f32 to vector<4x1xf32>
    %44 = arith.addf %40, %43 : vector<4x1xf32>
    %45 = math.rsqrt %44 : vector<4x1xf32>
    %46 = vector.broadcast %45 : vector<4x1xf32> to vector<4x256xf32>
    %47 = arith.mulf %42, %46 : vector<4x256xf32>
    %cst_9 = arith.constant 0.000000e+00 : f32
    %48 = vector.broadcast %cst_9 : f32 to vector<4x256xf32>
    %49 = arith.maximumf %47, %48 : vector<4x256xf32>
    %50 = vector.shape_cast %49 : vector<4x256xf32> to vector<4x16x16xf32>
    %51 = vector.extract_strided_slice %50 {offsets = [0, 1, 0], sizes = [4, 1, 16], strides = [1, 1, 1]} : vector<4x16x16xf32> to vector<4x1x16xf32>
    %52 = vector.extract_strided_slice %50 {offsets = [0, 14, 0], sizes = [4, 1, 16], strides = [1, 1, 1]} : vector<4x16x16xf32> to vector<4x1x16xf32>
    %53 = tpu.concatenate %51, %50, %52 in 1 : vector<4x1x16xf32>, vector<4x16x16xf32>, vector<4x1x16xf32> -> vector<4x18x16xf32>
    %54 = vector.extract_strided_slice %53 {offsets = [0, 0, 1], sizes = [4, 18, 1], strides = [1, 1, 1]} : vector<4x18x16xf32> to vector<4x18x1xf32>
    %55 = vector.extract_strided_slice %53 {offsets = [0, 0, 14], sizes = [4, 18, 1], strides = [1, 1, 1]} : vector<4x18x16xf32> to vector<4x18x1xf32>
    %56 = tpu.concatenate %54, %53, %55 in 2 : vector<4x18x1xf32>, vector<4x18x16xf32>, vector<4x18x1xf32> -> vector<4x18x18xf32>
    %57 = vector.extract_strided_slice %56 {offsets = [0, 0, 0], sizes = [4, 16, 16], strides = [1, 1, 1]} : vector<4x18x18xf32> to vector<4x16x16xf32>
    %58 = vector.shape_cast %57 : vector<4x16x16xf32> to vector<4x256xf32>
    %59 = vector.extract_strided_slice %56 {offsets = [0, 0, 1], sizes = [4, 16, 16], strides = [1, 1, 1]} : vector<4x18x18xf32> to vector<4x16x16xf32>
    %60 = vector.shape_cast %59 : vector<4x16x16xf32> to vector<4x256xf32>
    %61 = vector.extract_strided_slice %56 {offsets = [0, 0, 2], sizes = [4, 16, 16], strides = [1, 1, 1]} : vector<4x18x18xf32> to vector<4x16x16xf32>
    %62 = vector.shape_cast %61 : vector<4x16x16xf32> to vector<4x256xf32>
    %63 = vector.extract_strided_slice %56 {offsets = [0, 1, 0], sizes = [4, 16, 16], strides = [1, 1, 1]} : vector<4x18x18xf32> to vector<4x16x16xf32>
    %64 = vector.shape_cast %63 : vector<4x16x16xf32> to vector<4x256xf32>
    %65 = vector.extract_strided_slice %56 {offsets = [0, 1, 1], sizes = [4, 16, 16], strides = [1, 1, 1]} : vector<4x18x18xf32> to vector<4x16x16xf32>
    %66 = vector.shape_cast %65 : vector<4x16x16xf32> to vector<4x256xf32>
    %67 = vector.extract_strided_slice %56 {offsets = [0, 1, 2], sizes = [4, 16, 16], strides = [1, 1, 1]} : vector<4x18x18xf32> to vector<4x16x16xf32>
    %68 = vector.shape_cast %67 : vector<4x16x16xf32> to vector<4x256xf32>
    %69 = vector.extract_strided_slice %56 {offsets = [0, 2, 0], sizes = [4, 16, 16], strides = [1, 1, 1]} : vector<4x18x18xf32> to vector<4x16x16xf32>
    %70 = vector.shape_cast %69 : vector<4x16x16xf32> to vector<4x256xf32>
    %71 = vector.extract_strided_slice %56 {offsets = [0, 2, 1], sizes = [4, 16, 16], strides = [1, 1, 1]} : vector<4x18x18xf32> to vector<4x16x16xf32>
    %72 = vector.shape_cast %71 : vector<4x16x16xf32> to vector<4x256xf32>
    %73 = vector.extract_strided_slice %56 {offsets = [0, 2, 2], sizes = [4, 16, 16], strides = [1, 1, 1]} : vector<4x18x18xf32> to vector<4x16x16xf32>
    %74 = vector.shape_cast %73 : vector<4x16x16xf32> to vector<4x256xf32>
    %75 = tpu.concatenate %58, %60, %62, %64, %66, %68, %70, %72, %74 in 0 : vector<4x256xf32>, vector<4x256xf32>, vector<4x256xf32>, vector<4x256xf32>, vector<4x256xf32>, vector<4x256xf32>, vector<4x256xf32>, vector<4x256xf32>, vector<4x256xf32> -> vector<36x256xf32>
    %c0_10 = arith.constant 0 : index
    %c0_11 = arith.constant 0 : index
    %76 = vector.load %arg3[%c0_10, %c0_11] : memref<4x36xf32, #tpu.memory_space<vmem>>, vector<4x36xf32>
    %cst_12 = arith.constant dense<0.000000e+00> : vector<4x256xf32>
    %77 = tpu.matmul %76, %75, %cst_12 {dimension_numbers = #tpu.dot_dimension_numbers<[1], [0], [0], [1], [0, 0, 1, 1], [], []>} : vector<4x36xf32>, vector<36x256xf32>, vector<4x256xf32> -> vector<4x256xf32>
    %cst_13 = arith.constant dense<0.000000e+00> : vector<4xf32>
    %78 = vector.multi_reduction <add>, %77, %cst_13 [1] : vector<4x256xf32> to vector<4xf32>
    %79 = vector.shape_cast %78 : vector<4xf32> to vector<4x1xf32>
    %cst_14 = arith.constant 2.560000e+02 : f32
    %80 = vector.broadcast %cst_14 : f32 to vector<4x1xf32>
    %81 = arith.divf %79, %80 : vector<4x1xf32>
    %82 = arith.mulf %77, %77 : vector<4x256xf32>
    %cst_15 = arith.constant dense<0.000000e+00> : vector<4xf32>
    %83 = vector.multi_reduction <add>, %82, %cst_15 [1] : vector<4x256xf32> to vector<4xf32>
    %84 = vector.shape_cast %83 : vector<4xf32> to vector<4x1xf32>
    %cst_16 = arith.constant 2.560000e+02 : f32
    %85 = vector.broadcast %cst_16 : f32 to vector<4x1xf32>
    %86 = arith.divf %84, %85 : vector<4x1xf32>
    %87 = arith.mulf %81, %81 : vector<4x1xf32>
    %88 = arith.subf %86, %87 : vector<4x1xf32>
    %89 = vector.broadcast %81 : vector<4x1xf32> to vector<4x256xf32>
    %90 = arith.subf %77, %89 : vector<4x256xf32>
    %cst_17 = arith.constant 9.99999974E-6 : f32
    %91 = vector.broadcast %cst_17 : f32 to vector<4x1xf32>
    %92 = arith.addf %88, %91 : vector<4x1xf32>
    %93 = math.rsqrt %92 : vector<4x1xf32>
    %94 = vector.broadcast %93 : vector<4x1xf32> to vector<4x256xf32>
    %95 = arith.mulf %90, %94 : vector<4x256xf32>
    %96 = arith.addf %1, %95 : vector<4x256xf32>
    %c0_18 = arith.constant 0 : index
    %c0_19 = arith.constant 0 : index
    %c0_20 = arith.constant 0 : index
    %97 = vector.load %arg4[%c0_18, %c0_19, %c0_20] : memref<1x4x256xf32, #tpu.memory_space<vmem>>, vector<1x4x256xf32>
    %98 = vector.shape_cast %97 : vector<1x4x256xf32> to vector<4x256xf32>
    %99 = vector.shape_cast %96 : vector<4x256xf32> to vector<1x4x256xf32>
    tpu.vector_store %arg4[%c0_18, %c0_19, %c0_20], %99 {strides = array<i32>} : memref<1x4x256xf32, #tpu.memory_space<vmem>>, vector<1x4x256xf32>,
    return
  }
  func.func @transform_0(%arg0: i32) -> (i32, i32, i32) {
    %c0_i32 = arith.constant 0 : i32
    %c0_i32_0 = arith.constant 0 : i32
    %c0_i32_1 = arith.constant 0 : i32
    return %arg0, %c0_i32, %c0_i32_0 : i32, i32, i32
  }
  func.func @transform_1(%arg0: i32) -> (i32, i32) {
    %c0_i32 = arith.constant 0 : i32
    %c0_i32_0 = arith.constant 0 : i32
    %c0_i32_1 = arith.constant 0 : i32
    return %c0_i32, %c0_i32_0 : i32, i32
  }
  func.func @transform_2(%arg0: i32) -> (i32, i32) {
    %c0_i32 = arith.constant 0 : i32
    %c0_i32_0 = arith.constant 0 : i32
    %c0_i32_1 = arith.constant 0 : i32
    return %c0_i32, %c0_i32_0 : i32, i32
  }
  func.func @transform_3(%arg0: i32) -> (i32, i32, i32) {
    %c0_i32 = arith.constant 0 : i32
    %c0_i32_0 = arith.constant 0 : i32
    %c0_i32_1 = arith.constant 0 : i32
    return %arg0, %c0_i32, %c0_i32_0 : i32, i32, i32
  }
}

</mosaic_0001>

<llo_original>
// kernel: tpu_custom_call.1
$region0: #{tpu_custom_call.1}
  #allocation0 [shape = 'u32[]', space=smem, size = 0x4, offset = 0x4, fixed_abs, tag = 'smem constant byte address 0x4 - core index']
  #allocation1 [shape = 'u32[72,128]{1,0:T(1,128)}', space=vmem, size = 0x9000, scoped, tag = 'internal scratch']
  %s0 = inlined_call_operand.hbm [shape: f32[2,4,256], index: 0, kind: input, shape index: {}]
  %s1 = inlined_call_operand.hbm [shape: f32[4,36], index: 1, kind: input, shape index: {}]
  %s2 = inlined_call_operand.hbm [shape: f32[4,36], index: 2, kind: input, shape index: {}]
  %s3 = inlined_call_operand.hbm [shape: f32[2,4,256], index: 3, kind: output, shape index: {}]
  %s4 = sld [smem:[#allocation0]]
  $region57: #{tpu_custom_call.1} parent=0
    _
  %s6 = ssub.s32 1, %s4
  %s7 = scalar_select 0, %s6, %s4
  $region1: #{tpu_custom_call.1} parent=0
    #allocation2 [shape = 'u8[8192]{0}', space=vmem, size = 0x2000, scoped, tag = 'input window, operand 0']
    #allocation3 [shape = 's32[2]{0}', space=sflag, size = 0x8, scoped, tag = 'scoped memory for tpu_custom_call.1']
    #allocation4 [shape = 's32[2]{0}', space=sflag, size = 0x8, scoped, tag = 'scoped memory for tpu_custom_call.1']
    #allocation5 [shape = 'u8[2048]{0}', space=vmem, size = 0x800, scoped, tag = 'input window, operand 1, single buffered']
    #allocation6 [shape = 's32[1]{0}', space=sflag, size = 0x4, scoped, tag = 'scoped memory for tpu_custom_call.1']
    #allocation7 [shape = 'u8[2048]{0}', space=vmem, size = 0x800, scoped, tag = 'input window, operand 2, single buffered']
    #allocation8 [shape = 'u8[8192]{0}', space=vmem, size = 0x2000, scoped, tag = 'output window, operand 0']
    %8 = vsyncpa [#allocation3], 0
    %s9 = scalar_lea.sflag [#allocation3], 1
    %10 = vsyncpa %s9, 0
    %11 = vsyncpa [#allocation6], 0
    %12 = vsyncpa [#allocation4], 0
    %s13 = scalar_lea.sflag [#allocation4], 1
    %14 = vsyncpa %s13, 0
    loop: start=0, step=1, limit=4
    $region2: #{tpu_custom_call.1} parent=1 // loop_pre_header
      _
    $region3: #{tpu_custom_call.1} parent=1 // loop_header
      %s16 = sphi 0, %s20
      %p17 = scmp.ge.s32.totalorder %s16, 4
      %s26 = sphi 0, %s28
      %s29 = sphi 0, %s26
      %s30 = sphi 0, %s29
      %s46 = sphi 0, %s30
      %s50 = sphi 0, %s50
      %s52 = sphi 0, %s50
      %s53 = sphi 0, %s52
      %s67 = sphi 0, %s53
      %s71 = sphi 0, %s71
      %s73 = sphi 0, %s71
      %s74 = sphi 0, %s73
      %s88 = sphi 0, %s74
      %s94 = sphi 0, %s96
      %s97 = sphi 0, %s94
      %s98 = sphi 0, %s97
      %s114 = sphi 0, %s98
    $region4: #{tpu_custom_call.1} parent=1 // loop_header_branch
      %19 = sbr.rel (%p17) target = $region8
    $region5: #{tpu_custom_call.1} parent=1 // loop_body
      %s21 = ssub.s32 %s16, 1
      %s22 = ssub.s32 %s16, 2
      %s23 = sadd.s32 %s16, 1
      %s24 = ssub.s32 %s16, %s23
      %p25 = scmp.eq.s32.totalorder %s24, 0
      %s27 = sadd.s32 %s26, 1
      %s28 = scalar_select %p25, %s26, %s27
      %p31 = pneg %p25
      %p32 = scmp.eq.s32.totalorder %s16, 1
      %p33 = por %p31, %p32
      %p34 = scmp.ne.s32.totalorder %s26, %s29
      %p35 = scmp.eq.s32.totalorder %s16, 0
      %p36 = por %p34, %p35
      %p37 = scmp.ne.s32.totalorder %s26, %s29
      %p38 = scmp.eq.s32.totalorder %s21, 1
      %p39 = por %p37, %p38
      %p40 = scmp.ne.s32.totalorder %s29, %s30
      %p41 = scmp.eq.s32.totalorder %s21, 0
      %p42 = por %p40, %p41
      %p43 = scmp.ne.s32.totalorder %s29, %s30
      %p44 = scmp.eq.s32.totalorder %s22, 1
      %p45 = por %p43, %p44
      %p47 = scmp.ne.s32.totalorder %s30, %s46
      %p48 = scmp.eq.s32.totalorder %s22, 0
      %p49 = por %p47, %p48
      %s51 = sadd.s32 %s50, 1
      %p54 = scmp.eq.s32.totalorder %s16, 1
      %p55 = scmp.ne.s32.totalorder %s50, %s52
      %p56 = scmp.eq.s32.totalorder %s16, 0
      %p57 = por %p55, %p56
      %p58 = scmp.ne.s32.totalorder %s50, %s52
      %p59 = scmp.eq.s32.totalorder %s21, 1
      %p60 = por %p58, %p59
      %p61 = scmp.ne.s32.totalorder %s52, %s53
      %p62 = scmp.eq.s32.totalorder %s21, 0
      %p63 = por %p61, %p62
      %p64 = scmp.ne.s32.totalorder %s52, %s53
      %p65 = scmp.eq.s32.totalorder %s22, 1
      %p66 = por %p64, %p65
      %p68 = scmp.ne.s32.totalorder %s53, %s67
      %p69 = scmp.eq.s32.totalorder %s22, 0
      %p70 = por %p68, %p69
      %s72 = sadd.s32 %s71, 1
      %p75 = scmp.eq.s32.totalorder %s16, 1
      %p76 = scmp.ne.s32.totalorder %s71, %s73
      %p77 = scmp.eq.s32.totalorder %s16, 0
      %p78 = por %p76, %p77
      %p79 = scmp.ne.s32.totalorder %s71, %s73
      %p80 = scmp.eq.s32.totalorder %s21, 1
      %p81 = por %p79, %p80
      %p82 = scmp.ne.s32.totalorder %s73, %s74
      %p83 = scmp.eq.s32.totalorder %s21, 0
      %p84 = por %p82, %p83
      %p85 = scmp.ne.s32.totalorder %s73, %s74
      %p86 = scmp.eq.s32.totalorder %s22, 1
      %p87 = por %p85, %p86
      %p89 = scmp.ne.s32.totalorder %s74, %s88
      %p90 = scmp.eq.s32.totalorder %s22, 0
      %p91 = por %p89, %p90
      %s92 = ssub.s32 %s16, %s23
      %p93 = scmp.eq.s32.totalorder %s92, 0
      %s95 = sadd.s32 %s94, 1
      %s96 = scalar_select %p93, %s94, %s95
      %p99 = pneg %p93
      %p100 = scmp.eq.s32.totalorder %s16, 1
      %p101 = por %p99, %p100
      %p102 = scmp.ne.s32.totalorder %s94, %s97
      %p103 = scmp.eq.s32.totalorder %s16, 0
      %p104 = por %p102, %p103
      %p105 = scmp.ne.s32.totalorder %s94, %s97
      %p106 = scmp.eq.s32.totalorder %s21, 1
      %p107 = por %p105, %p106
      %p108 = scmp.ne.s32.totalorder %s97, %s98
      %p109 = scmp.eq.s32.totalorder %s21, 0
      %p110 = por %p108, %p109
      %p111 = scmp.ne.s32.totalorder %s97, %s98
      %p112 = scmp.eq.s32.totalorder %s22, 1
      %p113 = por %p111, %p112
      %p115 = scmp.ne.s32.totalorder %s98, %s114
      %p116 = scmp.eq.s32.totalorder %s22, 0
      %p117 = por %p115, %p116
      %p118 = scmp.le.s32.totalorder 1, %s16
      %p119 = scmp.lt.s32.totalorder %s16, 3
      %p120 = pnand %p118, %p119
      %p121 = pneg %p120
      // Predicated region
      $region9: #{tpu_custom_call.1} parent=5 // pred_check
        _
      $region10: #{tpu_custom_call.1} parent=5 // pred_check_branch
        %123 = sbr.rel (%p120) target = $region12
      $region11: #{tpu_custom_call.1} parent=5 // pred_region
        %s124 = ssub.s32 %s16, 1
        // Predicated region
        $region13: #{tpu_custom_call.1} parent=11 // pred_check
          %p125 = pneg %p63
        $region14: #{tpu_custom_call.1} parent=11 // pred_check_branch
          %127 = sbr.rel (%p125) target = $region16
        $region15: #{tpu_custom_call.1} parent=11 // pred_region
          %129 = vsyncadd [#allocation6], 0
          %s131 = sshll.u32 %s1, 4
          %s132 = int_to_ptr.hbm [resolvable:$true] %s131
          %s133 = sshll.u32 [#allocation5], 4
          %s134 = int_to_ptr.vmem [resolvable:$true] %s133
          %136 = dma.hbm_to_vmem [thread:$0]  %s132, 64, %s134, [#allocation6]
        $region16: #{tpu_custom_call.1} parent=11 // pred_fallthru
          _
        // Predicated region
        $region17: #{tpu_custom_call.1} parent=11 // pred_check
          %p137 = pneg %p84
        $region18: #{tpu_custom_call.1} parent=11 // pred_check_branch
          %139 = sbr.rel (%p137) target = $region20
        $region19: #{tpu_custom_call.1} parent=11 // pred_region
          %141 = vsyncadd [#allocation6], 0
          %s143 = sshll.u32 %s2, 4
          %s144 = int_to_ptr.hbm [resolvable:$true] %s143
          %s145 = sshll.u32 [#allocation7], 4
          %s146 = int_to_ptr.vmem [resolvable:$true] %s145
          %148 = dma.hbm_to_vmem [thread:$0]  %s144, 64, %s146, [#allocation6]
        $region20: #{tpu_custom_call.1} parent=11 // pred_fallthru
          _
      $region12: #{tpu_custom_call.1} parent=5 // pred_fallthru
        _
      %p149 = scmp.lt.s32.totalorder %s16, 2
      // Predicated region
      $region21: #{tpu_custom_call.1} parent=5 // pred_check
        %p150 = pneg %p149
      $region22: #{tpu_custom_call.1} parent=5 // pred_check_branch
        %152 = sbr.rel (%p150) target = $region24
      $region23: #{tpu_custom_call.1} parent=5 // pred_region
        // Predicated region
        $region25: #{tpu_custom_call.1} parent=23 // pred_check
          %p153 = pneg %p36
        $region26: #{tpu_custom_call.1} parent=23 // pred_check_branch
          %155 = sbr.rel (%p153) target = $region28
        $region27: #{tpu_custom_call.1} parent=23 // pred_region
          %s156 = sand.u32 %s26, 1
          %s157 = scalar_lea.sflag [#allocation3], %s156
          %s158 = sand.u32 %s26, 1
          %s159 = smul.addr %s158, 8
          %s160 = scalar_lea.vmem [#allocation2], %s159
          %162 = vsyncadd %s157, 0
          %s163 = smul.addr %s16, 2
          %s164 = smul.addr %s163, 4
          %s165 = scalar_lea.hbm %s0, %s164
          %s167 = sshll.u32 %s165, 4
          %s168 = int_to_ptr.hbm [resolvable:$true] %s167
          %s169 = sshll.u32 %s160, 4
          %s170 = int_to_ptr.vmem [resolvable:$true] %s169
          %172 = dma.hbm_to_vmem [thread:$0]  %s168, 128, %s170, %s157
        $region28: #{tpu_custom_call.1} parent=23 // pred_fallthru
          _
      $region24: #{tpu_custom_call.1} parent=5 // pred_fallthru
        _
      %p173 = scmp.le.s32.totalorder 1, %s16
      %p174 = scmp.lt.s32.totalorder %s16, 3
      %p175 = pnand %p173, %p174
      %p176 = pneg %p175
      // Predicated region
      $region29: #{tpu_custom_call.1} parent=5 // pred_check
        _
      $region30: #{tpu_custom_call.1} parent=5 // pred_check_branch
        %178 = sbr.rel (%p175) target = $region32
      $region31: #{tpu_custom_call.1} parent=5 // pred_region
        %s179 = ssub.s32 %s16, 1
        %s180 = sand.u32 %s29, 1
        %s181 = scalar_lea.sflag [#allocation3], %s180
        %s182 = sand.u32 %s29, 1
        %s183 = smul.addr %s182, 8
        %s184 = scalar_lea.vmem [#allocation2], %s183
        // Predicated region
        $region33: #{tpu_custom_call.1} parent=31 // pred_check
          %p185 = pneg %p42
        $region34: #{tpu_custom_call.1} parent=31 // pred_check_branch
          %187 = sbr.rel (%p185) target = $region36
        $region35: #{tpu_custom_call.1} parent=31 // pred_region
          %189 = dma.done %s181, 128
        $region36: #{tpu_custom_call.1} parent=31 // pred_fallthru
          _
        // Predicated region
        $region37: #{tpu_custom_call.1} parent=31 // pred_check
          %p190 = pneg %p63
        $region38: #{tpu_custom_call.1} parent=31 // pred_check_branch
          %192 = sbr.rel (%p190) target = $region40
        $region39: #{tpu_custom_call.1} parent=31 // pred_region
          %194 = dma.done [#allocation6], 64
        $region40: #{tpu_custom_call.1} parent=31 // pred_fallthru
          _
        // Predicated region
        $region41: #{tpu_custom_call.1} parent=31 // pred_check
          %p195 = pneg %p84
        $region42: #{tpu_custom_call.1} parent=31 // pred_check_branch
          %197 = sbr.rel (%p195) target = $region44
        $region43: #{tpu_custom_call.1} parent=31 // pred_region
          %199 = dma.done [#allocation6], 64
        $region44: #{tpu_custom_call.1} parent=31 // pred_fallthru
          _
        %s200 = sand.u32 %s29, 1
        %s201 = scalar_lea.sflag [#allocation3], %s200
        %s202 = sand.u32 %s29, 1
        %s203 = smul.addr %s202, 8
        %s204 = scalar_lea.vmem [#allocation2], %s203
        %p205 = pneg %p42
        %p206 = pneg %p39
        %p207 = pneg %p63
        %p208 = pneg %p60
        %p209 = pneg %p84
        %p210 = pneg %p81
        %p211 = pneg %p110
        %p212 = pneg %p107
        %s213 = sand.u32 %s97, 1
        %s214 = scalar_lea.sflag [#allocation4], %s213
        %s215 = sand.u32 %s97, 1
        %s216 = smul.addr %s215, 8
        %s217 = scalar_lea.vmem [#allocation8], %s216
        %v218 = vld [vmem:[%s184] sm:$0xff]
        %v220 = vrot.slane %v218, 4
        %222 = vrot.lane.b32.xlu0 %v218, 112
        %v223 = vpop.permute.xlu0 %222
        %v224 = vrot.slane %v223, 4
        %226 = vrot.lane.b32.xlu0 %v218, 96
        %v227 = vpop.permute.xlu0 %226
        %v228 = vrot.slane %v227, 4
        %230 = vrot.lane.b32.xlu0 %v218, 80
        %v231 = vpop.permute.xlu0 %230
        %v232 = vrot.slane %v231, 4
        %234 = vrot.lane.b32.xlu0 %v218, 64
        %v235 = vpop.permute.xlu0 %234
        %v236 = vrot.slane %v235, 4
        %238 = vrot.lane.b32.xlu0 %v218, 48
        %v239 = vpop.permute.xlu0 %238
        %v240 = vrot.slane %v239, 4
        %242 = vrot.lane.b32.xlu0 %v218, 32
        %v243 = vpop.permute.xlu0 %242
        %v244 = vrot.slane %v243, 4
        %246 = vrot.lane.b32.xlu0 %v218, 16
        %v247 = vpop.permute.xlu0 %246
        %v248 = vrot.slane %v247, 4
        %v257 = vrot.slane %v227, 4
        %vm258 = vcmask 1047556
        %v259 = vsel %vm258, %v257, %v218
        %v261 = vunpack.c.l.s4 1983009808
        %v262 = vunpack.c.0.s8 %v261
        %v263 = vperm.slane %v259, %v262
        %v264 = vrot.slane %v231, 4
        %v265 = vsel %vm258, %v264, %v223
        %v267 = vunpack.c.l.s4 1983009808
        %v268 = vunpack.c.0.s8 %v267
        %v269 = vperm.slane %v265, %v268
        %v270 = vrot.slane %v269, 4
        %v271 = vsel %vm258, %v270, %v263
        %v272 = vrot.slane %v263, 4
        %v273 = vsel %vm258, %v269, %v272
        %v275 = vunpack.c.l.s4 1934713408
        %v276 = vunpack.c.0.s8 %v275
        %v277 = vperm.slane %v271, %v276
        %v279 = vunpack.c.l.s4 1934713408
        %v280 = vunpack.c.0.s8 %v279
        %v281 = vperm.slane %v273, %v280
        %v282 = vrot.slane %v277, 4
        %v283 = vsel %vm258, 0.0, %v282
        %v284 = vrot.slane %v281, 4
        %v285 = vsel %vm258, 0.0, %v284
        %v286 = vrot.slane %v243, 4
        %v287 = vsel %vm258, %v286, %v235
        %v289 = vunpack.c.l.s4 1983009808
        %v290 = vunpack.c.0.s8 %v289
        %v291 = vperm.slane %v287, %v290
        %v292 = vrot.slane %v247, 4
        %v293 = vsel %vm258, %v292, %v239
        %v295 = vunpack.c.l.s4 1983009808
        %v296 = vunpack.c.0.s8 %v295
        %v297 = vperm.slane %v293, %v296
        %v298 = vrot.slane %v297, 4
        %v299 = vsel %vm258, %v298, %v291
        %v300 = vrot.slane %v291, 4
        %v301 = vsel %vm258, %v297, %v300
        %v303 = vunpack.c.l.s4 1934713408
        %v304 = vunpack.c.0.s8 %v303
        %v305 = vperm.slane %v299, %v304
        %v307 = vunpack.c.l.s4 1934713408
        %v308 = vunpack.c.0.s8 %v307
        %v309 = vperm.slane %v301, %v308
        %v310 = vrot.slane %v305, 4
        %v311 = vsel %vm258, 0.0, %v310
        %v312 = vrot.slane %v309, 4
        %v313 = vsel %vm258, 0.0, %v312
        %v314 = vrot.slane %v228, 4
        %v315 = vsel %vm258, %v314, %v220
        %v317 = vunpack.c.l.s4 1983009808
        %v318 = vunpack.c.0.s8 %v317
        %v319 = vperm.slane %v315, %v318
        %v320 = vrot.slane %v232, 4
        %v321 = vsel %vm258, %v320, %v224
        %v323 = vunpack.c.l.s4 1983009808
        %v324 = vunpack.c.0.s8 %v323
        %v325 = vperm.slane %v321, %v324
        %v326 = vrot.slane %v325, 4
        %v327 = vsel %vm258, %v326, %v319
        %v328 = vrot.slane %v319, 4
        %v329 = vsel %vm258, %v325, %v328
        %v331 = vunpack.c.l.s4 1934713408
        %v332 = vunpack.c.0.s8 %v331
        %v333 = vperm.slane %v327, %v332
        %v335 = vunpack.c.l.s4 1934713408
        %v336 = vunpack.c.0.s8 %v335
        %v337 = vperm.slane %v329, %v336
        %v338 = vrot.slane %v333, 4
        %v339 = vsel %vm258, 0.0, %v338
        %v340 = vrot.slane %v337, 4
        %v341 = vsel %vm258, 0.0, %v340
        %v342 = vrot.slane %v244, 4
        %v343 = vsel %vm258, %v342, %v236
        %v345 = vunpack.c.l.s4 1983009808
        %v346 = vunpack.c.0.s8 %v345
        %v347 = vperm.slane %v343, %v346
        %v348 = vrot.slane %v248, 4
        %v349 = vsel %vm258, %v348, %v240
        %v351 = vunpack.c.l.s4 1983009808
        %v352 = vunpack.c.0.s8 %v351
        %v353 = vperm.slane %v349, %v352
        %v354 = vrot.slane %v353, 4
        %v355 = vsel %vm258, %v354, %v347
        %v356 = vrot.slane %v347, 4
        %v357 = vsel %vm258, %v353, %v356
        %v359 = vunpack.c.l.s4 1934713408
        %v360 = vunpack.c.0.s8 %v359
        %v361 = vperm.slane %v355, %v360
        %v363 = vunpack.c.l.s4 1934713408
        %v364 = vunpack.c.0.s8 %v363
        %v365 = vperm.slane %v357, %v364
        %v366 = vrot.slane %v361, 4
        %v367 = vsel %vm258, 0.0, %v366
        %v368 = vrot.slane %v365, 4
        %v369 = vsel %vm258, 0.0, %v368
        %v374 = vperm.slane %v277, 1
        %v375 = vperm.slane %v283, 1
        %v376 = vperm.slane %v281, 1
        %v377 = vperm.slane %v285, 1
        %394 = vst [vmem:[#allocation1] ss:$2 sm:$0xff] %v277
        %s395 = scalar_lea.vmem [#allocation1], 1
        %396 = vst [vmem:[%s395] ss:$2 sm:$0xff] %v305
        %s397 = scalar_lea.vmem [#allocation1], 16
        %398 = vst [vmem:[%s397] ss:$2 sm:$0xff] %v333
        %s399 = scalar_lea.vmem [#allocation1], 17
        %400 = vst [vmem:[%s399] ss:$2 sm:$0xff] %v361
        %v401 = vld.sshfl [vmem:[#allocation1] sm:$0xff pattern:$0x75316420]
        %v402 = vld.sshfl [vmem:[#allocation1 + $0x10] sm:$0xff pattern:$0x75316420]
        %s403 = scalar_lea.vmem [#allocation1], 32
        %404 = vst [vmem:[%s403] ss:$2 sm:$0xff] %v283
        %s405 = scalar_lea.vmem [#allocation1], 33
        %406 = vst [vmem:[%s405] ss:$2 sm:$0xff] %v311
        %s407 = scalar_lea.vmem [#allocation1], 48
        %408 = vst [vmem:[%s407] ss:$2 sm:$0xff] %v339
        %s409 = scalar_lea.vmem [#allocation1], 49
        %410 = vst [vmem:[%s409] ss:$2 sm:$0xff] %v367
        %v411 = vld.sshfl [vmem:[#allocation1 + $0x20] sm:$0xff pattern:$0x75316420]
        %v412 = vld.sshfl [vmem:[#allocation1 + $0x30] sm:$0xff pattern:$0x75316420]
        %413 = vst [vmem:[#allocation1] ss:$2 sm:$0xff] %v281
        %414 = vst [vmem:[%s395] ss:$2 sm:$0xff] %v309
        %415 = vst [vmem:[%s397] ss:$2 sm:$0xff] %v337
        %416 = vst [vmem:[%s399] ss:$2 sm:$0xff] %v365
        %v417 = vld.sshfl [vmem:[#allocation1] sm:$0xff pattern:$0x75316420]
        %v418 = vld.sshfl [vmem:[#allocation1 + $0x10] sm:$0xff pattern:$0x75316420]
        %419 = vst [vmem:[%s403] ss:$2 sm:$0xff] %v285
        %420 = vst [vmem:[%s405] ss:$2 sm:$0xff] %v313
        %421 = vst [vmem:[%s407] ss:$2 sm:$0xff] %v341
        %422 = vst [vmem:[%s409] ss:$2 sm:$0xff] %v369
        %v423 = vld.sshfl [vmem:[#allocation1 + $0x20] sm:$0xff pattern:$0x75316420]
        %v424 = vld.sshfl [vmem:[#allocation1 + $0x30] sm:$0xff pattern:$0x75316420]
        %vm425 = vcmask 1040384
        %v426 = vrot.slane %v401, 7
        %v427 = vrot.slane %v402, 7
        %v428 = vsel %vm425, %v426, %v427
        %v429 = vrot.slane %v411, 7
        %v430 = vrot.slane %v412, 7
        %v431 = vsel %vm425, %v429, %v430
        %v432 = vrot.slane %v417, 7
        %v433 = vrot.slane %v418, 7
        %v434 = vsel %vm425, %v432, %v433
        %v435 = vrot.slane %v423, 7
        %v436 = vrot.slane %v424, 7
        %v437 = vsel %vm425, %v435, %v436
        %v446 = vperm.slane %v361, 2
        %v447 = vperm.slane %v367, 2
        %v448 = vperm.slane %v365, 2
        %v449 = vperm.slane %v369, 2
        %v454 = vsel %vm425, %v374, %v426
        %v455 = vsel %vm425, %v375, %v429
        %v456 = vsel %vm425, %v376, %v432
        %v457 = vsel %vm425, %v377, %v435
        %v458 = vsel %vm425, %v427, %v446
        %v459 = vsel %vm425, %v430, %v447
        %v460 = vsel %vm425, %v433, %v448
        %v461 = vsel %vm425, %v436, %v449
        %470 = vrot.lane.b32.xlu0 %v454, 127
        %v471 = vpop.permute.xlu0 %470
        %472 = vrot.lane.b32.xlu0 %v428, 127
        %v473 = vpop.permute.xlu0 %472
        %474 = vrot.lane.b32.xlu0 %v458, 127
        %v475 = vpop.permute.xlu0 %474
        %476 = vrot.lane.b32.xlu0 %v455, 127
        %v477 = vpop.permute.xlu0 %476
        %478 = vrot.lane.b32.xlu0 %v431, 127
        %v479 = vpop.permute.xlu0 %478
        %480 = vrot.lane.b32.xlu0 %v459, 127
        %v481 = vpop.permute.xlu0 %480
        %482 = vrot.lane.b32.xlu0 %v456, 127
        %v483 = vpop.permute.xlu0 %482
        %484 = vrot.lane.b32.xlu0 %v434, 127
        %v485 = vpop.permute.xlu0 %484
        %486 = vrot.lane.b32.xlu0 %v460, 127
        %v487 = vpop.permute.xlu0 %486
        %488 = vrot.lane.b32.xlu0 %v457, 127
        %v489 = vpop.permute.xlu0 %488
        %490 = vrot.lane.b32.xlu0 %v437, 127
        %v491 = vpop.permute.xlu0 %490
        %492 = vrot.lane.b32.xlu0 %v461, 127
        %v493 = vpop.permute.xlu0 %492
        %506 = vrot.lane.b32.xlu0 %v454, 1
        %v507 = vpop.permute.xlu0 %506
        %508 = vrot.lane.b32.xlu0 %v428, 1
        %v509 = vpop.permute.xlu0 %508
        %510 = vrot.lane.b32.xlu0 %v458, 1
        %v511 = vpop.permute.xlu0 %510
        %512 = vrot.lane.b32.xlu0 %v455, 1
        %v513 = vpop.permute.xlu0 %512
        %514 = vrot.lane.b32.xlu0 %v431, 1
        %v515 = vpop.permute.xlu0 %514
        %516 = vrot.lane.b32.xlu0 %v459, 1
        %v517 = vpop.permute.xlu0 %516
        %518 = vrot.lane.b32.xlu0 %v456, 1
        %v519 = vpop.permute.xlu0 %518
        %520 = vrot.lane.b32.xlu0 %v434, 1
        %v521 = vpop.permute.xlu0 %520
        %522 = vrot.lane.b32.xlu0 %v460, 1
        %v523 = vpop.permute.xlu0 %522
        %524 = vrot.lane.b32.xlu0 %v457, 1
        %v525 = vpop.permute.xlu0 %524
        %526 = vrot.lane.b32.xlu0 %v437, 1
        %v527 = vpop.permute.xlu0 %526
        %528 = vrot.lane.b32.xlu0 %v461, 1
        %v529 = vpop.permute.xlu0 %528
        %542 = vrot.lane.b32.xlu0 %v454, 3
        %v543 = vpop.permute.xlu0 %542
        %544 = vrot.lane.b32.xlu0 %v428, 3
        %v545 = vpop.permute.xlu0 %544
        %546 = vrot.lane.b32.xlu0 %v458, 3
        %v547 = vpop.permute.xlu0 %546
        %548 = vrot.lane.b32.xlu0 %v455, 3
        %v549 = vpop.permute.xlu0 %548
        %550 = vrot.lane.b32.xlu0 %v431, 3
        %v551 = vpop.permute.xlu0 %550
        %552 = vrot.lane.b32.xlu0 %v459, 3
        %v553 = vpop.permute.xlu0 %552
        %554 = vrot.lane.b32.xlu0 %v456, 3
        %v555 = vpop.permute.xlu0 %554
        %556 = vrot.lane.b32.xlu0 %v434, 3
        %v557 = vpop.permute.xlu0 %556
        %558 = vrot.lane.b32.xlu0 %v460, 3
        %v559 = vpop.permute.xlu0 %558
        %560 = vrot.lane.b32.xlu0 %v457, 3
        %v561 = vpop.permute.xlu0 %560
        %562 = vrot.lane.b32.xlu0 %v437, 3
        %v563 = vpop.permute.xlu0 %562
        %564 = vrot.lane.b32.xlu0 %v461, 3
        %v565 = vpop.permute.xlu0 %564
        %vm578 = vcmask 7168
        %v579 = vsel %vm578, %v471, %v507
        %v580 = vsel %vm578, %v473, %v509
        %v581 = vsel %vm578, %v475, %v511
        %v582 = vsel %vm578, %v477, %v513
        %v583 = vsel %vm578, %v479, %v515
        %v584 = vsel %vm578, %v481, %v517
        %v585 = vsel %vm578, %v483, %v519
        %v586 = vsel %vm578, %v485, %v521
        %v587 = vsel %vm578, %v487, %v523
        %v588 = vsel %vm578, %v489, %v525
        %v589 = vsel %vm578, %v491, %v527
        %v590 = vsel %vm578, %v493, %v529
        %vm591 = vcmask 138240
        %v592 = vsel %vm591, %v579, %v543
        %v593 = vsel %vm591, %v580, %v545
        %v594 = vsel %vm591, %v581, %v547
        %v595 = vsel %vm591, %v582, %v549
        %v596 = vsel %vm591, %v583, %v551
        %v597 = vsel %vm591, %v584, %v553
        %v598 = vsel %vm591, %v585, %v555
        %v599 = vsel %vm591, %v586, %v557
        %v600 = vsel %vm591, %v587, %v559
        %v601 = vsel %vm591, %v588, %v561
        %v602 = vsel %vm591, %v589, %v563
        %v603 = vsel %vm591, %v590, %v565
        %v604 = vrot.slane %v598, 4
        %v605 = vsel %vm258, %v604, %v592
        %v606 = vrot.slane %v592, 4
        %v607 = vsel %vm258, %v598, %v606
        %v609 = vunpack.c.l.s4 1983009808
        %v610 = vunpack.c.0.s8 %v609
        %v611 = vperm.slane %v605, %v610
        %v613 = vunpack.c.l.s4 1983009808
        %v614 = vunpack.c.0.s8 %v613
        %v615 = vperm.slane %v607, %v614
        %v616 = vrot.slane %v601, 4
        %v617 = vsel %vm258, %v616, %v595
        %v618 = vrot.slane %v595, 4
        %v619 = vsel %vm258, %v601, %v618
        %v621 = vunpack.c.l.s4 1983009808
        %v622 = vunpack.c.0.s8 %v621
        %v623 = vperm.slane %v617, %v622
        %v625 = vunpack.c.l.s4 1983009808
        %v626 = vunpack.c.0.s8 %v625
        %v627 = vperm.slane %v619, %v626
        %v628 = vrot.slane %v623, 4
        %v629 = vsel %vm258, %v628, %v611
        %v630 = vrot.slane %v611, 4
        %v631 = vsel %vm258, %v623, %v630
        %v633 = vunpack.c.l.s4 1934713408
        %v634 = vunpack.c.0.s8 %v633
        %v635 = vperm.slane %v629, %v634
        %v637 = vunpack.c.l.s4 1934713408
        %v638 = vunpack.c.0.s8 %v637
        %v639 = vperm.slane %v631, %v638
        %v640 = vrot.slane %v627, 4
        %v641 = vsel %vm258, %v640, %v615
        %v642 = vrot.slane %v615, 4
        %v643 = vsel %vm258, %v627, %v642
        %v645 = vunpack.c.l.s4 1934713408
        %v646 = vunpack.c.0.s8 %v645
        %v647 = vperm.slane %v641, %v646
        %v649 = vunpack.c.l.s4 1934713408
        %v650 = vunpack.c.0.s8 %v649
        %v651 = vperm.slane %v643, %v650
        %v652 = vrot.slane %v635, 4
        %v653 = vsel %vm258, 0.0, %v652
        %v654 = vrot.slane %v639, 4
        %v655 = vsel %vm258, 0.0, %v654
        %v656 = vrot.slane %v647, 4
        %v657 = vsel %vm258, 0.0, %v656
        %v658 = vrot.slane %v651, 4
        %v659 = vsel %vm258, 0.0, %v658
        %v660 = vrot.slane %v599, 4
        %v661 = vsel %vm258, %v660, %v593
        %v662 = vrot.slane %v593, 4
        %v663 = vsel %vm258, %v599, %v662
        %v665 = vunpack.c.l.s4 1983009808
        %v666 = vunpack.c.0.s8 %v665
        %v667 = vperm.slane %v661, %v666
        %v669 = vunpack.c.l.s4 1983009808
        %v670 = vunpack.c.0.s8 %v669
        %v671 = vperm.slane %v663, %v670
        %v672 = vrot.slane %v602, 4
        %v673 = vsel %vm258, %v672, %v596
        %v674 = vrot.slane %v596, 4
        %v675 = vsel %vm258, %v602, %v674
        %v677 = vunpack.c.l.s4 1983009808
        %v678 = vunpack.c.0.s8 %v677
        %v679 = vperm.slane %v673, %v678
        %v681 = vunpack.c.l.s4 1983009808
        %v682 = vunpack.c.0.s8 %v681
        %v683 = vperm.slane %v675, %v682
        %v684 = vrot.slane %v679, 4
        %v685 = vsel %vm258, %v684, %v667
        %v686 = vrot.slane %v667, 4
        %v687 = vsel %vm258, %v679, %v686
        %v689 = vunpack.c.l.s4 1934713408
        %v690 = vunpack.c.0.s8 %v689
        %v691 = vperm.slane %v685, %v690
        %v693 = vunpack.c.l.s4 1934713408
        %v694 = vunpack.c.0.s8 %v693
        %v695 = vperm.slane %v687, %v694
        %v696 = vrot.slane %v683, 4
        %v697 = vsel %vm258, %v696, %v671
        %v698 = vrot.slane %v671, 4
        %v699 = vsel %vm258, %v683, %v698
        %v701 = vunpack.c.l.s4 1934713408
        %v702 = vunpack.c.0.s8 %v701
        %v703 = vperm.slane %v697, %v702
        %v705 = vunpack.c.l.s4 1934713408
        %v706 = vunpack.c.0.s8 %v705
        %v707 = vperm.slane %v699, %v706
        %v708 = vrot.slane %v691, 4
        %v709 = vsel %vm258, 0.0, %v708
        %v710 = vrot.slane %v695, 4
        %v711 = vsel %vm258, 0.0, %v710
        %v712 = vrot.slane %v703, 4
        %v713 = vsel %vm258, 0.0, %v712
        %v714 = vrot.slane %v707, 4
        %v715 = vsel %vm258, 0.0, %v714
        %717 = vrot.lane.b32.xlu0 %v653, 16
        %v718 = vpop.permute.xlu0 %717
        %721 = vrot.lane.b32.xlu0 %v639, 32
        %v722 = vpop.permute.xlu0 %721
        %725 = vrot.lane.b32.xlu0 %v655, 48
        %v726 = vpop.permute.xlu0 %725
        %729 = vrot.lane.b32.xlu0 %v647, 64
        %v730 = vpop.permute.xlu0 %729
        %733 = vrot.lane.b32.xlu0 %v657, 80
        %v734 = vpop.permute.xlu0 %733
        %737 = vrot.lane.b32.xlu0 %v651, 96
        %v738 = vpop.permute.xlu0 %737
        %741 = vrot.lane.b32.xlu0 %v659, 112
        %v742 = vpop.permute.xlu0 %741
        %745 = vrot.lane.b32.xlu0 %v709, 16
        %v746 = vpop.permute.xlu0 %745
        %749 = vrot.lane.b32.xlu0 %v695, 32
        %v750 = vpop.permute.xlu0 %749
        %753 = vrot.lane.b32.xlu0 %v711, 48
        %v754 = vpop.permute.xlu0 %753
        %757 = vrot.lane.b32.xlu0 %v703, 64
        %v758 = vpop.permute.xlu0 %757
        %761 = vrot.lane.b32.xlu0 %v713, 80
        %v762 = vpop.permute.xlu0 %761
        %765 = vrot.lane.b32.xlu0 %v707, 96
        %v766 = vpop.permute.xlu0 %765
        %769 = vrot.lane.b32.xlu0 %v715, 112
        %v770 = vpop.permute.xlu0 %769
        %vm772 = vcmask 130048
        %v773 = vsel %vm772, %v635, %v718
        %vm774 = vcmask 261120
        %v775 = vsel %vm774, %v773, %v722
        %vm776 = vcmask 392192
        %v777 = vsel %vm776, %v775, %v726
        %vm778 = vcmask 523264
        %v779 = vsel %vm778, %v777, %v730
        %vm780 = vcmask 654336
        %v781 = vsel %vm780, %v779, %v734
        %vm782 = vcmask 785408
        %v783 = vsel %vm782, %v781, %v738
        %vm784 = vcmask 916480
        %v785 = vsel %vm784, %v783, %v742
        %v786 = vsel %vm772, %v691, %v746
        %v787 = vsel %vm774, %v786, %v750
        %v788 = vsel %vm776, %v787, %v754
        %v789 = vsel %vm778, %v788, %v758
        %v790 = vsel %vm780, %v789, %v762
        %v791 = vsel %vm782, %v790, %v766
        %v792 = vsel %vm784, %v791, %v770
        %801 = vrot.lane.b32.xlu0 %v592, 127
        %v802 = vpop.permute.xlu0 %801
        %803 = vrot.lane.b32.xlu0 %v593, 127
        %v804 = vpop.permute.xlu0 %803
        %805 = vrot.lane.b32.xlu0 %v595, 127
        %v806 = vpop.permute.xlu0 %805
        %807 = vrot.lane.b32.xlu0 %v596, 127
        %v808 = vpop.permute.xlu0 %807
        %809 = vrot.lane.b32.xlu0 %v598, 127
        %v810 = vpop.permute.xlu0 %809
        %811 = vrot.lane.b32.xlu0 %v599, 127
        %v812 = vpop.permute.xlu0 %811
        %813 = vrot.lane.b32.xlu0 %v601, 127
        %v814 = vpop.permute.xlu0 %813
        %815 = vrot.lane.b32.xlu0 %v602, 127
        %v816 = vpop.permute.xlu0 %815
        %v825 = vrot.slane %v810, 4
        %v826 = vsel %vm258, %v825, %v802
        %v827 = vrot.slane %v802, 4
        %v828 = vsel %vm258, %v810, %v827
        %v830 = vunpack.c.l.s4 1983009808
        %v831 = vunpack.c.0.s8 %v830
        %v832 = vperm.slane %v826, %v831
        %v834 = vunpack.c.l.s4 1983009808
        %v835 = vunpack.c.0.s8 %v834
        %v836 = vperm.slane %v828, %v835
        %v837 = vrot.slane %v814, 4
        %v838 = vsel %vm258, %v837, %v806
        %v839 = vrot.slane %v806, 4
        %v840 = vsel %vm258, %v814, %v839
        %v842 = vunpack.c.l.s4 1983009808
        %v843 = vunpack.c.0.s8 %v842
        %v844 = vperm.slane %v838, %v843
        %v846 = vunpack.c.l.s4 1983009808
        %v847 = vunpack.c.0.s8 %v846
        %v848 = vperm.slane %v840, %v847
        %v849 = vrot.slane %v844, 4
        %v850 = vsel %vm258, %v849, %v832
        %v851 = vrot.slane %v832, 4
        %v852 = vsel %vm258, %v844, %v851
        %v854 = vunpack.c.l.s4 1934713408
        %v855 = vunpack.c.0.s8 %v854
        %v856 = vperm.slane %v850, %v855
        %v858 = vunpack.c.l.s4 1934713408
        %v859 = vunpack.c.0.s8 %v858
        %v860 = vperm.slane %v852, %v859
        %v861 = vrot.slane %v848, 4
        %v862 = vsel %vm258, %v861, %v836
        %v863 = vrot.slane %v836, 4
        %v864 = vsel %vm258, %v848, %v863
        %v866 = vunpack.c.l.s4 1934713408
        %v867 = vunpack.c.0.s8 %v866
        %v868 = vperm.slane %v862, %v867
        %v870 = vunpack.c.l.s4 1934713408
        %v871 = vunpack.c.0.s8 %v870
        %v872 = vperm.slane %v864, %v871
        %v873 = vrot.slane %v856, 4
        %v874 = vsel %vm258, 0.0, %v873
        %v875 = vrot.slane %v860, 4
        %v876 = vsel %vm258, 0.0, %v875
        %v877 = vrot.slane %v868, 4
        %v878 = vsel %vm258, 0.0, %v877
        %v879 = vrot.slane %v872, 4
        %v880 = vsel %vm258, 0.0, %v879
        %v881 = vrot.slane %v812, 4
        %v882 = vsel %vm258, %v881, %v804
        %v883 = vrot.slane %v804, 4
        %v884 = vsel %vm258, %v812, %v883
        %v886 = vunpack.c.l.s4 1983009808
        %v887 = vunpack.c.0.s8 %v886
        %v888 = vperm.slane %v882, %v887
        %v890 = vunpack.c.l.s4 1983009808
        %v891 = vunpack.c.0.s8 %v890
        %v892 = vperm.slane %v884, %v891
        %v893 = vrot.slane %v816, 4
        %v894 = vsel %vm258, %v893, %v808
        %v895 = vrot.slane %v808, 4
        %v896 = vsel %vm258, %v816, %v895
        %v898 = vunpack.c.l.s4 1983009808
        %v899 = vunpack.c.0.s8 %v898
        %v900 = vperm.slane %v894, %v899
        %v902 = vunpack.c.l.s4 1983009808
        %v903 = vunpack.c.0.s8 %v902
        %v904 = vperm.slane %v896, %v903
        %v905 = vrot.slane %v900, 4
        %v906 = vsel %vm258, %v905, %v888
        %v907 = vrot.slane %v888, 4
        %v908 = vsel %vm258, %v900, %v907
        %v910 = vunpack.c.l.s4 1934713408
        %v911 = vunpack.c.0.s8 %v910
        %v912 = vperm.slane %v906, %v911
        %v914 = vunpack.c.l.s4 1934713408
        %v915 = vunpack.c.0.s8 %v914
        %v916 = vperm.slane %v908, %v915
        %v917 = vrot.slane %v904, 4
        %v918 = vsel %vm258, %v917, %v892
        %v919 = vrot.slane %v892, 4
        %v920 = vsel %vm258, %v904, %v919
        %v922 = vunpack.c.l.s4 1934713408
        %v923 = vunpack.c.0.s8 %v922
        %v924 = vperm.slane %v918, %v923
        %v926 = vunpack.c.l.s4 1934713408
        %v927 = vunpack.c.0.s8 %v926
        %v928 = vperm.slane %v920, %v927
        %v929 = vrot.slane %v912, 4
        %v930 = vsel %vm258, 0.0, %v929
        %v931 = vrot.slane %v916, 4
        %v932 = vsel %vm258, 0.0, %v931
        %v933 = vrot.slane %v924, 4
        %v934 = vsel %vm258, 0.0, %v933
        %v935 = vrot.slane %v928, 4
        %v936 = vsel %vm258, 0.0, %v935
        %938 = vrot.lane.b32.xlu0 %v874, 16
        %v939 = vpop.permute.xlu0 %938
        %942 = vrot.lane.b32.xlu0 %v860, 32
        %v943 = vpop.permute.xlu0 %942
        %946 = vrot.lane.b32.xlu0 %v876, 48
        %v947 = vpop.permute.xlu0 %946
        %950 = vrot.lane.b32.xlu0 %v868, 64
        %v951 = vpop.permute.xlu0 %950
        %954 = vrot.lane.b32.xlu0 %v878, 80
        %v955 = vpop.permute.xlu0 %954
        %958 = vrot.lane.b32.xlu0 %v872, 96
        %v959 = vpop.permute.xlu0 %958
        %962 = vrot.lane.b32.xlu0 %v880, 112
        %v963 = vpop.permute.xlu0 %962
        %966 = vrot.lane.b32.xlu0 %v930, 16
        %v967 = vpop.permute.xlu0 %966
        %970 = vrot.lane.b32.xlu0 %v916, 32
        %v971 = vpop.permute.xlu0 %970
        %974 = vrot.lane.b32.xlu0 %v932, 48
        %v975 = vpop.permute.xlu0 %974
        %978 = vrot.lane.b32.xlu0 %v924, 64
        %v979 = vpop.permute.xlu0 %978
        %982 = vrot.lane.b32.xlu0 %v934, 80
        %v983 = vpop.permute.xlu0 %982
        %986 = vrot.lane.b32.xlu0 %v928, 96
        %v987 = vpop.permute.xlu0 %986
        %990 = vrot.lane.b32.xlu0 %v936, 112
        %v991 = vpop.permute.xlu0 %990
        %v993 = vsel %vm772, %v856, %v939
        %v994 = vsel %vm774, %v993, %v943
        %v995 = vsel %vm776, %v994, %v947
        %v996 = vsel %vm778, %v995, %v951
        %v997 = vsel %vm780, %v996, %v955
        %v998 = vsel %vm782, %v997, %v959
        %v999 = vsel %vm784, %v998, %v963
        %v1000 = vsel %vm772, %v912, %v967
        %v1001 = vsel %vm774, %v1000, %v971
        %v1002 = vsel %vm776, %v1001, %v975
        %v1003 = vsel %vm778, %v1002, %v979
        %v1004 = vsel %vm780, %v1003, %v983
        %v1005 = vsel %vm782, %v1004, %v987
        %v1006 = vsel %vm784, %v1005, %v991
        %1007 = vrot.lane.b32.xlu0 %v592, 126
        %v1008 = vpop.permute.xlu0 %1007
        %1009 = vrot.lane.b32.xlu0 %v593, 126
        %v1010 = vpop.permute.xlu0 %1009
        %1011 = vrot.lane.b32.xlu0 %v595, 126
        %v1012 = vpop.permute.xlu0 %1011
        %1013 = vrot.lane.b32.xlu0 %v596, 126
        %v1014 = vpop.permute.xlu0 %1013
        %1015 = vrot.lane.b32.xlu0 %v598, 126
        %v1016 = vpop.permute.xlu0 %1015
        %1017 = vrot.lane.b32.xlu0 %v599, 126
        %v1018 = vpop.permute.xlu0 %1017
        %1019 = vrot.lane.b32.xlu0 %v601, 126
        %v1020 = vpop.permute.xlu0 %1019
        %1021 = vrot.lane.b32.xlu0 %v602, 126
        %v1022 = vpop.permute.xlu0 %1021
        %v1031 = vrot.slane %v1016, 4
        %v1032 = vsel %vm258, %v1031, %v1008
        %v1033 = vrot.slane %v1008, 4
        %v1034 = vsel %vm258, %v1016, %v1033
        %v1036 = vunpack.c.l.s4 1983009808
        %v1037 = vunpack.c.0.s8 %v1036
        %v1038 = vperm.slane %v1032, %v1037
        %v1040 = vunpack.c.l.s4 1983009808
        %v1041 = vunpack.c.0.s8 %v1040
        %v1042 = vperm.slane %v1034, %v1041
        %v1043 = vrot.slane %v1020, 4
        %v1044 = vsel %vm258, %v1043, %v1012
        %v1045 = vrot.slane %v1012, 4
        %v1046 = vsel %vm258, %v1020, %v1045
        %v1048 = vunpack.c.l.s4 1983009808
        %v1049 = vunpack.c.0.s8 %v1048
        %v1050 = vperm.slane %v1044, %v1049
        %v1052 = vunpack.c.l.s4 1983009808
        %v1053 = vunpack.c.0.s8 %v1052
        %v1054 = vperm.slane %v1046, %v1053
        %v1055 = vrot.slane %v1050, 4
        %v1056 = vsel %vm258, %v1055, %v1038
        %v1057 = vrot.slane %v1038, 4
        %v1058 = vsel %vm258, %v1050, %v1057
        %v1060 = vunpack.c.l.s4 1934713408
        %v1061 = vunpack.c.0.s8 %v1060
        %v1062 = vperm.slane %v1056, %v1061
        %v1064 = vunpack.c.l.s4 1934713408
        %v1065 = vunpack.c.0.s8 %v1064
        %v1066 = vperm.slane %v1058, %v1065
        %v1067 = vrot.slane %v1054, 4
        %v1068 = vsel %vm258, %v1067, %v1042
        %v1069 = vrot.slane %v1042, 4
        %v1070 = vsel %vm258, %v1054, %v1069
        %v1072 = vunpack.c.l.s4 1934713408
        %v1073 = vunpack.c.0.s8 %v1072
        %v1074 = vperm.slane %v1068, %v1073
        %v1076 = vunpack.c.l.s4 1934713408
        %v1077 = vunpack.c.0.s8 %v1076
        %v1078 = vperm.slane %v1070, %v1077
        %v1079 = vrot.slane %v1062, 4
        %v1080 = vsel %vm258, 0.0, %v1079
        %v1081 = vrot.slane %v1066, 4
        %v1082 = vsel %vm258, 0.0, %v1081
        %v1083 = vrot.slane %v1074, 4
        %v1084 = vsel %vm258, 0.0, %v1083
        %v1085 = vrot.slane %v1078, 4
        %v1086 = vsel %vm258, 0.0, %v1085
        %v1087 = vrot.slane %v1018, 4
        %v1088 = vsel %vm258, %v1087, %v1010
        %v1089 = vrot.slane %v1010, 4
        %v1090 = vsel %vm258, %v1018, %v1089
        %v1092 = vunpack.c.l.s4 1983009808
        %v1093 = vunpack.c.0.s8 %v1092
        %v1094 = vperm.slane %v1088, %v1093
        %v1096 = vunpack.c.l.s4 1983009808
        %v1097 = vunpack.c.0.s8 %v1096
        %v1098 = vperm.slane %v1090, %v1097
        %v1099 = vrot.slane %v1022, 4
        %v1100 = vsel %vm258, %v1099, %v1014
        %v1101 = vrot.slane %v1014, 4
        %v1102 = vsel %vm258, %v1022, %v1101
        %v1104 = vunpack.c.l.s4 1983009808
        %v1105 = vunpack.c.0.s8 %v1104
        %v1106 = vperm.slane %v1100, %v1105
        %v1108 = vunpack.c.l.s4 1983009808
        %v1109 = vunpack.c.0.s8 %v1108
        %v1110 = vperm.slane %v1102, %v1109
        %v1111 = vrot.slane %v1106, 4
        %v1112 = vsel %vm258, %v1111, %v1094
        %v1113 = vrot.slane %v1094, 4
        %v1114 = vsel %vm258, %v1106, %v1113
        %v1116 = vunpack.c.l.s4 1934713408
        %v1117 = vunpack.c.0.s8 %v1116
        %v1118 = vperm.slane %v1112, %v1117
        %v1120 = vunpack.c.l.s4 1934713408
        %v1121 = vunpack.c.0.s8 %v1120
        %v1122 = vperm.slane %v1114, %v1121
        %v1123 = vrot.slane %v1110, 4
        %v1124 = vsel %vm258, %v1123, %v1098
        %v1125 = vrot.slane %v1098, 4
        %v1126 = vsel %vm258, %v1110, %v1125
        %v1128 = vunpack.c.l.s4 1934713408
        %v1129 = vunpack.c.0.s8 %v1128
        %v1130 = vperm.slane %v1124, %v1129
        %v1132 = vunpack.c.l.s4 1934713408
        %v1133 = vunpack.c.0.s8 %v1132
        %v1134 = vperm.slane %v1126, %v1133
        %v1135 = vrot.slane %v1118, 4
        %v1136 = vsel %vm258, 0.0, %v1135
        %v1137 = vrot.slane %v1122, 4
        %v1138 = vsel %vm258, 0.0, %v1137
        %v1139 = vrot.slane %v1130, 4
        %v1140 = vsel %vm258, 0.0, %v1139
        %v1141 = vrot.slane %v1134, 4
        %v1142 = vsel %vm258, 0.0, %v1141
        %1144 = vrot.lane.b32.xlu0 %v1080, 16
        %v1145 = vpop.permute.xlu0 %1144
        %1148 = vrot.lane.b32.xlu0 %v1066, 32
        %v1149 = vpop.permute.xlu0 %1148
        %1152 = vrot.lane.b32.xlu0 %v1082, 48
        %v1153 = vpop.permute.xlu0 %1152
        %1156 = vrot.lane.b32.xlu0 %v1074, 64
        %v1157 = vpop.permute.xlu0 %1156
        %1160 = vrot.lane.b32.xlu0 %v1084, 80
        %v1161 = vpop.permute.xlu0 %1160
        %1164 = vrot.lane.b32.xlu0 %v1078, 96
        %v1165 = vpop.permute.xlu0 %1164
        %1168 = vrot.lane.b32.xlu0 %v1086, 112
        %v1169 = vpop.permute.xlu0 %1168
        %1172 = vrot.lane.b32.xlu0 %v1136, 16
        %v1173 = vpop.permute.xlu0 %1172
        %1176 = vrot.lane.b32.xlu0 %v1122, 32
        %v1177 = vpop.permute.xlu0 %1176
        %1180 = vrot.lane.b32.xlu0 %v1138, 48
        %v1181 = vpop.permute.xlu0 %1180
        %1184 = vrot.lane.b32.xlu0 %v1130, 64
        %v1185 = vpop.permute.xlu0 %1184
        %1188 = vrot.lane.b32.xlu0 %v1140, 80
        %v1189 = vpop.permute.xlu0 %1188
        %1192 = vrot.lane.b32.xlu0 %v1134, 96
        %v1193 = vpop.permute.xlu0 %1192
        %1196 = vrot.lane.b32.xlu0 %v1142, 112
        %v1197 = vpop.permute.xlu0 %1196
        %v1199 = vsel %vm772, %v1062, %v1145
        %v1200 = vsel %vm774, %v1199, %v1149
        %v1201 = vsel %vm776, %v1200, %v1153
        %v1202 = vsel %vm778, %v1201, %v1157
        %v1203 = vsel %vm780, %v1202, %v1161
        %v1204 = vsel %vm782, %v1203, %v1165
        %v1205 = vsel %vm784, %v1204, %v1169
        %v1206 = vsel %vm772, %v1118, %v1173
        %v1207 = vsel %vm774, %v1206, %v1177
        %v1208 = vsel %vm776, %v1207, %v1181
        %v1209 = vsel %vm778, %v1208, %v1185
        %v1210 = vsel %vm780, %v1209, %v1189
        %v1211 = vsel %vm782, %v1210, %v1193
        %v1212 = vsel %vm784, %v1211, %v1197
        %vm1217 = vcmask 1046528
        %v1218 = vrot.slane %v592, 1
        %v1219 = vrot.slane %v593, 1
        %v1220 = vsel %vm1217, %v1218, %v1219
        %v1221 = vrot.slane %v594, 1
        %v1222 = vsel %vm1217, %v1219, %v1221
        %v1223 = vrot.slane %v595, 1
        %v1224 = vrot.slane %v596, 1
        %v1225 = vsel %vm1217, %v1223, %v1224
        %v1226 = vrot.slane %v597, 1
        %v1227 = vsel %vm1217, %v1224, %v1226
        %v1228 = vrot.slane %v598, 1
        %v1229 = vrot.slane %v599, 1
        %v1230 = vsel %vm1217, %v1228, %v1229
        %v1231 = vrot.slane %v600, 1
        %v1232 = vsel %vm1217, %v1229, %v1231
        %v1233 = vrot.slane %v601, 1
        %v1234 = vrot.slane %v602, 1
        %v1235 = vsel %vm1217, %v1233, %v1234
        %v1236 = vrot.slane %v603, 1
        %v1237 = vsel %vm1217, %v1234, %v1236
        %v1246 = vrot.slane %v1230, 4
        %v1247 = vsel %vm258, %v1246, %v1220
        %v1248 = vrot.slane %v1220, 4
        %v1249 = vsel %vm258, %v1230, %v1248
        %v1251 = vunpack.c.l.s4 1983009808
        %v1252 = vunpack.c.0.s8 %v1251
        %v1253 = vperm.slane %v1247, %v1252
        %v1255 = vunpack.c.l.s4 1983009808
        %v1256 = vunpack.c.0.s8 %v1255
        %v1257 = vperm.slane %v1249, %v1256
        %v1258 = vrot.slane %v1235, 4
        %v1259 = vsel %vm258, %v1258, %v1225
        %v1260 = vrot.slane %v1225, 4
        %v1261 = vsel %vm258, %v1235, %v1260
        %v1263 = vunpack.c.l.s4 1983009808
        %v1264 = vunpack.c.0.s8 %v1263
        %v1265 = vperm.slane %v1259, %v1264
        %v1267 = vunpack.c.l.s4 1983009808
        %v1268 = vunpack.c.0.s8 %v1267
        %v1269 = vperm.slane %v1261, %v1268
        %v1270 = vrot.slane %v1265, 4
        %v1271 = vsel %vm258, %v1270, %v1253
        %v1272 = vrot.slane %v1253, 4
        %v1273 = vsel %vm258, %v1265, %v1272
        %v1275 = vunpack.c.l.s4 1934713408
        %v1276 = vunpack.c.0.s8 %v1275
        %v1277 = vperm.slane %v1271, %v1276
        %v1279 = vunpack.c.l.s4 1934713408
        %v1280 = vunpack.c.0.s8 %v1279
        %v1281 = vperm.slane %v1273, %v1280
        %v1282 = vrot.slane %v1269, 4
        %v1283 = vsel %vm258, %v1282, %v1257
        %v1284 = vrot.slane %v1257, 4
        %v1285 = vsel %vm258, %v1269, %v1284
        %v1287 = vunpack.c.l.s4 1934713408
        %v1288 = vunpack.c.0.s8 %v1287
        %v1289 = vperm.slane %v1283, %v1288
        %v1291 = vunpack.c.l.s4 1934713408
        %v1292 = vunpack.c.0.s8 %v1291
        %v1293 = vperm.slane %v1285, %v1292
        %v1294 = vrot.slane %v1277, 4
        %v1295 = vsel %vm258, 0.0, %v1294
        %v1296 = vrot.slane %v1281, 4
        %v1297 = vsel %vm258, 0.0, %v1296
        %v1298 = vrot.slane %v1289, 4
        %v1299 = vsel %vm258, 0.0, %v1298
        %v1300 = vrot.slane %v1293, 4
        %v1301 = vsel %vm258, 0.0, %v1300
        %v1302 = vrot.slane %v1232, 4
        %v1303 = vsel %vm258, %v1302, %v1222
        %v1304 = vrot.slane %v1222, 4
        %v1305 = vsel %vm258, %v1232, %v1304
        %v1307 = vunpack.c.l.s4 1983009808
        %v1308 = vunpack.c.0.s8 %v1307
        %v1309 = vperm.slane %v1303, %v1308
        %v1311 = vunpack.c.l.s4 1983009808
        %v1312 = vunpack.c.0.s8 %v1311
        %v1313 = vperm.slane %v1305, %v1312
        %v1314 = vrot.slane %v1237, 4
        %v1315 = vsel %vm258, %v1314, %v1227
        %v1316 = vrot.slane %v1227, 4
        %v1317 = vsel %vm258, %v1237, %v1316
        %v1319 = vunpack.c.l.s4 1983009808
        %v1320 = vunpack.c.0.s8 %v1319
        %v1321 = vperm.slane %v1315, %v1320
        %v1323 = vunpack.c.l.s4 1983009808
        %v1324 = vunpack.c.0.s8 %v1323
        %v1325 = vperm.slane %v1317, %v1324
        %v1326 = vrot.slane %v1321, 4
        %v1327 = vsel %vm258, %v1326, %v1309
        %v1328 = vrot.slane %v1309, 4
        %v1329 = vsel %vm258, %v1321, %v1328
        %v1331 = vunpack.c.l.s4 1934713408
        %v1332 = vunpack.c.0.s8 %v1331
        %v1333 = vperm.slane %v1327, %v1332
        %v1335 = vunpack.c.l.s4 1934713408
        %v1336 = vunpack.c.0.s8 %v1335
        %v1337 = vperm.slane %v1329, %v1336
        %v1338 = vrot.slane %v1325, 4
        %v1339 = vsel %vm258, %v1338, %v1313
        %v1340 = vrot.slane %v1313, 4
        %v1341 = vsel %vm258, %v1325, %v1340
        %v1343 = vunpack.c.l.s4 1934713408
        %v1344 = vunpack.c.0.s8 %v1343
        %v1345 = vperm.slane %v1339, %v1344
        %v1347 = vunpack.c.l.s4 1934713408
        %v1348 = vunpack.c.0.s8 %v1347
        %v1349 = vperm.slane %v1341, %v1348
        %v1350 = vrot.slane %v1333, 4
        %v1351 = vsel %vm258, 0.0, %v1350
        %v1352 = vrot.slane %v1337, 4
        %v1353 = vsel %vm258, 0.0, %v1352
        %v1354 = vrot.slane %v1345, 4
        %v1355 = vsel %vm258, 0.0, %v1354
        %v1356 = vrot.slane %v1349, 4
        %v1357 = vsel %vm258, 0.0, %v1356
        %1359 = vrot.lane.b32.xlu0 %v1295, 16
        %v1360 = vpop.permute.xlu0 %1359
        %1363 = vrot.lane.b32.xlu0 %v1281, 32
        %v1364 = vpop.permute.xlu0 %1363
        %1367 = vrot.lane.b32.xlu0 %v1297, 48
        %v1368 = vpop.permute.xlu0 %1367
        %1371 = vrot.lane.b32.xlu0 %v1289, 64
        %v1372 = vpop.permute.xlu0 %1371
        %1375 = vrot.lane.b32.xlu0 %v1299, 80
        %v1376 = vpop.permute.xlu0 %1375
        %1379 = vrot.lane.b32.xlu0 %v1293, 96
        %v1380 = vpop.permute.xlu0 %1379
        %1383 = vrot.lane.b32.xlu0 %v1301, 112
        %v1384 = vpop.permute.xlu0 %1383
        %1387 = vrot.lane.b32.xlu0 %v1351, 16
        %v1388 = vpop.permute.xlu0 %1387
        %1391 = vrot.lane.b32.xlu0 %v1337, 32
        %v1392 = vpop.permute.xlu0 %1391
        %1395 = vrot.lane.b32.xlu0 %v1353, 48
        %v1396 = vpop.permute.xlu0 %1395
        %1399 = vrot.lane.b32.xlu0 %v1345, 64
        %v1400 = vpop.permute.xlu0 %1399
        %1403 = vrot.lane.b32.xlu0 %v1355, 80
        %v1404 = vpop.permute.xlu0 %1403
        %1407 = vrot.lane.b32.xlu0 %v1349, 96
        %v1408 = vpop.permute.xlu0 %1407
        %1411 = vrot.lane.b32.xlu0 %v1357, 112
        %v1412 = vpop.permute.xlu0 %1411
        %v1414 = vsel %vm772, %v1277, %v1360
        %v1415 = vsel %vm774, %v1414, %v1364
        %v1416 = vsel %vm776, %v1415, %v1368
        %v1417 = vsel %vm778, %v1416, %v1372
        %v1418 = vsel %vm780, %v1417, %v1376
        %v1419 = vsel %vm782, %v1418, %v1380
        %v1420 = vsel %vm784, %v1419, %v1384
        %v1421 = vsel %vm772, %v1333, %v1388
        %v1422 = vsel %vm774, %v1421, %v1392
        %v1423 = vsel %vm776, %v1422, %v1396
        %v1424 = vsel %vm778, %v1423, %v1400
        %v1425 = vsel %vm780, %v1424, %v1404
        %v1426 = vsel %vm782, %v1425, %v1408
        %v1427 = vsel %vm784, %v1426, %v1412
        %1428 = vrot.lane.b32.xlu0 %v1220, 127
        %v1429 = vpop.permute.xlu0 %1428
        %1430 = vrot.lane.b32.xlu0 %v1222, 127
        %v1431 = vpop.permute.xlu0 %1430
        %1432 = vrot.lane.b32.xlu0 %v1225, 127
        %v1433 = vpop.permute.xlu0 %1432
        %1434 = vrot.lane.b32.xlu0 %v1227, 127
        %v1435 = vpop.permute.xlu0 %1434
        %1436 = vrot.lane.b32.xlu0 %v1230, 127
        %v1437 = vpop.permute.xlu0 %1436
        %1438 = vrot.lane.b32.xlu0 %v1232, 127
        %v1439 = vpop.permute.xlu0 %1438
        %1440 = vrot.lane.b32.xlu0 %v1235, 127
        %v1441 = vpop.permute.xlu0 %1440
        %1442 = vrot.lane.b32.xlu0 %v1237, 127
        %v1443 = vpop.permute.xlu0 %1442
        %v1452 = vrot.slane %v1437, 4
        %v1453 = vsel %vm258, %v1452, %v1429
        %v1454 = vrot.slane %v1429, 4
        %v1455 = vsel %vm258, %v1437, %v1454
        %v1457 = vunpack.c.l.s4 1983009808
        %v1458 = vunpack.c.0.s8 %v1457
        %v1459 = vperm.slane %v1453, %v1458
        %v1461 = vunpack.c.l.s4 1983009808
        %v1462 = vunpack.c.0.s8 %v1461
        %v1463 = vperm.slane %v1455, %v1462
        %v1464 = vrot.slane %v1441, 4
        %v1465 = vsel %vm258, %v1464, %v1433
        %v1466 = vrot.slane %v1433, 4
        %v1467 = vsel %vm258, %v1441, %v1466
        %v1469 = vunpack.c.l.s4 1983009808
        %v1470 = vunpack.c.0.s8 %v1469
        %v1471 = vperm.slane %v1465, %v1470
        %v1473 = vunpack.c.l.s4 1983009808
        %v1474 = vunpack.c.0.s8 %v1473
        %v1475 = vperm.slane %v1467, %v1474
        %v1476 = vrot.slane %v1471, 4
        %v1477 = vsel %vm258, %v1476, %v1459
        %v1478 = vrot.slane %v1459, 4
        %v1479 = vsel %vm258, %v1471, %v1478
        %v1481 = vunpack.c.l.s4 1934713408
        %v1482 = vunpack.c.0.s8 %v1481
        %v1483 = vperm.slane %v1477, %v1482
        %v1485 = vunpack.c.l.s4 1934713408
        %v1486 = vunpack.c.0.s8 %v1485
        %v1487 = vperm.slane %v1479, %v1486
        %v1488 = vrot.slane %v1475, 4
        %v1489 = vsel %vm258, %v1488, %v1463
        %v1490 = vrot.slane %v1463, 4
        %v1491 = vsel %vm258, %v1475, %v1490
        %v1493 = vunpack.c.l.s4 1934713408
        %v1494 = vunpack.c.0.s8 %v1493
        %v1495 = vperm.slane %v1489, %v1494
        %v1497 = vunpack.c.l.s4 1934713408
        %v1498 = vunpack.c.0.s8 %v1497
        %v1499 = vperm.slane %v1491, %v1498
        %v1500 = vrot.slane %v1483, 4
        %v1501 = vsel %vm258, 0.0, %v1500
        %v1502 = vrot.slane %v1487, 4
        %v1503 = vsel %vm258, 0.0, %v1502
        %v1504 = vrot.slane %v1495, 4
        %v1505 = vsel %vm258, 0.0, %v1504
        %v1506 = vrot.slane %v1499, 4
        %v1507 = vsel %vm258, 0.0, %v1506
        %v1508 = vrot.slane %v1439, 4
        %v1509 = vsel %vm258, %v1508, %v1431
        %v1510 = vrot.slane %v1431, 4
        %v1511 = vsel %vm258, %v1439, %v1510
        %v1513 = vunpack.c.l.s4 1983009808
        %v1514 = vunpack.c.0.s8 %v1513
        %v1515 = vperm.slane %v1509, %v1514
        %v1517 = vunpack.c.l.s4 1983009808
        %v1518 = vunpack.c.0.s8 %v1517
        %v1519 = vperm.slane %v1511, %v1518
        %v1520 = vrot.slane %v1443, 4
        %v1521 = vsel %vm258, %v1520, %v1435
        %v1522 = vrot.slane %v1435, 4
        %v1523 = vsel %vm258, %v1443, %v1522
        %v1525 = vunpack.c.l.s4 1983009808
        %v1526 = vunpack.c.0.s8 %v1525
        %v1527 = vperm.slane %v1521, %v1526
        %v1529 = vunpack.c.l.s4 1983009808
        %v1530 = vunpack.c.0.s8 %v1529
        %v1531 = vperm.slane %v1523, %v1530
        %v1532 = vrot.slane %v1527, 4
        %v1533 = vsel %vm258, %v1532, %v1515
        %v1534 = vrot.slane %v1515, 4
        %v1535 = vsel %vm258, %v1527, %v1534
        %v1537 = vunpack.c.l.s4 1934713408
        %v1538 = vunpack.c.0.s8 %v1537
        %v1539 = vperm.slane %v1533, %v1538
        %v1541 = vunpack.c.l.s4 1934713408
        %v1542 = vunpack.c.0.s8 %v1541
        %v1543 = vperm.slane %v1535, %v1542
        %v1544 = vrot.slane %v1531, 4
        %v1545 = vsel %vm258, %v1544, %v1519
        %v1546 = vrot.slane %v1519, 4
        %v1547 = vsel %vm258, %v1531, %v1546
        %v1549 = vunpack.c.l.s4 1934713408
        %v1550 = vunpack.c.0.s8 %v1549
        %v1551 = vperm.slane %v1545, %v1550
        %v1553 = vunpack.c.l.s4 1934713408
        %v1554 = vunpack.c.0.s8 %v1553
        %v1555 = vperm.slane %v1547, %v1554
        %v1556 = vrot.slane %v1539, 4
        %v1557 = vsel %vm258, 0.0, %v1556
        %v1558 = vrot.slane %v1543, 4
        %v1559 = vsel %vm258, 0.0, %v1558
        %v1560 = vrot.slane %v1551, 4
        %v1561 = vsel %vm258, 0.0, %v1560
        %v1562 = vrot.slane %v1555, 4
        %v1563 = vsel %vm258, 0.0, %v1562
        %1565 = vrot.lane.b32.xlu0 %v1501, 16
        %v1566 = vpop.permute.xlu0 %1565
        %1569 = vrot.lane.b32.xlu0 %v1487, 32
        %v1570 = vpop.permute.xlu0 %1569
        %1573 = vrot.lane.b32.xlu0 %v1503, 48
        %v1574 = vpop.permute.xlu0 %1573
        %1577 = vrot.lane.b32.xlu0 %v1495, 64
        %v1578 = vpop.permute.xlu0 %1577
        %1581 = vrot.lane.b32.xlu0 %v1505, 80
        %v1582 = vpop.permute.xlu0 %1581
        %1585 = vrot.lane.b32.xlu0 %v1499, 96
        %v1586 = vpop.permute.xlu0 %1585
        %1589 = vrot.lane.b32.xlu0 %v1507, 112
        %v1590 = vpop.permute.xlu0 %1589
        %1593 = vrot.lane.b32.xlu0 %v1557, 16
        %v1594 = vpop.permute.xlu0 %1593
        %1597 = vrot.lane.b32.xlu0 %v1543, 32
        %v1598 = vpop.permute.xlu0 %1597
        %1601 = vrot.lane.b32.xlu0 %v1559, 48
        %v1602 = vpop.permute.xlu0 %1601
        %1605 = vrot.lane.b32.xlu0 %v1551, 64
        %v1606 = vpop.permute.xlu0 %1605
        %1609 = vrot.lane.b32.xlu0 %v1561, 80
        %v1610 = vpop.permute.xlu0 %1609
        %1613 = vrot.lane.b32.xlu0 %v1555, 96
        %v1614 = vpop.permute.xlu0 %1613
        %1617 = vrot.lane.b32.xlu0 %v1563, 112
        %v1618 = vpop.permute.xlu0 %1617
        %v1620 = vsel %vm772, %v1483, %v1566
        %v1621 = vsel %vm774, %v1620, %v1570
        %v1622 = vsel %vm776, %v1621, %v1574
        %v1623 = vsel %vm778, %v1622, %v1578
        %v1624 = vsel %vm780, %v1623, %v1582
        %v1625 = vsel %vm782, %v1624, %v1586
        %v1626 = vsel %vm784, %v1625, %v1590
        %v1627 = vsel %vm772, %v1539, %v1594
        %v1628 = vsel %vm774, %v1627, %v1598
        %v1629 = vsel %vm776, %v1628, %v1602
        %v1630 = vsel %vm778, %v1629, %v1606
        %v1631 = vsel %vm780, %v1630, %v1610
        %v1632 = vsel %vm782, %v1631, %v1614
        %v1633 = vsel %vm784, %v1632, %v1618
        %1634 = vrot.lane.b32.xlu0 %v1220, 126
        %v1635 = vpop.permute.xlu0 %1634
        %1636 = vrot.lane.b32.xlu0 %v1222, 126
        %v1637 = vpop.permute.xlu0 %1636
        %1638 = vrot.lane.b32.xlu0 %v1225, 126
        %v1639 = vpop.permute.xlu0 %1638
        %1640 = vrot.lane.b32.xlu0 %v1227, 126
        %v1641 = vpop.permute.xlu0 %1640
        %1642 = vrot.lane.b32.xlu0 %v1230, 126
        %v1643 = vpop.permute.xlu0 %1642
        %1644 = vrot.lane.b32.xlu0 %v1232, 126
        %v1645 = vpop.permute.xlu0 %1644
        %1646 = vrot.lane.b32.xlu0 %v1235, 126
        %v1647 = vpop.permute.xlu0 %1646
        %1648 = vrot.lane.b32.xlu0 %v1237, 126
        %v1649 = vpop.permute.xlu0 %1648
        %v1658 = vrot.slane %v1643, 4
        %v1659 = vsel %vm258, %v1658, %v1635
        %v1660 = vrot.slane %v1635, 4
        %v1661 = vsel %vm258, %v1643, %v1660
        %v1663 = vunpack.c.l.s4 1983009808
        %v1664 = vunpack.c.0.s8 %v1663
        %v1665 = vperm.slane %v1659, %v1664
        %v1667 = vunpack.c.l.s4 1983009808
        %v1668 = vunpack.c.0.s8 %v1667
        %v1669 = vperm.slane %v1661, %v1668
        %v1670 = vrot.slane %v1647, 4
        %v1671 = vsel %vm258, %v1670, %v1639
        %v1672 = vrot.slane %v1639, 4
        %v1673 = vsel %vm258, %v1647, %v1672
        %v1675 = vunpack.c.l.s4 1983009808
        %v1676 = vunpack.c.0.s8 %v1675
        %v1677 = vperm.slane %v1671, %v1676
        %v1679 = vunpack.c.l.s4 1983009808
        %v1680 = vunpack.c.0.s8 %v1679
        %v1681 = vperm.slane %v1673, %v1680
        %v1682 = vrot.slane %v1677, 4
        %v1683 = vsel %vm258, %v1682, %v1665
        %v1684 = vrot.slane %v1665, 4
        %v1685 = vsel %vm258, %v1677, %v1684
        %v1687 = vunpack.c.l.s4 1934713408
        %v1688 = vunpack.c.0.s8 %v1687
        %v1689 = vperm.slane %v1683, %v1688
        %v1691 = vunpack.c.l.s4 1934713408
        %v1692 = vunpack.c.0.s8 %v1691
        %v1693 = vperm.slane %v1685, %v1692
        %v1694 = vrot.slane %v1681, 4
        %v1695 = vsel %vm258, %v1694, %v1669
        %v1696 = vrot.slane %v1669, 4
        %v1697 = vsel %vm258, %v1681, %v1696
        %v1699 = vunpack.c.l.s4 1934713408
        %v1700 = vunpack.c.0.s8 %v1699
        %v1701 = vperm.slane %v1695, %v1700
        %v1703 = vunpack.c.l.s4 1934713408
        %v1704 = vunpack.c.0.s8 %v1703
        %v1705 = vperm.slane %v1697, %v1704
        %v1706 = vrot.slane %v1689, 4
        %v1707 = vsel %vm258, 0.0, %v1706
        %v1708 = vrot.slane %v1693, 4
        %v1709 = vsel %vm258, 0.0, %v1708
        %v1710 = vrot.slane %v1701, 4
        %v1711 = vsel %vm258, 0.0, %v1710
        %v1712 = vrot.slane %v1705, 4
        %v1713 = vsel %vm258, 0.0, %v1712
        %v1714 = vrot.slane %v1645, 4
        %v1715 = vsel %vm258, %v1714, %v1637
        %v1716 = vrot.slane %v1637, 4
        %v1717 = vsel %vm258, %v1645, %v1716
        %v1719 = vunpack.c.l.s4 1983009808
        %v1720 = vunpack.c.0.s8 %v1719
        %v1721 = vperm.slane %v1715, %v1720
        %v1723 = vunpack.c.l.s4 1983009808
        %v1724 = vunpack.c.0.s8 %v1723
        %v1725 = vperm.slane %v1717, %v1724
        %v1726 = vrot.slane %v1649, 4
        %v1727 = vsel %vm258, %v1726, %v1641
        %v1728 = vrot.slane %v1641, 4
        %v1729 = vsel %vm258, %v1649, %v1728
        %v1731 = vunpack.c.l.s4 1983009808
        %v1732 = vunpack.c.0.s8 %v1731
        %v1733 = vperm.slane %v1727, %v1732
        %v1735 = vunpack.c.l.s4 1983009808
        %v1736 = vunpack.c.0.s8 %v1735
        %v1737 = vperm.slane %v1729, %v1736
        %v1738 = vrot.slane %v1733, 4
        %v1739 = vsel %vm258, %v1738, %v1721
        %v1740 = vrot.slane %v1721, 4
        %v1741 = vsel %vm258, %v1733, %v1740
        %v1743 = vunpack.c.l.s4 1934713408
        %v1744 = vunpack.c.0.s8 %v1743
        %v1745 = vperm.slane %v1739, %v1744
        %v1747 = vunpack.c.l.s4 1934713408
        %v1748 = vunpack.c.0.s8 %v1747
        %v1749 = vperm.slane %v1741, %v1748
        %v1750 = vrot.slane %v1737, 4
        %v1751 = vsel %vm258, %v1750, %v1725
        %v1752 = vrot.slane %v1725, 4
        %v1753 = vsel %vm258, %v1737, %v1752
        %v1755 = vunpack.c.l.s4 1934713408
        %v1756 = vunpack.c.0.s8 %v1755
        %v1757 = vperm.slane %v1751, %v1756
        %v1759 = vunpack.c.l.s4 1934713408
        %v1760 = vunpack.c.0.s8 %v1759
        %v1761 = vperm.slane %v1753, %v1760
        %v1762 = vrot.slane %v1745, 4
        %v1763 = vsel %vm258, 0.0, %v1762
        %v1764 = vrot.slane %v1749, 4
        %v1765 = vsel %vm258, 0.0, %v1764
        %v1766 = vrot.slane %v1757, 4
        %v1767 = vsel %vm258, 0.0, %v1766
        %v1768 = vrot.slane %v1761, 4
        %v1769 = vsel %vm258, 0.0, %v1768
        %1771 = vrot.lane.b32.xlu0 %v1707, 16
        %v1772 = vpop.permute.xlu0 %1771
        %1775 = vrot.lane.b32.xlu0 %v1693, 32
        %v1776 = vpop.permute.xlu0 %1775
        %1779 = vrot.lane.b32.xlu0 %v1709, 48
        %v1780 = vpop.permute.xlu0 %1779
        %1783 = vrot.lane.b32.xlu0 %v1701, 64
        %v1784 = vpop.permute.xlu0 %1783
        %1787 = vrot.lane.b32.xlu0 %v1711, 80
        %v1788 = vpop.permute.xlu0 %1787
        %1791 = vrot.lane.b32.xlu0 %v1705, 96
        %v1792 = vpop.permute.xlu0 %1791
        %1795 = vrot.lane.b32.xlu0 %v1713, 112
        %v1796 = vpop.permute.xlu0 %1795
        %1799 = vrot.lane.b32.xlu0 %v1763, 16
        %v1800 = vpop.permute.xlu0 %1799
        %1803 = vrot.lane.b32.xlu0 %v1749, 32
        %v1804 = vpop.permute.xlu0 %1803
        %1807 = vrot.lane.b32.xlu0 %v1765, 48
        %v1808 = vpop.permute.xlu0 %1807
        %1811 = vrot.lane.b32.xlu0 %v1757, 64
        %v1812 = vpop.permute.xlu0 %1811
        %1815 = vrot.lane.b32.xlu0 %v1767, 80
        %v1816 = vpop.permute.xlu0 %1815
        %1819 = vrot.lane.b32.xlu0 %v1761, 96
        %v1820 = vpop.permute.xlu0 %1819
        %1823 = vrot.lane.b32.xlu0 %v1769, 112
        %v1824 = vpop.permute.xlu0 %1823
        %v1826 = vsel %vm772, %v1689, %v1772
        %v1827 = vsel %vm774, %v1826, %v1776
        %v1828 = vsel %vm776, %v1827, %v1780
        %v1829 = vsel %vm778, %v1828, %v1784
        %v1830 = vsel %vm780, %v1829, %v1788
        %v1831 = vsel %vm782, %v1830, %v1792
        %v1832 = vsel %vm784, %v1831, %v1796
        %v1833 = vsel %vm772, %v1745, %v1800
        %v1834 = vsel %vm774, %v1833, %v1804
        %v1835 = vsel %vm776, %v1834, %v1808
        %v1836 = vsel %vm778, %v1835, %v1812
        %v1837 = vsel %vm780, %v1836, %v1816
        %v1838 = vsel %vm782, %v1837, %v1820
        %v1839 = vsel %vm784, %v1838, %v1824
        %vm1840 = vcmask 1045504
        %v1841 = vrot.slane %v592, 2
        %v1842 = vrot.slane %v593, 2
        %v1843 = vsel %vm1840, %v1841, %v1842
        %v1844 = vrot.slane %v594, 2
        %v1845 = vsel %vm1840, %v1842, %v1844
        %v1846 = vrot.slane %v595, 2
        %v1847 = vrot.slane %v596, 2
        %v1848 = vsel %vm1840, %v1846, %v1847
        %v1849 = vrot.slane %v597, 2
        %v1850 = vsel %vm1840, %v1847, %v1849
        %v1851 = vrot.slane %v598, 2
        %v1852 = vrot.slane %v599, 2
        %v1853 = vsel %vm1840, %v1851, %v1852
        %v1854 = vrot.slane %v600, 2
        %v1855 = vsel %vm1840, %v1852, %v1854
        %v1856 = vrot.slane %v601, 2
        %v1857 = vrot.slane %v602, 2
        %v1858 = vsel %vm1840, %v1856, %v1857
        %v1859 = vrot.slane %v603, 2
        %v1860 = vsel %vm1840, %v1857, %v1859
        %v1869 = vrot.slane %v1853, 4
        %v1870 = vsel %vm258, %v1869, %v1843
        %v1871 = vrot.slane %v1843, 4
        %v1872 = vsel %vm258, %v1853, %v1871
        %v1874 = vunpack.c.l.s4 1983009808
        %v1875 = vunpack.c.0.s8 %v1874
        %v1876 = vperm.slane %v1870, %v1875
        %v1878 = vunpack.c.l.s4 1983009808
        %v1879 = vunpack.c.0.s8 %v1878
        %v1880 = vperm.slane %v1872, %v1879
        %v1881 = vrot.slane %v1858, 4
        %v1882 = vsel %vm258, %v1881, %v1848
        %v1883 = vrot.slane %v1848, 4
        %v1884 = vsel %vm258, %v1858, %v1883
        %v1886 = vunpack.c.l.s4 1983009808
        %v1887 = vunpack.c.0.s8 %v1886
        %v1888 = vperm.slane %v1882, %v1887
        %v1890 = vunpack.c.l.s4 1983009808
        %v1891 = vunpack.c.0.s8 %v1890
        %v1892 = vperm.slane %v1884, %v1891
        %v1893 = vrot.slane %v1888, 4
        %v1894 = vsel %vm258, %v1893, %v1876
        %v1895 = vrot.slane %v1876, 4
        %v1896 = vsel %vm258, %v1888, %v1895
        %v1898 = vunpack.c.l.s4 1934713408
        %v1899 = vunpack.c.0.s8 %v1898
        %v1900 = vperm.slane %v1894, %v1899
        %v1902 = vunpack.c.l.s4 1934713408
        %v1903 = vunpack.c.0.s8 %v1902
        %v1904 = vperm.slane %v1896, %v1903
        %v1905 = vrot.slane %v1892, 4
        %v1906 = vsel %vm258, %v1905, %v1880
        %v1907 = vrot.slane %v1880, 4
        %v1908 = vsel %vm258, %v1892, %v1907
        %v1910 = vunpack.c.l.s4 1934713408
        %v1911 = vunpack.c.0.s8 %v1910
        %v1912 = vperm.slane %v1906, %v1911
        %v1914 = vunpack.c.l.s4 1934713408
        %v1915 = vunpack.c.0.s8 %v1914
        %v1916 = vperm.slane %v1908, %v1915
        %v1917 = vrot.slane %v1900, 4
        %v1918 = vsel %vm258, 0.0, %v1917
        %v1919 = vrot.slane %v1904, 4
        %v1920 = vsel %vm258, 0.0, %v1919
        %v1921 = vrot.slane %v1912, 4
        %v1922 = vsel %vm258, 0.0, %v1921
        %v1923 = vrot.slane %v1916, 4
        %v1924 = vsel %vm258, 0.0, %v1923
        %v1925 = vrot.slane %v1855, 4
        %v1926 = vsel %vm258, %v1925, %v1845
        %v1927 = vrot.slane %v1845, 4
        %v1928 = vsel %vm258, %v1855, %v1927
        %v1930 = vunpack.c.l.s4 1983009808
        %v1931 = vunpack.c.0.s8 %v1930
        %v1932 = vperm.slane %v1926, %v1931
        %v1934 = vunpack.c.l.s4 1983009808
        %v1935 = vunpack.c.0.s8 %v1934
        %v1936 = vperm.slane %v1928, %v1935
        %v1937 = vrot.slane %v1860, 4
        %v1938 = vsel %vm258, %v1937, %v1850
        %v1939 = vrot.slane %v1850, 4
        %v1940 = vsel %vm258, %v1860, %v1939
        %v1942 = vunpack.c.l.s4 1983009808
        %v1943 = vunpack.c.0.s8 %v1942
        %v1944 = vperm.slane %v1938, %v1943
        %v1946 = vunpack.c.l.s4 1983009808
        %v1947 = vunpack.c.0.s8 %v1946
        %v1948 = vperm.slane %v1940, %v1947
        %v1949 = vrot.slane %v1944, 4
        %v1950 = vsel %vm258, %v1949, %v1932
        %v1951 = vrot.slane %v1932, 4
        %v1952 = vsel %vm258, %v1944, %v1951
        %v1954 = vunpack.c.l.s4 1934713408
        %v1955 = vunpack.c.0.s8 %v1954
        %v1956 = vperm.slane %v1950, %v1955
        %v1958 = vunpack.c.l.s4 1934713408
        %v1959 = vunpack.c.0.s8 %v1958
        %v1960 = vperm.slane %v1952, %v1959
        %v1961 = vrot.slane %v1948, 4
        %v1962 = vsel %vm258, %v1961, %v1936
        %v1963 = vrot.slane %v1936, 4
        %v1964 = vsel %vm258, %v1948, %v1963
        %v1966 = vunpack.c.l.s4 1934713408
        %v1967 = vunpack.c.0.s8 %v1966
        %v1968 = vperm.slane %v1962, %v1967
        %v1970 = vunpack.c.l.s4 1934713408
        %v1971 = vunpack.c.0.s8 %v1970
        %v1972 = vperm.slane %v1964, %v1971
        %v1973 = vrot.slane %v1956, 4
        %v1974 = vsel %vm258, 0.0, %v1973
        %v1975 = vrot.slane %v1960, 4
        %v1976 = vsel %vm258, 0.0, %v1975
        %v1977 = vrot.slane %v1968, 4
        %v1978 = vsel %vm258, 0.0, %v1977
        %v1979 = vrot.slane %v1972, 4
        %v1980 = vsel %vm258, 0.0, %v1979
        %1982 = vrot.lane.b32.xlu0 %v1918, 16
        %v1983 = vpop.permute.xlu0 %1982
        %1986 = vrot.lane.b32.xlu0 %v1904, 32
        %v1987 = vpop.permute.xlu0 %1986
        %1990 = vrot.lane.b32.xlu0 %v1920, 48
        %v1991 = vpop.permute.xlu0 %1990
        %1994 = vrot.lane.b32.xlu0 %v1912, 64
        %v1995 = vpop.permute.xlu0 %1994
        %1998 = vrot.lane.b32.xlu0 %v1922, 80
        %v1999 = vpop.permute.xlu0 %1998
        %2002 = vrot.lane.b32.xlu0 %v1916, 96
        %v2003 = vpop.permute.xlu0 %2002
        %2006 = vrot.lane.b32.xlu0 %v1924, 112
        %v2007 = vpop.permute.xlu0 %2006
        %2010 = vrot.lane.b32.xlu0 %v1974, 16
        %v2011 = vpop.permute.xlu0 %2010
        %2014 = vrot.lane.b32.xlu0 %v1960, 32
        %v2015 = vpop.permute.xlu0 %2014
        %2018 = vrot.lane.b32.xlu0 %v1976, 48
        %v2019 = vpop.permute.xlu0 %2018
        %2022 = vrot.lane.b32.xlu0 %v1968, 64
        %v2023 = vpop.permute.xlu0 %2022
        %2026 = vrot.lane.b32.xlu0 %v1978, 80
        %v2027 = vpop.permute.xlu0 %2026
        %2030 = vrot.lane.b32.xlu0 %v1972, 96
        %v2031 = vpop.permute.xlu0 %2030
        %2034 = vrot.lane.b32.xlu0 %v1980, 112
        %v2035 = vpop.permute.xlu0 %2034
        %v2037 = vsel %vm772, %v1900, %v1983
        %v2038 = vsel %vm774, %v2037, %v1987
        %v2039 = vsel %vm776, %v2038, %v1991
        %v2040 = vsel %vm778, %v2039, %v1995
        %v2041 = vsel %vm780, %v2040, %v1999
        %v2042 = vsel %vm782, %v2041, %v2003
        %v2043 = vsel %vm784, %v2042, %v2007
        %v2044 = vsel %vm772, %v1956, %v2011
        %v2045 = vsel %vm774, %v2044, %v2015
        %v2046 = vsel %vm776, %v2045, %v2019
        %v2047 = vsel %vm778, %v2046, %v2023
        %v2048 = vsel %vm780, %v2047, %v2027
        %v2049 = vsel %vm782, %v2048, %v2031
        %v2050 = vsel %vm784, %v2049, %v2035
        %2051 = vrot.lane.b32.xlu0 %v1843, 127
        %v2052 = vpop.permute.xlu0 %2051
        %2053 = vrot.lane.b32.xlu0 %v1845, 127
        %v2054 = vpop.permute.xlu0 %2053
        %2055 = vrot.lane.b32.xlu0 %v1848, 127
        %v2056 = vpop.permute.xlu0 %2055
        %2057 = vrot.lane.b32.xlu0 %v1850, 127
        %v2058 = vpop.permute.xlu0 %2057
        %2059 = vrot.lane.b32.xlu0 %v1853, 127
        %v2060 = vpop.permute.xlu0 %2059
        %2061 = vrot.lane.b32.xlu0 %v1855, 127
        %v2062 = vpop.permute.xlu0 %2061
        %2063 = vrot.lane.b32.xlu0 %v1858, 127
        %v2064 = vpop.permute.xlu0 %2063
        %2065 = vrot.lane.b32.xlu0 %v1860, 127
        %v2066 = vpop.permute.xlu0 %2065
        %v2075 = vrot.slane %v2060, 4
        %v2076 = vsel %vm258, %v2075, %v2052
        %v2077 = vrot.slane %v2052, 4
        %v2078 = vsel %vm258, %v2060, %v2077
        %v2080 = vunpack.c.l.s4 1983009808
        %v2081 = vunpack.c.0.s8 %v2080
        %v2082 = vperm.slane %v2076, %v2081
        %v2084 = vunpack.c.l.s4 1983009808
        %v2085 = vunpack.c.0.s8 %v2084
        %v2086 = vperm.slane %v2078, %v2085
        %v2087 = vrot.slane %v2064, 4
        %v2088 = vsel %vm258, %v2087, %v2056
        %v2089 = vrot.slane %v2056, 4
        %v2090 = vsel %vm258, %v2064, %v2089
        %v2092 = vunpack.c.l.s4 1983009808
        %v2093 = vunpack.c.0.s8 %v2092
        %v2094 = vperm.slane %v2088, %v2093
        %v2096 = vunpack.c.l.s4 1983009808
        %v2097 = vunpack.c.0.s8 %v2096
        %v2098 = vperm.slane %v2090, %v2097
        %v2099 = vrot.slane %v2094, 4
        %v2100 = vsel %vm258, %v2099, %v2082
        %v2101 = vrot.slane %v2082, 4
        %v2102 = vsel %vm258, %v2094, %v2101
        %v2104 = vunpack.c.l.s4 1934713408
        %v2105 = vunpack.c.0.s8 %v2104
        %v2106 = vperm.slane %v2100, %v2105
        %v2108 = vunpack.c.l.s4 1934713408
        %v2109 = vunpack.c.0.s8 %v2108
        %v2110 = vperm.slane %v2102, %v2109
        %v2111 = vrot.slane %v2098, 4
        %v2112 = vsel %vm258, %v2111, %v2086
        %v2113 = vrot.slane %v2086, 4
        %v2114 = vsel %vm258, %v2098, %v2113
        %v2116 = vunpack.c.l.s4 1934713408
        %v2117 = vunpack.c.0.s8 %v2116
        %v2118 = vperm.slane %v2112, %v2117
        %v2120 = vunpack.c.l.s4 1934713408
        %v2121 = vunpack.c.0.s8 %v2120
        %v2122 = vperm.slane %v2114, %v2121
        %v2123 = vrot.slane %v2106, 4
        %v2124 = vsel %vm258, 0.0, %v2123
        %v2125 = vrot.slane %v2110, 4
        %v2126 = vsel %vm258, 0.0, %v2125
        %v2127 = vrot.slane %v2118, 4
        %v2128 = vsel %vm258, 0.0, %v2127
        %v2129 = vrot.slane %v2122, 4
        %v2130 = vsel %vm258, 0.0, %v2129
        %v2131 = vrot.slane %v2062, 4
        %v2132 = vsel %vm258, %v2131, %v2054
        %v2133 = vrot.slane %v2054, 4
        %v2134 = vsel %vm258, %v2062, %v2133
        %v2136 = vunpack.c.l.s4 1983009808
        %v2137 = vunpack.c.0.s8 %v2136
        %v2138 = vperm.slane %v2132, %v2137
        %v2140 = vunpack.c.l.s4 1983009808
        %v2141 = vunpack.c.0.s8 %v2140
        %v2142 = vperm.slane %v2134, %v2141
        %v2143 = vrot.slane %v2066, 4
        %v2144 = vsel %vm258, %v2143, %v2058
        %v2145 = vrot.slane %v2058, 4
        %v2146 = vsel %vm258, %v2066, %v2145
        %v2148 = vunpack.c.l.s4 1983009808
        %v2149 = vunpack.c.0.s8 %v2148
        %v2150 = vperm.slane %v2144, %v2149
        %v2152 = vunpack.c.l.s4 1983009808
        %v2153 = vunpack.c.0.s8 %v2152
        %v2154 = vperm.slane %v2146, %v2153
        %v2155 = vrot.slane %v2150, 4
        %v2156 = vsel %vm258, %v2155, %v2138
        %v2157 = vrot.slane %v2138, 4
        %v2158 = vsel %vm258, %v2150, %v2157
        %v2160 = vunpack.c.l.s4 1934713408
        %v2161 = vunpack.c.0.s8 %v2160
        %v2162 = vperm.slane %v2156, %v2161
        %v2164 = vunpack.c.l.s4 1934713408
        %v2165 = vunpack.c.0.s8 %v2164
        %v2166 = vperm.slane %v2158, %v2165
        %v2167 = vrot.slane %v2154, 4
        %v2168 = vsel %vm258, %v2167, %v2142
        %v2169 = vrot.slane %v2142, 4
        %v2170 = vsel %vm258, %v2154, %v2169
        %v2172 = vunpack.c.l.s4 1934713408
        %v2173 = vunpack.c.0.s8 %v2172
        %v2174 = vperm.slane %v2168, %v2173
        %v2176 = vunpack.c.l.s4 1934713408
        %v2177 = vunpack.c.0.s8 %v2176
        %v2178 = vperm.slane %v2170, %v2177
        %v2179 = vrot.slane %v2162, 4
        %v2180 = vsel %vm258, 0.0, %v2179
        %v2181 = vrot.slane %v2166, 4
        %v2182 = vsel %vm258, 0.0, %v2181
        %v2183 = vrot.slane %v2174, 4
        %v2184 = vsel %vm258, 0.0, %v2183
        %v2185 = vrot.slane %v2178, 4
        %v2186 = vsel %vm258, 0.0, %v2185
        %2188 = vrot.lane.b32.xlu0 %v2124, 16
        %v2189 = vpop.permute.xlu0 %2188
        %2192 = vrot.lane.b32.xlu0 %v2110, 32
        %v2193 = vpop.permute.xlu0 %2192
        %2196 = vrot.lane.b32.xlu0 %v2126, 48
        %v2197 = vpop.permute.xlu0 %2196
        %2200 = vrot.lane.b32.xlu0 %v2118, 64
        %v2201 = vpop.permute.xlu0 %2200
        %2204 = vrot.lane.b32.xlu0 %v2128, 80
        %v2205 = vpop.permute.xlu0 %2204
        %2208 = vrot.lane.b32.xlu0 %v2122, 96
        %v2209 = vpop.permute.xlu0 %2208
        %2212 = vrot.lane.b32.xlu0 %v2130, 112
        %v2213 = vpop.permute.xlu0 %2212
        %2216 = vrot.lane.b32.xlu0 %v2180, 16
        %v2217 = vpop.permute.xlu0 %2216
        %2220 = vrot.lane.b32.xlu0 %v2166, 32
        %v2221 = vpop.permute.xlu0 %2220
        %2224 = vrot.lane.b32.xlu0 %v2182, 48
        %v2225 = vpop.permute.xlu0 %2224
        %2228 = vrot.lane.b32.xlu0 %v2174, 64
        %v2229 = vpop.permute.xlu0 %2228
        %2232 = vrot.lane.b32.xlu0 %v2184, 80
        %v2233 = vpop.permute.xlu0 %2232
        %2236 = vrot.lane.b32.xlu0 %v2178, 96
        %v2237 = vpop.permute.xlu0 %2236
        %2240 = vrot.lane.b32.xlu0 %v2186, 112
        %v2241 = vpop.permute.xlu0 %2240
        %v2243 = vsel %vm772, %v2106, %v2189
        %v2244 = vsel %vm774, %v2243, %v2193
        %v2245 = vsel %vm776, %v2244, %v2197
        %v2246 = vsel %vm778, %v2245, %v2201
        %v2247 = vsel %vm780, %v2246, %v2205
        %v2248 = vsel %vm782, %v2247, %v2209
        %v2249 = vsel %vm784, %v2248, %v2213
        %v2250 = vsel %vm772, %v2162, %v2217
        %v2251 = vsel %vm774, %v2250, %v2221
        %v2252 = vsel %vm776, %v2251, %v2225
        %v2253 = vsel %vm778, %v2252, %v2229
        %v2254 = vsel %vm780, %v2253, %v2233
        %v2255 = vsel %vm782, %v2254, %v2237
        %v2256 = vsel %vm784, %v2255, %v2241
        %2257 = vrot.lane.b32.xlu0 %v1843, 126
        %v2258 = vpop.permute.xlu0 %2257
        %2259 = vrot.lane.b32.xlu0 %v1845, 126
        %v2260 = vpop.permute.xlu0 %2259
        %2261 = vrot.lane.b32.xlu0 %v1848, 126
        %v2262 = vpop.permute.xlu0 %2261
        %2263 = vrot.lane.b32.xlu0 %v1850, 126
        %v2264 = vpop.permute.xlu0 %2263
        %2265 = vrot.lane.b32.xlu0 %v1853, 126
        %v2266 = vpop.permute.xlu0 %2265
        %2267 = vrot.lane.b32.xlu0 %v1855, 126
        %v2268 = vpop.permute.xlu0 %2267
        %2269 = vrot.lane.b32.xlu0 %v1858, 126
        %v2270 = vpop.permute.xlu0 %2269
        %2271 = vrot.lane.b32.xlu0 %v1860, 126
        %v2272 = vpop.permute.xlu0 %2271
        %v2281 = vrot.slane %v2266, 4
        %v2282 = vsel %vm258, %v2281, %v2258
        %v2283 = vrot.slane %v2258, 4
        %v2284 = vsel %vm258, %v2266, %v2283
        %v2286 = vunpack.c.l.s4 1983009808
        %v2287 = vunpack.c.0.s8 %v2286
        %v2288 = vperm.slane %v2282, %v2287
        %v2290 = vunpack.c.l.s4 1983009808
        %v2291 = vunpack.c.0.s8 %v2290
        %v2292 = vperm.slane %v2284, %v2291
        %v2293 = vrot.slane %v2270, 4
        %v2294 = vsel %vm258, %v2293, %v2262
        %v2295 = vrot.slane %v2262, 4
        %v2296 = vsel %vm258, %v2270, %v2295
        %v2298 = vunpack.c.l.s4 1983009808
        %v2299 = vunpack.c.0.s8 %v2298
        %v2300 = vperm.slane %v2294, %v2299
        %v2302 = vunpack.c.l.s4 1983009808
        %v2303 = vunpack.c.0.s8 %v2302
        %v2304 = vperm.slane %v2296, %v2303
        %v2305 = vrot.slane %v2300, 4
        %v2306 = vsel %vm258, %v2305, %v2288
        %v2307 = vrot.slane %v2288, 4
        %v2308 = vsel %vm258, %v2300, %v2307
        %v2310 = vunpack.c.l.s4 1934713408
        %v2311 = vunpack.c.0.s8 %v2310
        %v2312 = vperm.slane %v2306, %v2311
        %v2314 = vunpack.c.l.s4 1934713408
        %v2315 = vunpack.c.0.s8 %v2314
        %v2316 = vperm.slane %v2308, %v2315
        %v2317 = vrot.slane %v2304, 4
        %v2318 = vsel %vm258, %v2317, %v2292
        %v2319 = vrot.slane %v2292, 4
        %v2320 = vsel %vm258, %v2304, %v2319
        %v2322 = vunpack.c.l.s4 1934713408
        %v2323 = vunpack.c.0.s8 %v2322
        %v2324 = vperm.slane %v2318, %v2323
        %v2326 = vunpack.c.l.s4 1934713408
        %v2327 = vunpack.c.0.s8 %v2326
        %v2328 = vperm.slane %v2320, %v2327
        %v2329 = vrot.slane %v2312, 4
        %v2330 = vsel %vm258, 0.0, %v2329
        %v2331 = vrot.slane %v2316, 4
        %v2332 = vsel %vm258, 0.0, %v2331
        %v2333 = vrot.slane %v2324, 4
        %v2334 = vsel %vm258, 0.0, %v2333
        %v2335 = vrot.slane %v2328, 4
        %v2336 = vsel %vm258, 0.0, %v2335
        %v2337 = vrot.slane %v2268, 4
        %v2338 = vsel %vm258, %v2337, %v2260
        %v2339 = vrot.slane %v2260, 4
        %v2340 = vsel %vm258, %v2268, %v2339
        %v2342 = vunpack.c.l.s4 1983009808
        %v2343 = vunpack.c.0.s8 %v2342
        %v2344 = vperm.slane %v2338, %v2343
        %v2346 = vunpack.c.l.s4 1983009808
        %v2347 = vunpack.c.0.s8 %v2346
        %v2348 = vperm.slane %v2340, %v2347
        %v2349 = vrot.slane %v2272, 4
        %v2350 = vsel %vm258, %v2349, %v2264
        %v2351 = vrot.slane %v2264, 4
        %v2352 = vsel %vm258, %v2272, %v2351
        %v2354 = vunpack.c.l.s4 1983009808
        %v2355 = vunpack.c.0.s8 %v2354
        %v2356 = vperm.slane %v2350, %v2355
        %v2358 = vunpack.c.l.s4 1983009808
        %v2359 = vunpack.c.0.s8 %v2358
        %v2360 = vperm.slane %v2352, %v2359
        %v2361 = vrot.slane %v2356, 4
        %v2362 = vsel %vm258, %v2361, %v2344
        %v2363 = vrot.slane %v2344, 4
        %v2364 = vsel %vm258, %v2356, %v2363
        %v2366 = vunpack.c.l.s4 1934713408
        %v2367 = vunpack.c.0.s8 %v2366
        %v2368 = vperm.slane %v2362, %v2367
        %v2370 = vunpack.c.l.s4 1934713408
        %v2371 = vunpack.c.0.s8 %v2370
        %v2372 = vperm.slane %v2364, %v2371
        %v2373 = vrot.slane %v2360, 4
        %v2374 = vsel %vm258, %v2373, %v2348
        %v2375 = vrot.slane %v2348, 4
        %v2376 = vsel %vm258, %v2360, %v2375
        %v2378 = vunpack.c.l.s4 1934713408
        %v2379 = vunpack.c.0.s8 %v2378
        %v2380 = vperm.slane %v2374, %v2379
        %v2382 = vunpack.c.l.s4 1934713408
        %v2383 = vunpack.c.0.s8 %v2382
        %v2384 = vperm.slane %v2376, %v2383
        %v2385 = vrot.slane %v2368, 4
        %v2386 = vsel %vm258, 0.0, %v2385
        %v2387 = vrot.slane %v2372, 4
        %v2388 = vsel %vm258, 0.0, %v2387
        %v2389 = vrot.slane %v2380, 4
        %v2390 = vsel %vm258, 0.0, %v2389
        %v2391 = vrot.slane %v2384, 4
        %v2392 = vsel %vm258, 0.0, %v2391
        %2394 = vrot.lane.b32.xlu0 %v2330, 16
        %v2395 = vpop.permute.xlu0 %2394
        %2398 = vrot.lane.b32.xlu0 %v2316, 32
        %v2399 = vpop.permute.xlu0 %2398
        %2402 = vrot.lane.b32.xlu0 %v2332, 48
        %v2403 = vpop.permute.xlu0 %2402
        %2406 = vrot.lane.b32.xlu0 %v2324, 64
        %v2407 = vpop.permute.xlu0 %2406
        %2410 = vrot.lane.b32.xlu0 %v2334, 80
        %v2411 = vpop.permute.xlu0 %2410
        %2414 = vrot.lane.b32.xlu0 %v2328, 96
        %v2415 = vpop.permute.xlu0 %2414
        %2418 = vrot.lane.b32.xlu0 %v2336, 112
        %v2419 = vpop.permute.xlu0 %2418
        %2422 = vrot.lane.b32.xlu0 %v2386, 16
        %v2423 = vpop.permute.xlu0 %2422
        %2426 = vrot.lane.b32.xlu0 %v2372, 32
        %v2427 = vpop.permute.xlu0 %2426
        %2430 = vrot.lane.b32.xlu0 %v2388, 48
        %v2431 = vpop.permute.xlu0 %2430
        %2434 = vrot.lane.b32.xlu0 %v2380, 64
        %v2435 = vpop.permute.xlu0 %2434
        %2438 = vrot.lane.b32.xlu0 %v2390, 80
        %v2439 = vpop.permute.xlu0 %2438
        %2442 = vrot.lane.b32.xlu0 %v2384, 96
        %v2443 = vpop.permute.xlu0 %2442
        %2446 = vrot.lane.b32.xlu0 %v2392, 112
        %v2447 = vpop.permute.xlu0 %2446
        %v2449 = vsel %vm772, %v2312, %v2395
        %v2450 = vsel %vm774, %v2449, %v2399
        %v2451 = vsel %vm776, %v2450, %v2403
        %v2452 = vsel %vm778, %v2451, %v2407
        %v2453 = vsel %vm780, %v2452, %v2411
        %v2454 = vsel %vm782, %v2453, %v2415
        %v2455 = vsel %vm784, %v2454, %v2419
        %v2456 = vsel %vm772, %v2368, %v2423
        %v2457 = vsel %vm774, %v2456, %v2427
        %v2458 = vsel %vm776, %v2457, %v2431
        %v2459 = vsel %vm778, %v2458, %v2435
        %v2460 = vsel %vm780, %v2459, %v2439
        %v2461 = vsel %vm782, %v2460, %v2443
        %v2462 = vsel %vm784, %v2461, %v2447
        %v2465 = vrot.slane %v999, 4
        %v2466 = vrot.slane %v1006, 4
        %v2471 = vrot.slane %v1420, 4
        %v2472 = vrot.slane %v1427, 4
        %v2477 = vrot.slane %v1832, 4
        %v2478 = vrot.slane %v1839, 4
        %v2483 = vrot.slane %v2249, 4
        %v2484 = vrot.slane %v2256, 4
        %vm2487 = vcmask 1043456
        %v2488 = vsel %vm2487, %v785, %v2465
        %v2489 = vsel %vm2487, %v792, %v2466
        %v2490 = vsel %vm2487, %v1205, %v2471
        %v2491 = vsel %vm2487, %v1212, %v2472
        %v2492 = vsel %vm2487, %v1626, %v2477
        %v2493 = vsel %vm2487, %v1633, %v2478
        %v2494 = vsel %vm2487, %v2043, %v2483
        %v2495 = vsel %vm2487, %v2050, %v2484
        %v2496 = vld [vmem:[#allocation5] sm:$0xf]
        %vm2497 = vcmask 293888
        %v2499 = vsel %vm2497, %v2496, 0
        %v2502 = vsel %vm2487, %v2455, 0
        %v2505 = vsel %vm2487, %v2462, 0
        %2507 = vmatpush.msra.mxu0 0.0
        %2508 = vmatpush.msra.mxu0 0.0
        %2509 = vmatpush.msra.mxu0 0.0
        %2510 = vmatpush.msra.mxu0 0.0
        %2511 = vmatpush.msra.mxu0 0.0
        %2512 = vmatpush.msra.mxu0 0.0
        %2513 = vmatpush.msra.mxu0 0.0
        %2514 = vmatpush.msra.mxu0 0.0
        %2515 = vmatpush.msra.mxu0 0.0
        %2516 = vmatpush.msra.mxu0 0.0
        %2517 = vmatpush.msra.mxu0 0.0
        %2518 = vmatpush.msra.mxu0 %v2502
        %2519 = vmatpush.msra.mxu0 %v2494
        %2520 = vmatpush.msra.mxu0 %v2492
        %2521 = vmatpush.msra.mxu0 %v2490
        %2522 = vmatpush.msra.mxu0 %v2488
        %2523 = vmatmul.f32.gmra.mxu0 %v2499
        %v2524 = vpop.f32.mrf.mxu0
        %v2525 = vadd.f32 0.0, %v2524
        %2526 = vdwg.mxu0
        %2527 = vmatpush.msra.mxu0 0.0
        %2528 = vmatpush.msra.mxu0 0.0
        %2529 = vmatpush.msra.mxu0 0.0
        %2530 = vmatpush.msra.mxu0 0.0
        %2531 = vmatpush.msra.mxu0 0.0
        %2532 = vmatpush.msra.mxu0 0.0
        %2533 = vmatpush.msra.mxu0 0.0
        %2534 = vmatpush.msra.mxu0 0.0
        %2535 = vmatpush.msra.mxu0 0.0
        %2536 = vmatpush.msra.mxu0 0.0
        %2537 = vmatpush.msra.mxu0 0.0
        %2538 = vmatpush.msra.mxu0 %v2505
        %2539 = vmatpush.msra.mxu0 %v2495
        %2540 = vmatpush.msra.mxu0 %v2493
        %2541 = vmatpush.msra.mxu0 %v2491
        %2542 = vmatpush.msra.mxu0 %v2489
        %2543 = vmatmul.f32.gmra.mxu0 %v2499
        %v2544 = vpop.f32.mrf.mxu0
        %v2545 = vadd.f32 0.0, %v2544
        %2546 = vdwg.mxu0
        %v2547 = vsel %vm2487, %v2525, 0.0
        %v2548 = vsel %vm2487, %v2545, 0.0
        %v2549 = vadd.f32 %v2547, %v2548
        %2550 = vadd.xlane.f32.xlu0 %v2549
        %v2551 = vpop.xlane.xlu0 %2550
        %v2552 = vrcp.pop 256.0
        %v2553 = vmul.f32 256.0, %v2552
        %v2554 = vsub.f32 1.0, %v2553
        %v2555 = vmul.f32 %v2552, %v2554
        %v2556 = vadd.f32 %v2552, %v2555
        %vm2557 = vweird.f32 %v2552
        %v2558 = vsel %vm2557, %v2552, %v2556
        %v2559 = vmul.f32 %v2551, %v2558
        %v2560 = vmul.f32 %v2525, %v2525
        %v2561 = vmul.f32 %v2545, %v2545
        %v2562 = vsel %vm2487, %v2560, 0.0
        %v2563 = vsel %vm2487, %v2561, 0.0
        %v2564 = vadd.f32 %v2562, %v2563
        %2565 = vadd.xlane.f32.xlu0 %v2564
        %v2566 = vpop.xlane.xlu0 %2565
        %v2567 = vmul.f32 %v2566, %v2558
        %v2568 = vmul.f32 %v2559, %v2559
        %v2569 = vsub.f32 %v2567, %v2568
        %v2570 = vsub.f32 %v2525, %v2559
        %v2571 = vsub.f32 %v2545, %v2559
        %v2572 = vadd.f32 %v2569, 1e-05
        %v2573 = vrsqrt.pop %v2572
        %v2574 = vmul.f32 %v2573, %v2572
        %v2575 = vmul.f32 %v2574, %v2573
        %v2576 = vmul.f32 0.5, %v2575
        %v2577 = vsub.f32 1.5, %v2576
        %v2578 = vmul.f32 %v2573, %v2577
        %vm2579 = vweird.f32 %v2572
        %vm2580 = vweird.f32 %v2573
        %vm2581 = vmor %vm2579, %vm2580
        %v2582 = vsel %vm2581, %v2573, %v2578
        %v2583 = vmul.f32 %v2570, %v2582
        %v2584 = vmul.f32 %v2571, %v2582
        %v2585 = vmax.f32 %v2583, 0.0
        %v2586 = vmax.f32 %v2584, 0.0
        %2588 = vrot.lane.b32.xlu0 %v2585, 112
        %v2589 = vpop.permute.xlu0 %2588
        %2591 = vrot.lane.b32.xlu0 %v2585, 96
        %v2592 = vpop.permute.xlu0 %2591
        %2594 = vrot.lane.b32.xlu0 %v2585, 80
        %v2595 = vpop.permute.xlu0 %2594
        %2597 = vrot.lane.b32.xlu0 %v2585, 64
        %v2598 = vpop.permute.xlu0 %2597
        %2600 = vrot.lane.b32.xlu0 %v2585, 48
        %v2601 = vpop.permute.xlu0 %2600
        %2603 = vrot.lane.b32.xlu0 %v2585, 32
        %v2604 = vpop.permute.xlu0 %2603
        %2606 = vrot.lane.b32.xlu0 %v2585, 16
        %v2607 = vpop.permute.xlu0 %2606
        %2610 = vrot.lane.b32.xlu0 %v2586, 112
        %v2611 = vpop.permute.xlu0 %2610
        %2613 = vrot.lane.b32.xlu0 %v2586, 96
        %v2614 = vpop.permute.xlu0 %2613
        %2616 = vrot.lane.b32.xlu0 %v2586, 80
        %v2617 = vpop.permute.xlu0 %2616
        %2619 = vrot.lane.b32.xlu0 %v2586, 64
        %v2620 = vpop.permute.xlu0 %2619
        %2622 = vrot.lane.b32.xlu0 %v2586, 48
        %v2623 = vpop.permute.xlu0 %2622
        %2625 = vrot.lane.b32.xlu0 %v2586, 32
        %v2626 = vpop.permute.xlu0 %2625
        %2628 = vrot.lane.b32.xlu0 %v2586, 16
        %v2629 = vpop.permute.xlu0 %2628
        %v2631 = vrot.slane %v2592, 4
        %v2632 = vsel %vm258, %v2631, %v2585
        %v2634 = vunpack.c.l.s4 1983009808
        %v2635 = vunpack.c.0.s8 %v2634
        %v2636 = vperm.slane %v2632, %v2635
        %v2637 = vrot.slane %v2595, 4
        %v2638 = vsel %vm258, %v2637, %v2589
        %v2640 = vunpack.c.l.s4 1983009808
        %v2641 = vunpack.c.0.s8 %v2640
        %v2642 = vperm.slane %v2638, %v2641
        %v2643 = vrot.slane %v2604, 4
        %v2644 = vsel %vm258, %v2643, %v2598
        %v2646 = vunpack.c.l.s4 1983009808
        %v2647 = vunpack.c.0.s8 %v2646
        %v2648 = vperm.slane %v2644, %v2647
        %v2649 = vrot.slane %v2607, 4
        %v2650 = vsel %vm258, %v2649, %v2601
        %v2652 = vunpack.c.l.s4 1983009808
        %v2653 = vunpack.c.0.s8 %v2652
        %v2654 = vperm.slane %v2650, %v2653
        %v2655 = vrot.slane %v2642, 4
        %v2656 = vsel %vm258, %v2655, %v2636
        %v2657 = vrot.slane %v2636, 4
        %v2658 = vsel %vm258, %v2642, %v2657
        %v2660 = vunpack.c.l.s4 1934713408
        %v2661 = vunpack.c.0.s8 %v2660
        %v2662 = vperm.slane %v2656, %v2661
        %v2664 = vunpack.c.l.s4 1934713408
        %v2665 = vunpack.c.0.s8 %v2664
        %v2666 = vperm.slane %v2658, %v2665
        %v2667 = vrot.slane %v2654, 4
        %v2668 = vsel %vm258, %v2667, %v2648
        %v2669 = vrot.slane %v2648, 4
        %v2670 = vsel %vm258, %v2654, %v2669
        %v2672 = vunpack.c.l.s4 1934713408
        %v2673 = vunpack.c.0.s8 %v2672
        %v2674 = vperm.slane %v2668, %v2673
        %v2676 = vunpack.c.l.s4 1934713408
        %v2677 = vunpack.c.0.s8 %v2676
        %v2678 = vperm.slane %v2670, %v2677
        %v2679 = vrot.slane %v2674, 4
        %v2680 = vsel %vm258, %v2679, %v2662
        %v2681 = vrot.slane %v2662, 4
        %v2682 = vsel %vm258, %v2674, %v2681
        %v2683 = vrot.slane %v2678, 4
        %v2684 = vsel %vm258, %v2683, %v2666
        %v2685 = vrot.slane %v2666, 4
        %v2686 = vsel %vm258, %v2678, %v2685
        %v2687 = vrot.slane %v2614, 4
        %v2688 = vsel %vm258, %v2687, %v2586
        %v2690 = vunpack.c.l.s4 1983009808
        %v2691 = vunpack.c.0.s8 %v2690
        %v2692 = vperm.slane %v2688, %v2691
        %v2693 = vrot.slane %v2617, 4
        %v2694 = vsel %vm258, %v2693, %v2611
        %v2696 = vunpack.c.l.s4 1983009808
        %v2697 = vunpack.c.0.s8 %v2696
        %v2698 = vperm.slane %v2694, %v2697
        %v2699 = vrot.slane %v2626, 4
        %v2700 = vsel %vm258, %v2699, %v2620
        %v2702 = vunpack.c.l.s4 1983009808
        %v2703 = vunpack.c.0.s8 %v2702
        %v2704 = vperm.slane %v2700, %v2703
        %v2705 = vrot.slane %v2629, 4
        %v2706 = vsel %vm258, %v2705, %v2623
        %v2708 = vunpack.c.l.s4 1983009808
        %v2709 = vunpack.c.0.s8 %v2708
        %v2710 = vperm.slane %v2706, %v2709
        %v2711 = vrot.slane %v2698, 4
        %v2712 = vsel %vm258, %v2711, %v2692
        %v2713 = vrot.slane %v2692, 4
        %v2714 = vsel %vm258, %v2698, %v2713
        %v2716 = vunpack.c.l.s4 1934713408
        %v2717 = vunpack.c.0.s8 %v2716
        %v2718 = vperm.slane %v2712, %v2717
        %v2720 = vunpack.c.l.s4 1934713408
        %v2721 = vunpack.c.0.s8 %v2720
        %v2722 = vperm.slane %v2714, %v2721
        %v2723 = vrot.slane %v2710, 4
        %v2724 = vsel %vm258, %v2723, %v2704
        %v2725 = vrot.slane %v2704, 4
        %v2726 = vsel %vm258, %v2710, %v2725
        %v2728 = vunpack.c.l.s4 1934713408
        %v2729 = vunpack.c.0.s8 %v2728
        %v2730 = vperm.slane %v2724, %v2729
        %v2732 = vunpack.c.l.s4 1934713408
        %v2733 = vunpack.c.0.s8 %v2732
        %v2734 = vperm.slane %v2726, %v2733
        %v2735 = vrot.slane %v2730, 4
        %v2736 = vsel %vm258, %v2735, %v2718
        %v2737 = vrot.slane %v2718, 4
        %v2738 = vsel %vm258, %v2730, %v2737
        %v2739 = vrot.slane %v2734, 4
        %v2740 = vsel %vm258, %v2739, %v2722
        %v2741 = vrot.slane %v2722, 4
        %v2742 = vsel %vm258, %v2734, %v2741
        %v2747 = vrot.slane %v2680, 1
        %v2748 = vrot.slane %v2682, 1
        %v2749 = vrot.slane %v2684, 1
        %v2750 = vrot.slane %v2686, 1
        %v2759 = vrot.slane %v2680, 7
        %v2760 = vrot.slane %v2736, 7
        %v2761 = vsel %vm425, %v2759, %v2760
        %v2762 = vrot.slane %v2682, 7
        %v2763 = vrot.slane %v2738, 7
        %v2764 = vsel %vm425, %v2762, %v2763
        %v2765 = vrot.slane %v2684, 7
        %v2766 = vrot.slane %v2740, 7
        %v2767 = vsel %vm425, %v2765, %v2766
        %v2768 = vrot.slane %v2686, 7
        %v2769 = vrot.slane %v2742, 7
        %v2770 = vsel %vm425, %v2768, %v2769
        %v2779 = vrot.slane %v2736, 5
        %v2780 = vrot.slane %v2738, 5
        %v2781 = vrot.slane %v2740, 5
        %v2782 = vrot.slane %v2742, 5
        %v2787 = vsel %vm425, %v2747, %v2759
        %v2788 = vsel %vm425, %v2748, %v2762
        %v2789 = vsel %vm425, %v2749, %v2765
        %v2790 = vsel %vm425, %v2750, %v2768
        %v2791 = vsel %vm425, %v2760, %v2779
        %v2792 = vsel %vm425, %v2763, %v2780
        %v2793 = vsel %vm425, %v2766, %v2781
        %v2794 = vsel %vm425, %v2769, %v2782
        %2803 = vrot.lane.b32.xlu0 %v2787, 127
        %v2804 = vpop.permute.xlu0 %2803
        %2805 = vrot.lane.b32.xlu0 %v2761, 127
        %v2806 = vpop.permute.xlu0 %2805
        %2807 = vrot.lane.b32.xlu0 %v2791, 127
        %v2808 = vpop.permute.xlu0 %2807
        %2809 = vrot.lane.b32.xlu0 %v2788, 127
        %v2810 = vpop.permute.xlu0 %2809
        %2811 = vrot.lane.b32.xlu0 %v2764, 127
        %v2812 = vpop.permute.xlu0 %2811
        %2813 = vrot.lane.b32.xlu0 %v2792, 127
        %v2814 = vpop.permute.xlu0 %2813
        %2815 = vrot.lane.b32.xlu0 %v2789, 127
        %v2816 = vpop.permute.xlu0 %2815
        %2817 = vrot.lane.b32.xlu0 %v2767, 127
        %v2818 = vpop.permute.xlu0 %2817
        %2819 = vrot.lane.b32.xlu0 %v2793, 127
        %v2820 = vpop.permute.xlu0 %2819
        %2821 = vrot.lane.b32.xlu0 %v2790, 127
        %v2822 = vpop.permute.xlu0 %2821
        %2823 = vrot.lane.b32.xlu0 %v2770, 127
        %v2824 = vpop.permute.xlu0 %2823
        %2825 = vrot.lane.b32.xlu0 %v2794, 127
        %v2826 = vpop.permute.xlu0 %2825
        %2839 = vrot.lane.b32.xlu0 %v2787, 1
        %v2840 = vpop.permute.xlu0 %2839
        %2841 = vrot.lane.b32.xlu0 %v2761, 1
        %v2842 = vpop.permute.xlu0 %2841
        %2843 = vrot.lane.b32.xlu0 %v2791, 1
        %v2844 = vpop.permute.xlu0 %2843
        %2845 = vrot.lane.b32.xlu0 %v2788, 1
        %v2846 = vpop.permute.xlu0 %2845
        %2847 = vrot.lane.b32.xlu0 %v2764, 1
        %v2848 = vpop.permute.xlu0 %2847
        %2849 = vrot.lane.b32.xlu0 %v2792, 1
        %v2850 = vpop.permute.xlu0 %2849
        %2851 = vrot.lane.b32.xlu0 %v2789, 1
        %v2852 = vpop.permute.xlu0 %2851
        %2853 = vrot.lane.b32.xlu0 %v2767, 1
        %v2854 = vpop.permute.xlu0 %2853
        %2855 = vrot.lane.b32.xlu0 %v2793, 1
        %v2856 = vpop.permute.xlu0 %2855
        %2857 = vrot.lane.b32.xlu0 %v2790, 1
        %v2858 = vpop.permute.xlu0 %2857
        %2859 = vrot.lane.b32.xlu0 %v2770, 1
        %v2860 = vpop.permute.xlu0 %2859
        %2861 = vrot.lane.b32.xlu0 %v2794, 1
        %v2862 = vpop.permute.xlu0 %2861
        %2875 = vrot.lane.b32.xlu0 %v2787, 3
        %v2876 = vpop.permute.xlu0 %2875
        %2877 = vrot.lane.b32.xlu0 %v2761, 3
        %v2878 = vpop.permute.xlu0 %2877
        %2879 = vrot.lane.b32.xlu0 %v2791, 3
        %v2880 = vpop.permute.xlu0 %2879
        %2881 = vrot.lane.b32.xlu0 %v2788, 3
        %v2882 = vpop.permute.xlu0 %2881
        %2883 = vrot.lane.b32.xlu0 %v2764, 3
        %v2884 = vpop.permute.xlu0 %2883
        %2885 = vrot.lane.b32.xlu0 %v2792, 3
        %v2886 = vpop.permute.xlu0 %2885
        %2887 = vrot.lane.b32.xlu0 %v2789, 3
        %v2888 = vpop.permute.xlu0 %2887
        %2889 = vrot.lane.b32.xlu0 %v2767, 3
        %v2890 = vpop.permute.xlu0 %2889
        %2891 = vrot.lane.b32.xlu0 %v2793, 3
        %v2892 = vpop.permute.xlu0 %2891
        %2893 = vrot.lane.b32.xlu0 %v2790, 3
        %v2894 = vpop.permute.xlu0 %2893
        %2895 = vrot.lane.b32.xlu0 %v2770, 3
        %v2896 = vpop.permute.xlu0 %2895
        %2897 = vrot.lane.b32.xlu0 %v2794, 3
        %v2898 = vpop.permute.xlu0 %2897
        %v2911 = vsel %vm578, %v2804, %v2840
        %v2912 = vsel %vm578, %v2806, %v2842
        %v2913 = vsel %vm578, %v2808, %v2844
        %v2914 = vsel %vm578, %v2810, %v2846
        %v2915 = vsel %vm578, %v2812, %v2848
        %v2916 = vsel %vm578, %v2814, %v2850
        %v2917 = vsel %vm578, %v2816, %v2852
        %v2918 = vsel %vm578, %v2818, %v2854
        %v2919 = vsel %vm578, %v2820, %v2856
        %v2920 = vsel %vm578, %v2822, %v2858
        %v2921 = vsel %vm578, %v2824, %v2860
        %v2922 = vsel %vm578, %v2826, %v2862
        %v2923 = vsel %vm591, %v2911, %v2876
        %v2924 = vsel %vm591, %v2912, %v2878
        %v2925 = vsel %vm591, %v2913, %v2880
        %v2926 = vsel %vm591, %v2914, %v2882
        %v2927 = vsel %vm591, %v2915, %v2884
        %v2928 = vsel %vm591, %v2916, %v2886
        %v2929 = vsel %vm591, %v2917, %v2888
        %v2930 = vsel %vm591, %v2918, %v2890
        %v2931 = vsel %vm591, %v2919, %v2892
        %v2932 = vsel %vm591, %v2920, %v2894
        %v2933 = vsel %vm591, %v2921, %v2896
        %v2934 = vsel %vm591, %v2922, %v2898
        %v2935 = vrot.slane %v2929, 4
        %v2936 = vsel %vm258, %v2935, %v2923
        %v2937 = vrot.slane %v2923, 4
        %v2938 = vsel %vm258, %v2929, %v2937
        %v2940 = vunpack.c.l.s4 1983009808
        %v2941 = vunpack.c.0.s8 %v2940
        %v2942 = vperm.slane %v2936, %v2941
        %v2944 = vunpack.c.l.s4 1983009808
        %v2945 = vunpack.c.0.s8 %v2944
        %v2946 = vperm.slane %v2938, %v2945
        %v2947 = vrot.slane %v2932, 4
        %v2948 = vsel %vm258, %v2947, %v2926
        %v2949 = vrot.slane %v2926, 4
        %v2950 = vsel %vm258, %v2932, %v2949
        %v2952 = vunpack.c.l.s4 1983009808
        %v2953 = vunpack.c.0.s8 %v2952
        %v2954 = vperm.slane %v2948, %v2953
        %v2956 = vunpack.c.l.s4 1983009808
        %v2957 = vunpack.c.0.s8 %v2956
        %v2958 = vperm.slane %v2950, %v2957
        %v2959 = vrot.slane %v2954, 4
        %v2960 = vsel %vm258, %v2959, %v2942
        %v2961 = vrot.slane %v2942, 4
        %v2962 = vsel %vm258, %v2954, %v2961
        %v2964 = vunpack.c.l.s4 1934713408
        %v2965 = vunpack.c.0.s8 %v2964
        %v2966 = vperm.slane %v2960, %v2965
        %v2968 = vunpack.c.l.s4 1934713408
        %v2969 = vunpack.c.0.s8 %v2968
        %v2970 = vperm.slane %v2962, %v2969
        %v2971 = vrot.slane %v2958, 4
        %v2972 = vsel %vm258, %v2971, %v2946
        %v2973 = vrot.slane %v2946, 4
        %v2974 = vsel %vm258, %v2958, %v2973
        %v2976 = vunpack.c.l.s4 1934713408
        %v2977 = vunpack.c.0.s8 %v2976
        %v2978 = vperm.slane %v2972, %v2977
        %v2980 = vunpack.c.l.s4 1934713408
        %v2981 = vunpack.c.0.s8 %v2980
        %v2982 = vperm.slane %v2974, %v2981
        %v2983 = vrot.slane %v2966, 4
        %v2984 = vsel %vm258, 0.0, %v2983
        %v2985 = vrot.slane %v2970, 4
        %v2986 = vsel %vm258, 0.0, %v2985
        %v2987 = vrot.slane %v2978, 4
        %v2988 = vsel %vm258, 0.0, %v2987
        %v2989 = vrot.slane %v2982, 4
        %v2990 = vsel %vm258, 0.0, %v2989
        %v2991 = vrot.slane %v2930, 4
        %v2992 = vsel %vm258, %v2991, %v2924
        %v2993 = vrot.slane %v2924, 4
        %v2994 = vsel %vm258, %v2930, %v2993
        %v2996 = vunpack.c.l.s4 1983009808
        %v2997 = vunpack.c.0.s8 %v2996
        %v2998 = vperm.slane %v2992, %v2997
        %v3000 = vunpack.c.l.s4 1983009808
        %v3001 = vunpack.c.0.s8 %v3000
        %v3002 = vperm.slane %v2994, %v3001
        %v3003 = vrot.slane %v2933, 4
        %v3004 = vsel %vm258, %v3003, %v2927
        %v3005 = vrot.slane %v2927, 4
        %v3006 = vsel %vm258, %v2933, %v3005
        %v3008 = vunpack.c.l.s4 1983009808
        %v3009 = vunpack.c.0.s8 %v3008
        %v3010 = vperm.slane %v3004, %v3009
        %v3012 = vunpack.c.l.s4 1983009808
        %v3013 = vunpack.c.0.s8 %v3012
        %v3014 = vperm.slane %v3006, %v3013
        %v3015 = vrot.slane %v3010, 4
        %v3016 = vsel %vm258, %v3015, %v2998
        %v3017 = vrot.slane %v2998, 4
        %v3018 = vsel %vm258, %v3010, %v3017
        %v3020 = vunpack.c.l.s4 1934713408
        %v3021 = vunpack.c.0.s8 %v3020
        %v3022 = vperm.slane %v3016, %v3021
        %v3024 = vunpack.c.l.s4 1934713408
        %v3025 = vunpack.c.0.s8 %v3024
        %v3026 = vperm.slane %v3018, %v3025
        %v3027 = vrot.slane %v3014, 4
        %v3028 = vsel %vm258, %v3027, %v3002
        %v3029 = vrot.slane %v3002, 4
        %v3030 = vsel %vm258, %v3014, %v3029
        %v3032 = vunpack.c.l.s4 1934713408
        %v3033 = vunpack.c.0.s8 %v3032
        %v3034 = vperm.slane %v3028, %v3033
        %v3036 = vunpack.c.l.s4 1934713408
        %v3037 = vunpack.c.0.s8 %v3036
        %v3038 = vperm.slane %v3030, %v3037
        %v3039 = vrot.slane %v3022, 4
        %v3040 = vsel %vm258, 0.0, %v3039
        %v3041 = vrot.slane %v3026, 4
        %v3042 = vsel %vm258, 0.0, %v3041
        %v3043 = vrot.slane %v3034, 4
        %v3044 = vsel %vm258, 0.0, %v3043
        %v3045 = vrot.slane %v3038, 4
        %v3046 = vsel %vm258, 0.0, %v3045
        %3048 = vrot.lane.b32.xlu0 %v2984, 16
        %v3049 = vpop.permute.xlu0 %3048
        %3052 = vrot.lane.b32.xlu0 %v2970, 32
        %v3053 = vpop.permute.xlu0 %3052
        %3056 = vrot.lane.b32.xlu0 %v2986, 48
        %v3057 = vpop.permute.xlu0 %3056
        %3060 = vrot.lane.b32.xlu0 %v2978, 64
        %v3061 = vpop.permute.xlu0 %3060
        %3064 = vrot.lane.b32.xlu0 %v2988, 80
        %v3065 = vpop.permute.xlu0 %3064
        %3068 = vrot.lane.b32.xlu0 %v2982, 96
        %v3069 = vpop.permute.xlu0 %3068
        %3072 = vrot.lane.b32.xlu0 %v2990, 112
        %v3073 = vpop.permute.xlu0 %3072
        %3076 = vrot.lane.b32.xlu0 %v3040, 16
        %v3077 = vpop.permute.xlu0 %3076
        %3080 = vrot.lane.b32.xlu0 %v3026, 32
        %v3081 = vpop.permute.xlu0 %3080
        %3084 = vrot.lane.b32.xlu0 %v3042, 48
        %v3085 = vpop.permute.xlu0 %3084
        %3088 = vrot.lane.b32.xlu0 %v3034, 64
        %v3089 = vpop.permute.xlu0 %3088
        %3092 = vrot.lane.b32.xlu0 %v3044, 80
        %v3093 = vpop.permute.xlu0 %3092
        %3096 = vrot.lane.b32.xlu0 %v3038, 96
        %v3097 = vpop.permute.xlu0 %3096
        %3100 = vrot.lane.b32.xlu0 %v3046, 112
        %v3101 = vpop.permute.xlu0 %3100
        %v3103 = vsel %vm772, %v2966, %v3049
        %v3104 = vsel %vm774, %v3103, %v3053
        %v3105 = vsel %vm776, %v3104, %v3057
        %v3106 = vsel %vm778, %v3105, %v3061
        %v3107 = vsel %vm780, %v3106, %v3065
        %v3108 = vsel %vm782, %v3107, %v3069
        %v3109 = vsel %vm784, %v3108, %v3073
        %v3110 = vsel %vm772, %v3022, %v3077
        %v3111 = vsel %vm774, %v3110, %v3081
        %v3112 = vsel %vm776, %v3111, %v3085
        %v3113 = vsel %vm778, %v3112, %v3089
        %v3114 = vsel %vm780, %v3113, %v3093
        %v3115 = vsel %vm782, %v3114, %v3097
        %v3116 = vsel %vm784, %v3115, %v3101
        %3125 = vrot.lane.b32.xlu0 %v2923, 127
        %v3126 = vpop.permute.xlu0 %3125
        %3127 = vrot.lane.b32.xlu0 %v2924, 127
        %v3128 = vpop.permute.xlu0 %3127
        %3129 = vrot.lane.b32.xlu0 %v2926, 127
        %v3130 = vpop.permute.xlu0 %3129
        %3131 = vrot.lane.b32.xlu0 %v2927, 127
        %v3132 = vpop.permute.xlu0 %3131
        %3133 = vrot.lane.b32.xlu0 %v2929, 127
        %v3134 = vpop.permute.xlu0 %3133
        %3135 = vrot.lane.b32.xlu0 %v2930, 127
        %v3136 = vpop.permute.xlu0 %3135
        %3137 = vrot.lane.b32.xlu0 %v2932, 127
        %v3138 = vpop.permute.xlu0 %3137
        %3139 = vrot.lane.b32.xlu0 %v2933, 127
        %v3140 = vpop.permute.xlu0 %3139
        %v3149 = vrot.slane %v3134, 4
        %v3150 = vsel %vm258, %v3149, %v3126
        %v3151 = vrot.slane %v3126, 4
        %v3152 = vsel %vm258, %v3134, %v3151
        %v3154 = vunpack.c.l.s4 1983009808
        %v3155 = vunpack.c.0.s8 %v3154
        %v3156 = vperm.slane %v3150, %v3155
        %v3158 = vunpack.c.l.s4 1983009808
        %v3159 = vunpack.c.0.s8 %v3158
        %v3160 = vperm.slane %v3152, %v3159
        %v3161 = vrot.slane %v3138, 4
        %v3162 = vsel %vm258, %v3161, %v3130
        %v3163 = vrot.slane %v3130, 4
        %v3164 = vsel %vm258, %v3138, %v3163
        %v3166 = vunpack.c.l.s4 1983009808
        %v3167 = vunpack.c.0.s8 %v3166
        %v3168 = vperm.slane %v3162, %v3167
        %v3170 = vunpack.c.l.s4 1983009808
        %v3171 = vunpack.c.0.s8 %v3170
        %v3172 = vperm.slane %v3164, %v3171
        %v3173 = vrot.slane %v3168, 4
        %v3174 = vsel %vm258, %v3173, %v3156
        %v3175 = vrot.slane %v3156, 4
        %v3176 = vsel %vm258, %v3168, %v3175
        %v3178 = vunpack.c.l.s4 1934713408
        %v3179 = vunpack.c.0.s8 %v3178
        %v3180 = vperm.slane %v3174, %v3179
        %v3182 = vunpack.c.l.s4 1934713408
        %v3183 = vunpack.c.0.s8 %v3182
        %v3184 = vperm.slane %v3176, %v3183
        %v3185 = vrot.slane %v3172, 4
        %v3186 = vsel %vm258, %v3185, %v3160
        %v3187 = vrot.slane %v3160, 4
        %v3188 = vsel %vm258, %v3172, %v3187
        %v3190 = vunpack.c.l.s4 1934713408
        %v3191 = vunpack.c.0.s8 %v3190
        %v3192 = vperm.slane %v3186, %v3191
        %v3194 = vunpack.c.l.s4 1934713408
        %v3195 = vunpack.c.0.s8 %v3194
        %v3196 = vperm.slane %v3188, %v3195
        %v3197 = vrot.slane %v3180, 4
        %v3198 = vsel %vm258, 0.0, %v3197
        %v3199 = vrot.slane %v3184, 4
        %v3200 = vsel %vm258, 0.0, %v3199
        %v3201 = vrot.slane %v3192, 4
        %v3202 = vsel %vm258, 0.0, %v3201
        %v3203 = vrot.slane %v3196, 4
        %v3204 = vsel %vm258, 0.0, %v3203
        %v3205 = vrot.slane %v3136, 4
        %v3206 = vsel %vm258, %v3205, %v3128
        %v3207 = vrot.slane %v3128, 4
        %v3208 = vsel %vm258, %v3136, %v3207
        %v3210 = vunpack.c.l.s4 1983009808
        %v3211 = vunpack.c.0.s8 %v3210
        %v3212 = vperm.slane %v3206, %v3211
        %v3214 = vunpack.c.l.s4 1983009808
        %v3215 = vunpack.c.0.s8 %v3214
        %v3216 = vperm.slane %v3208, %v3215
        %v3217 = vrot.slane %v3140, 4
        %v3218 = vsel %vm258, %v3217, %v3132
        %v3219 = vrot.slane %v3132, 4
        %v3220 = vsel %vm258, %v3140, %v3219
        %v3222 = vunpack.c.l.s4 1983009808
        %v3223 = vunpack.c.0.s8 %v3222
        %v3224 = vperm.slane %v3218, %v3223
        %v3226 = vunpack.c.l.s4 1983009808
        %v3227 = vunpack.c.0.s8 %v3226
        %v3228 = vperm.slane %v3220, %v3227
        %v3229 = vrot.slane %v3224, 4
        %v3230 = vsel %vm258, %v3229, %v3212
        %v3231 = vrot.slane %v3212, 4
        %v3232 = vsel %vm258, %v3224, %v3231
        %v3234 = vunpack.c.l.s4 1934713408
        %v3235 = vunpack.c.0.s8 %v3234
        %v3236 = vperm.slane %v3230, %v3235
        %v3238 = vunpack.c.l.s4 1934713408
        %v3239 = vunpack.c.0.s8 %v3238
        %v3240 = vperm.slane %v3232, %v3239
        %v3241 = vrot.slane %v3228, 4
        %v3242 = vsel %vm258, %v3241, %v3216
        %v3243 = vrot.slane %v3216, 4
        %v3244 = vsel %vm258, %v3228, %v3243
        %v3246 = vunpack.c.l.s4 1934713408
        %v3247 = vunpack.c.0.s8 %v3246
        %v3248 = vperm.slane %v3242, %v3247
        %v3250 = vunpack.c.l.s4 1934713408
        %v3251 = vunpack.c.0.s8 %v3250
        %v3252 = vperm.slane %v3244, %v3251
        %v3253 = vrot.slane %v3236, 4
        %v3254 = vsel %vm258, 0.0, %v3253
        %v3255 = vrot.slane %v3240, 4
        %v3256 = vsel %vm258, 0.0, %v3255
        %v3257 = vrot.slane %v3248, 4
        %v3258 = vsel %vm258, 0.0, %v3257
        %v3259 = vrot.slane %v3252, 4
        %v3260 = vsel %vm258, 0.0, %v3259
        %3262 = vrot.lane.b32.xlu0 %v3198, 16
        %v3263 = vpop.permute.xlu0 %3262
        %3266 = vrot.lane.b32.xlu0 %v3184, 32
        %v3267 = vpop.permute.xlu0 %3266
        %3270 = vrot.lane.b32.xlu0 %v3200, 48
        %v3271 = vpop.permute.xlu0 %3270
        %3274 = vrot.lane.b32.xlu0 %v3192, 64
        %v3275 = vpop.permute.xlu0 %3274
        %3278 = vrot.lane.b32.xlu0 %v3202, 80
        %v3279 = vpop.permute.xlu0 %3278
        %3282 = vrot.lane.b32.xlu0 %v3196, 96
        %v3283 = vpop.permute.xlu0 %3282
        %3286 = vrot.lane.b32.xlu0 %v3204, 112
        %v3287 = vpop.permute.xlu0 %3286
        %3290 = vrot.lane.b32.xlu0 %v3254, 16
        %v3291 = vpop.permute.xlu0 %3290
        %3294 = vrot.lane.b32.xlu0 %v3240, 32
        %v3295 = vpop.permute.xlu0 %3294
        %3298 = vrot.lane.b32.xlu0 %v3256, 48
        %v3299 = vpop.permute.xlu0 %3298
        %3302 = vrot.lane.b32.xlu0 %v3248, 64
        %v3303 = vpop.permute.xlu0 %3302
        %3306 = vrot.lane.b32.xlu0 %v3258, 80
        %v3307 = vpop.permute.xlu0 %3306
        %3310 = vrot.lane.b32.xlu0 %v3252, 96
        %v3311 = vpop.permute.xlu0 %3310
        %3314 = vrot.lane.b32.xlu0 %v3260, 112
        %v3315 = vpop.permute.xlu0 %3314
        %v3317 = vsel %vm772, %v3180, %v3263
        %v3318 = vsel %vm774, %v3317, %v3267
        %v3319 = vsel %vm776, %v3318, %v3271
        %v3320 = vsel %vm778, %v3319, %v3275
        %v3321 = vsel %vm780, %v3320, %v3279
        %v3322 = vsel %vm782, %v3321, %v3283
        %v3323 = vsel %vm784, %v3322, %v3287
        %v3324 = vsel %vm772, %v3236, %v3291
        %v3325 = vsel %vm774, %v3324, %v3295
        %v3326 = vsel %vm776, %v3325, %v3299
        %v3327 = vsel %vm778, %v3326, %v3303
        %v3328 = vsel %vm780, %v3327, %v3307
        %v3329 = vsel %vm782, %v3328, %v3311
        %v3330 = vsel %vm784, %v3329, %v3315
        %3331 = vrot.lane.b32.xlu0 %v2923, 126
        %v3332 = vpop.permute.xlu0 %3331
        %3333 = vrot.lane.b32.xlu0 %v2924, 126
        %v3334 = vpop.permute.xlu0 %3333
        %3335 = vrot.lane.b32.xlu0 %v2926, 126
        %v3336 = vpop.permute.xlu0 %3335
        %3337 = vrot.lane.b32.xlu0 %v2927, 126
        %v3338 = vpop.permute.xlu0 %3337
        %3339 = vrot.lane.b32.xlu0 %v2929, 126
        %v3340 = vpop.permute.xlu0 %3339
        %3341 = vrot.lane.b32.xlu0 %v2930, 126
        %v3342 = vpop.permute.xlu0 %3341
        %3343 = vrot.lane.b32.xlu0 %v2932, 126
        %v3344 = vpop.permute.xlu0 %3343
        %3345 = vrot.lane.b32.xlu0 %v2933, 126
        %v3346 = vpop.permute.xlu0 %3345
        %v3355 = vrot.slane %v3340, 4
        %v3356 = vsel %vm258, %v3355, %v3332
        %v3357 = vrot.slane %v3332, 4
        %v3358 = vsel %vm258, %v3340, %v3357
        %v3360 = vunpack.c.l.s4 1983009808
        %v3361 = vunpack.c.0.s8 %v3360
        %v3362 = vperm.slane %v3356, %v3361
        %v3364 = vunpack.c.l.s4 1983009808
        %v3365 = vunpack.c.0.s8 %v3364
        %v3366 = vperm.slane %v3358, %v3365
        %v3367 = vrot.slane %v3344, 4
        %v3368 = vsel %vm258, %v3367, %v3336
        %v3369 = vrot.slane %v3336, 4
        %v3370 = vsel %vm258, %v3344, %v3369
        %v3372 = vunpack.c.l.s4 1983009808
        %v3373 = vunpack.c.0.s8 %v3372
        %v3374 = vperm.slane %v3368, %v3373
        %v3376 = vunpack.c.l.s4 1983009808
        %v3377 = vunpack.c.0.s8 %v3376
        %v3378 = vperm.slane %v3370, %v3377
        %v3379 = vrot.slane %v3374, 4
        %v3380 = vsel %vm258, %v3379, %v3362
        %v3381 = vrot.slane %v3362, 4
        %v3382 = vsel %vm258, %v3374, %v3381
        %v3384 = vunpack.c.l.s4 1934713408
        %v3385 = vunpack.c.0.s8 %v3384
        %v3386 = vperm.slane %v3380, %v3385
        %v3388 = vunpack.c.l.s4 1934713408
        %v3389 = vunpack.c.0.s8 %v3388
        %v3390 = vperm.slane %v3382, %v3389
        %v3391 = vrot.slane %v3378, 4
        %v3392 = vsel %vm258, %v3391, %v3366
        %v3393 = vrot.slane %v3366, 4
        %v3394 = vsel %vm258, %v3378, %v3393
        %v3396 = vunpack.c.l.s4 1934713408
        %v3397 = vunpack.c.0.s8 %v3396
        %v3398 = vperm.slane %v3392, %v3397
        %v3400 = vunpack.c.l.s4 1934713408
        %v3401 = vunpack.c.0.s8 %v3400
        %v3402 = vperm.slane %v3394, %v3401
        %v3403 = vrot.slane %v3386, 4
        %v3404 = vsel %vm258, 0.0, %v3403
        %v3405 = vrot.slane %v3390, 4
        %v3406 = vsel %vm258, 0.0, %v3405
        %v3407 = vrot.slane %v3398, 4
        %v3408 = vsel %vm258, 0.0, %v3407
        %v3409 = vrot.slane %v3402, 4
        %v3410 = vsel %vm258, 0.0, %v3409
        %v3411 = vrot.slane %v3342, 4
        %v3412 = vsel %vm258, %v3411, %v3334
        %v3413 = vrot.slane %v3334, 4
        %v3414 = vsel %vm258, %v3342, %v3413
        %v3416 = vunpack.c.l.s4 1983009808
        %v3417 = vunpack.c.0.s8 %v3416
        %v3418 = vperm.slane %v3412, %v3417
        %v3420 = vunpack.c.l.s4 1983009808
        %v3421 = vunpack.c.0.s8 %v3420
        %v3422 = vperm.slane %v3414, %v3421
        %v3423 = vrot.slane %v3346, 4
        %v3424 = vsel %vm258, %v3423, %v3338
        %v3425 = vrot.slane %v3338, 4
        %v3426 = vsel %vm258, %v3346, %v3425
        %v3428 = vunpack.c.l.s4 1983009808
        %v3429 = vunpack.c.0.s8 %v3428
        %v3430 = vperm.slane %v3424, %v3429
        %v3432 = vunpack.c.l.s4 1983009808
        %v3433 = vunpack.c.0.s8 %v3432
        %v3434 = vperm.slane %v3426, %v3433
        %v3435 = vrot.slane %v3430, 4
        %v3436 = vsel %vm258, %v3435, %v3418
        %v3437 = vrot.slane %v3418, 4
        %v3438 = vsel %vm258, %v3430, %v3437
        %v3440 = vunpack.c.l.s4 1934713408
        %v3441 = vunpack.c.0.s8 %v3440
        %v3442 = vperm.slane %v3436, %v3441
        %v3444 = vunpack.c.l.s4 1934713408
        %v3445 = vunpack.c.0.s8 %v3444
        %v3446 = vperm.slane %v3438, %v3445
        %v3447 = vrot.slane %v3434, 4
        %v3448 = vsel %vm258, %v3447, %v3422
        %v3449 = vrot.slane %v3422, 4
        %v3450 = vsel %vm258, %v3434, %v3449
        %v3452 = vunpack.c.l.s4 1934713408
        %v3453 = vunpack.c.0.s8 %v3452
        %v3454 = vperm.slane %v3448, %v3453
        %v3456 = vunpack.c.l.s4 1934713408
        %v3457 = vunpack.c.0.s8 %v3456
        %v3458 = vperm.slane %v3450, %v3457
        %v3459 = vrot.slane %v3442, 4
        %v3460 = vsel %vm258, 0.0, %v3459
        %v3461 = vrot.slane %v3446, 4
        %v3462 = vsel %vm258, 0.0, %v3461
        %v3463 = vrot.slane %v3454, 4
        %v3464 = vsel %vm258, 0.0, %v3463
        %v3465 = vrot.slane %v3458, 4
        %v3466 = vsel %vm258, 0.0, %v3465
        %3468 = vrot.lane.b32.xlu0 %v3404, 16
        %v3469 = vpop.permute.xlu0 %3468
        %3472 = vrot.lane.b32.xlu0 %v3390, 32
        %v3473 = vpop.permute.xlu0 %3472
        %3476 = vrot.lane.b32.xlu0 %v3406, 48
        %v3477 = vpop.permute.xlu0 %3476
        %3480 = vrot.lane.b32.xlu0 %v3398, 64
        %v3481 = vpop.permute.xlu0 %3480
        %3484 = vrot.lane.b32.xlu0 %v3408, 80
        %v3485 = vpop.permute.xlu0 %3484
        %3488 = vrot.lane.b32.xlu0 %v3402, 96
        %v3489 = vpop.permute.xlu0 %3488
        %3492 = vrot.lane.b32.xlu0 %v3410, 112
        %v3493 = vpop.permute.xlu0 %3492
        %3496 = vrot.lane.b32.xlu0 %v3460, 16
        %v3497 = vpop.permute.xlu0 %3496
        %3500 = vrot.lane.b32.xlu0 %v3446, 32
        %v3501 = vpop.permute.xlu0 %3500
        %3504 = vrot.lane.b32.xlu0 %v3462, 48
        %v3505 = vpop.permute.xlu0 %3504
        %3508 = vrot.lane.b32.xlu0 %v3454, 64
        %v3509 = vpop.permute.xlu0 %3508
        %3512 = vrot.lane.b32.xlu0 %v3464, 80
        %v3513 = vpop.permute.xlu0 %3512
        %3516 = vrot.lane.b32.xlu0 %v3458, 96
        %v3517 = vpop.permute.xlu0 %3516
        %3520 = vrot.lane.b32.xlu0 %v3466, 112
        %v3521 = vpop.permute.xlu0 %3520
        %v3523 = vsel %vm772, %v3386, %v3469
        %v3524 = vsel %vm774, %v3523, %v3473
        %v3525 = vsel %vm776, %v3524, %v3477
        %v3526 = vsel %vm778, %v3525, %v3481
        %v3527 = vsel %vm780, %v3526, %v3485
        %v3528 = vsel %vm782, %v3527, %v3489
        %v3529 = vsel %vm784, %v3528, %v3493
        %v3530 = vsel %vm772, %v3442, %v3497
        %v3531 = vsel %vm774, %v3530, %v3501
        %v3532 = vsel %vm776, %v3531, %v3505
        %v3533 = vsel %vm778, %v3532, %v3509
        %v3534 = vsel %vm780, %v3533, %v3513
        %v3535 = vsel %vm782, %v3534, %v3517
        %v3536 = vsel %vm784, %v3535, %v3521
        %v3541 = vrot.slane %v2923, 1
        %v3542 = vrot.slane %v2924, 1
        %v3543 = vsel %vm1217, %v3541, %v3542
        %v3544 = vrot.slane %v2925, 1
        %v3545 = vsel %vm1217, %v3542, %v3544
        %v3546 = vrot.slane %v2926, 1
        %v3547 = vrot.slane %v2927, 1
        %v3548 = vsel %vm1217, %v3546, %v3547
        %v3549 = vrot.slane %v2928, 1
        %v3550 = vsel %vm1217, %v3547, %v3549
        %v3551 = vrot.slane %v2929, 1
        %v3552 = vrot.slane %v2930, 1
        %v3553 = vsel %vm1217, %v3551, %v3552
        %v3554 = vrot.slane %v2931, 1
        %v3555 = vsel %vm1217, %v3552, %v3554
        %v3556 = vrot.slane %v2932, 1
        %v3557 = vrot.slane %v2933, 1
        %v3558 = vsel %vm1217, %v3556, %v3557
        %v3559 = vrot.slane %v2934, 1
        %v3560 = vsel %vm1217, %v3557, %v3559
        %v3569 = vrot.slane %v3553, 4
        %v3570 = vsel %vm258, %v3569, %v3543
        %v3571 = vrot.slane %v3543, 4
        %v3572 = vsel %vm258, %v3553, %v3571
        %v3574 = vunpack.c.l.s4 1983009808
        %v3575 = vunpack.c.0.s8 %v3574
        %v3576 = vperm.slane %v3570, %v3575
        %v3578 = vunpack.c.l.s4 1983009808
        %v3579 = vunpack.c.0.s8 %v3578
        %v3580 = vperm.slane %v3572, %v3579
        %v3581 = vrot.slane %v3558, 4
        %v3582 = vsel %vm258, %v3581, %v3548
        %v3583 = vrot.slane %v3548, 4
        %v3584 = vsel %vm258, %v3558, %v3583
        %v3586 = vunpack.c.l.s4 1983009808
        %v3587 = vunpack.c.0.s8 %v3586
        %v3588 = vperm.slane %v3582, %v3587
        %v3590 = vunpack.c.l.s4 1983009808
        %v3591 = vunpack.c.0.s8 %v3590
        %v3592 = vperm.slane %v3584, %v3591
        %v3593 = vrot.slane %v3588, 4
        %v3594 = vsel %vm258, %v3593, %v3576
        %v3595 = vrot.slane %v3576, 4
        %v3596 = vsel %vm258, %v3588, %v3595
        %v3598 = vunpack.c.l.s4 1934713408
        %v3599 = vunpack.c.0.s8 %v3598
        %v3600 = vperm.slane %v3594, %v3599
        %v3602 = vunpack.c.l.s4 1934713408
        %v3603 = vunpack.c.0.s8 %v3602
        %v3604 = vperm.slane %v3596, %v3603
        %v3605 = vrot.slane %v3592, 4
        %v3606 = vsel %vm258, %v3605, %v3580
        %v3607 = vrot.slane %v3580, 4
        %v3608 = vsel %vm258, %v3592, %v3607
        %v3610 = vunpack.c.l.s4 1934713408
        %v3611 = vunpack.c.0.s8 %v3610
        %v3612 = vperm.slane %v3606, %v3611
        %v3614 = vunpack.c.l.s4 1934713408
        %v3615 = vunpack.c.0.s8 %v3614
        %v3616 = vperm.slane %v3608, %v3615
        %v3617 = vrot.slane %v3600, 4
        %v3618 = vsel %vm258, 0.0, %v3617
        %v3619 = vrot.slane %v3604, 4
        %v3620 = vsel %vm258, 0.0, %v3619
        %v3621 = vrot.slane %v3612, 4
        %v3622 = vsel %vm258, 0.0, %v3621
        %v3623 = vrot.slane %v3616, 4
        %v3624 = vsel %vm258, 0.0, %v3623
        %v3625 = vrot.slane %v3555, 4
        %v3626 = vsel %vm258, %v3625, %v3545
        %v3627 = vrot.slane %v3545, 4
        %v3628 = vsel %vm258, %v3555, %v3627
        %v3630 = vunpack.c.l.s4 1983009808
        %v3631 = vunpack.c.0.s8 %v3630
        %v3632 = vperm.slane %v3626, %v3631
        %v3634 = vunpack.c.l.s4 1983009808
        %v3635 = vunpack.c.0.s8 %v3634
        %v3636 = vperm.slane %v3628, %v3635
        %v3637 = vrot.slane %v3560, 4
        %v3638 = vsel %vm258, %v3637, %v3550
        %v3639 = vrot.slane %v3550, 4
        %v3640 = vsel %vm258, %v3560, %v3639
        %v3642 = vunpack.c.l.s4 1983009808
        %v3643 = vunpack.c.0.s8 %v3642
        %v3644 = vperm.slane %v3638, %v3643
        %v3646 = vunpack.c.l.s4 1983009808
        %v3647 = vunpack.c.0.s8 %v3646
        %v3648 = vperm.slane %v3640, %v3647
        %v3649 = vrot.slane %v3644, 4
        %v3650 = vsel %vm258, %v3649, %v3632
        %v3651 = vrot.slane %v3632, 4
        %v3652 = vsel %vm258, %v3644, %v3651
        %v3654 = vunpack.c.l.s4 1934713408
        %v3655 = vunpack.c.0.s8 %v3654
        %v3656 = vperm.slane %v3650, %v3655
        %v3658 = vunpack.c.l.s4 1934713408
        %v3659 = vunpack.c.0.s8 %v3658
        %v3660 = vperm.slane %v3652, %v3659
        %v3661 = vrot.slane %v3648, 4
        %v3662 = vsel %vm258, %v3661, %v3636
        %v3663 = vrot.slane %v3636, 4
        %v3664 = vsel %vm258, %v3648, %v3663
        %v3666 = vunpack.c.l.s4 1934713408
        %v3667 = vunpack.c.0.s8 %v3666
        %v3668 = vperm.slane %v3662, %v3667
        %v3670 = vunpack.c.l.s4 1934713408
        %v3671 = vunpack.c.0.s8 %v3670
        %v3672 = vperm.slane %v3664, %v3671
        %v3673 = vrot.slane %v3656, 4
        %v3674 = vsel %vm258, 0.0, %v3673
        %v3675 = vrot.slane %v3660, 4
        %v3676 = vsel %vm258, 0.0, %v3675
        %v3677 = vrot.slane %v3668, 4
        %v3678 = vsel %vm258, 0.0, %v3677
        %v3679 = vrot.slane %v3672, 4
        %v3680 = vsel %vm258, 0.0, %v3679
        %3682 = vrot.lane.b32.xlu0 %v3618, 16
        %v3683 = vpop.permute.xlu0 %3682
        %3686 = vrot.lane.b32.xlu0 %v3604, 32
        %v3687 = vpop.permute.xlu0 %3686
        %3690 = vrot.lane.b32.xlu0 %v3620, 48
        %v3691 = vpop.permute.xlu0 %3690
        %3694 = vrot.lane.b32.xlu0 %v3612, 64
        %v3695 = vpop.permute.xlu0 %3694
        %3698 = vrot.lane.b32.xlu0 %v3622, 80
        %v3699 = vpop.permute.xlu0 %3698
        %3702 = vrot.lane.b32.xlu0 %v3616, 96
        %v3703 = vpop.permute.xlu0 %3702
        %3706 = vrot.lane.b32.xlu0 %v3624, 112
        %v3707 = vpop.permute.xlu0 %3706
        %3710 = vrot.lane.b32.xlu0 %v3674, 16
        %v3711 = vpop.permute.xlu0 %3710
        %3714 = vrot.lane.b32.xlu0 %v3660, 32
        %v3715 = vpop.permute.xlu0 %3714
        %3718 = vrot.lane.b32.xlu0 %v3676, 48
        %v3719 = vpop.permute.xlu0 %3718
        %3722 = vrot.lane.b32.xlu0 %v3668, 64
        %v3723 = vpop.permute.xlu0 %3722
        %3726 = vrot.lane.b32.xlu0 %v3678, 80
        %v3727 = vpop.permute.xlu0 %3726
        %3730 = vrot.lane.b32.xlu0 %v3672, 96
        %v3731 = vpop.permute.xlu0 %3730
        %3734 = vrot.lane.b32.xlu0 %v3680, 112
        %v3735 = vpop.permute.xlu0 %3734
        %v3737 = vsel %vm772, %v3600, %v3683
        %v3738 = vsel %vm774, %v3737, %v3687
        %v3739 = vsel %vm776, %v3738, %v3691
        %v3740 = vsel %vm778, %v3739, %v3695
        %v3741 = vsel %vm780, %v3740, %v3699
        %v3742 = vsel %vm782, %v3741, %v3703
        %v3743 = vsel %vm784, %v3742, %v3707
        %v3744 = vsel %vm772, %v3656, %v3711
        %v3745 = vsel %vm774, %v3744, %v3715
        %v3746 = vsel %vm776, %v3745, %v3719
        %v3747 = vsel %vm778, %v3746, %v3723
        %v3748 = vsel %vm780, %v3747, %v3727
        %v3749 = vsel %vm782, %v3748, %v3731
        %v3750 = vsel %vm784, %v3749, %v3735
        %3751 = vrot.lane.b32.xlu0 %v3543, 127
        %v3752 = vpop.permute.xlu0 %3751
        %3753 = vrot.lane.b32.xlu0 %v3545, 127
        %v3754 = vpop.permute.xlu0 %3753
        %3755 = vrot.lane.b32.xlu0 %v3548, 127
        %v3756 = vpop.permute.xlu0 %3755
        %3757 = vrot.lane.b32.xlu0 %v3550, 127
        %v3758 = vpop.permute.xlu0 %3757
        %3759 = vrot.lane.b32.xlu0 %v3553, 127
        %v3760 = vpop.permute.xlu0 %3759
        %3761 = vrot.lane.b32.xlu0 %v3555, 127
        %v3762 = vpop.permute.xlu0 %3761
        %3763 = vrot.lane.b32.xlu0 %v3558, 127
        %v3764 = vpop.permute.xlu0 %3763
        %3765 = vrot.lane.b32.xlu0 %v3560, 127
        %v3766 = vpop.permute.xlu0 %3765
        %v3775 = vrot.slane %v3760, 4
        %v3776 = vsel %vm258, %v3775, %v3752
        %v3777 = vrot.slane %v3752, 4
        %v3778 = vsel %vm258, %v3760, %v3777
        %v3780 = vunpack.c.l.s4 1983009808
        %v3781 = vunpack.c.0.s8 %v3780
        %v3782 = vperm.slane %v3776, %v3781
        %v3784 = vunpack.c.l.s4 1983009808
        %v3785 = vunpack.c.0.s8 %v3784
        %v3786 = vperm.slane %v3778, %v3785
        %v3787 = vrot.slane %v3764, 4
        %v3788 = vsel %vm258, %v3787, %v3756
        %v3789 = vrot.slane %v3756, 4
        %v3790 = vsel %vm258, %v3764, %v3789
        %v3792 = vunpack.c.l.s4 1983009808
        %v3793 = vunpack.c.0.s8 %v3792
        %v3794 = vperm.slane %v3788, %v3793
        %v3796 = vunpack.c.l.s4 1983009808
        %v3797 = vunpack.c.0.s8 %v3796
        %v3798 = vperm.slane %v3790, %v3797
        %v3799 = vrot.slane %v3794, 4
        %v3800 = vsel %vm258, %v3799, %v3782
        %v3801 = vrot.slane %v3782, 4
        %v3802 = vsel %vm258, %v3794, %v3801
        %v3804 = vunpack.c.l.s4 1934713408
        %v3805 = vunpack.c.0.s8 %v3804
        %v3806 = vperm.slane %v3800, %v3805
        %v3808 = vunpack.c.l.s4 1934713408
        %v3809 = vunpack.c.0.s8 %v3808
        %v3810 = vperm.slane %v3802, %v3809
        %v3811 = vrot.slane %v3798, 4
        %v3812 = vsel %vm258, %v3811, %v3786
        %v3813 = vrot.slane %v3786, 4
        %v3814 = vsel %vm258, %v3798, %v3813
        %v3816 = vunpack.c.l.s4 1934713408
        %v3817 = vunpack.c.0.s8 %v3816
        %v3818 = vperm.slane %v3812, %v3817
        %v3820 = vunpack.c.l.s4 1934713408
        %v3821 = vunpack.c.0.s8 %v3820
        %v3822 = vperm.slane %v3814, %v3821
        %v3823 = vrot.slane %v3806, 4
        %v3824 = vsel %vm258, 0.0, %v3823
        %v3825 = vrot.slane %v3810, 4
        %v3826 = vsel %vm258, 0.0, %v3825
        %v3827 = vrot.slane %v3818, 4
        %v3828 = vsel %vm258, 0.0, %v3827
        %v3829 = vrot.slane %v3822, 4
        %v3830 = vsel %vm258, 0.0, %v3829
        %v3831 = vrot.slane %v3762, 4
        %v3832 = vsel %vm258, %v3831, %v3754
        %v3833 = vrot.slane %v3754, 4
        %v3834 = vsel %vm258, %v3762, %v3833
        %v3836 = vunpack.c.l.s4 1983009808
        %v3837 = vunpack.c.0.s8 %v3836
        %v3838 = vperm.slane %v3832, %v3837
        %v3840 = vunpack.c.l.s4 1983009808
        %v3841 = vunpack.c.0.s8 %v3840
        %v3842 = vperm.slane %v3834, %v3841
        %v3843 = vrot.slane %v3766, 4
        %v3844 = vsel %vm258, %v3843, %v3758
        %v3845 = vrot.slane %v3758, 4
        %v3846 = vsel %vm258, %v3766, %v3845
        %v3848 = vunpack.c.l.s4 1983009808
        %v3849 = vunpack.c.0.s8 %v3848
        %v3850 = vperm.slane %v3844, %v3849
        %v3852 = vunpack.c.l.s4 1983009808
        %v3853 = vunpack.c.0.s8 %v3852
        %v3854 = vperm.slane %v3846, %v3853
        %v3855 = vrot.slane %v3850, 4
        %v3856 = vsel %vm258, %v3855, %v3838
        %v3857 = vrot.slane %v3838, 4
        %v3858 = vsel %vm258, %v3850, %v3857
        %v3860 = vunpack.c.l.s4 1934713408
        %v3861 = vunpack.c.0.s8 %v3860
        %v3862 = vperm.slane %v3856, %v3861
        %v3864 = vunpack.c.l.s4 1934713408
        %v3865 = vunpack.c.0.s8 %v3864
        %v3866 = vperm.slane %v3858, %v3865
        %v3867 = vrot.slane %v3854, 4
        %v3868 = vsel %vm258, %v3867, %v3842
        %v3869 = vrot.slane %v3842, 4
        %v3870 = vsel %vm258, %v3854, %v3869
        %v3872 = vunpack.c.l.s4 1934713408
        %v3873 = vunpack.c.0.s8 %v3872
        %v3874 = vperm.slane %v3868, %v3873
        %v3876 = vunpack.c.l.s4 1934713408
        %v3877 = vunpack.c.0.s8 %v3876
        %v3878 = vperm.slane %v3870, %v3877
        %v3879 = vrot.slane %v3862, 4
        %v3880 = vsel %vm258, 0.0, %v3879
        %v3881 = vrot.slane %v3866, 4
        %v3882 = vsel %vm258, 0.0, %v3881
        %v3883 = vrot.slane %v3874, 4
        %v3884 = vsel %vm258, 0.0, %v3883
        %v3885 = vrot.slane %v3878, 4
        %v3886 = vsel %vm258, 0.0, %v3885
        %3888 = vrot.lane.b32.xlu0 %v3824, 16
        %v3889 = vpop.permute.xlu0 %3888
        %3892 = vrot.lane.b32.xlu0 %v3810, 32
        %v3893 = vpop.permute.xlu0 %3892
        %3896 = vrot.lane.b32.xlu0 %v3826, 48
        %v3897 = vpop.permute.xlu0 %3896
        %3900 = vrot.lane.b32.xlu0 %v3818, 64
        %v3901 = vpop.permute.xlu0 %3900
        %3904 = vrot.lane.b32.xlu0 %v3828, 80
        %v3905 = vpop.permute.xlu0 %3904
        %3908 = vrot.lane.b32.xlu0 %v3822, 96
        %v3909 = vpop.permute.xlu0 %3908
        %3912 = vrot.lane.b32.xlu0 %v3830, 112
        %v3913 = vpop.permute.xlu0 %3912
        %3916 = vrot.lane.b32.xlu0 %v3880, 16
        %v3917 = vpop.permute.xlu0 %3916
        %3920 = vrot.lane.b32.xlu0 %v3866, 32
        %v3921 = vpop.permute.xlu0 %3920
        %3924 = vrot.lane.b32.xlu0 %v3882, 48
        %v3925 = vpop.permute.xlu0 %3924
        %3928 = vrot.lane.b32.xlu0 %v3874, 64
        %v3929 = vpop.permute.xlu0 %3928
        %3932 = vrot.lane.b32.xlu0 %v3884, 80
        %v3933 = vpop.permute.xlu0 %3932
        %3936 = vrot.lane.b32.xlu0 %v3878, 96
        %v3937 = vpop.permute.xlu0 %3936
        %3940 = vrot.lane.b32.xlu0 %v3886, 112
        %v3941 = vpop.permute.xlu0 %3940
        %v3943 = vsel %vm772, %v3806, %v3889
        %v3944 = vsel %vm774, %v3943, %v3893
        %v3945 = vsel %vm776, %v3944, %v3897
        %v3946 = vsel %vm778, %v3945, %v3901
        %v3947 = vsel %vm780, %v3946, %v3905
        %v3948 = vsel %vm782, %v3947, %v3909
        %v3949 = vsel %vm784, %v3948, %v3913
        %v3950 = vsel %vm772, %v3862, %v3917
        %v3951 = vsel %vm774, %v3950, %v3921
        %v3952 = vsel %vm776, %v3951, %v3925
        %v3953 = vsel %vm778, %v3952, %v3929
        %v3954 = vsel %vm780, %v3953, %v3933
        %v3955 = vsel %vm782, %v3954, %v3937
        %v3956 = vsel %vm784, %v3955, %v3941
        %3957 = vrot.lane.b32.xlu0 %v3543, 126
        %v3958 = vpop.permute.xlu0 %3957
        %3959 = vrot.lane.b32.xlu0 %v3545, 126
        %v3960 = vpop.permute.xlu0 %3959
        %3961 = vrot.lane.b32.xlu0 %v3548, 126
        %v3962 = vpop.permute.xlu0 %3961
        %3963 = vrot.lane.b32.xlu0 %v3550, 126
        %v3964 = vpop.permute.xlu0 %3963
        %3965 = vrot.lane.b32.xlu0 %v3553, 126
        %v3966 = vpop.permute.xlu0 %3965
        %3967 = vrot.lane.b32.xlu0 %v3555, 126
        %v3968 = vpop.permute.xlu0 %3967
        %3969 = vrot.lane.b32.xlu0 %v3558, 126
        %v3970 = vpop.permute.xlu0 %3969
        %3971 = vrot.lane.b32.xlu0 %v3560, 126
        %v3972 = vpop.permute.xlu0 %3971
        %v3981 = vrot.slane %v3966, 4
        %v3982 = vsel %vm258, %v3981, %v3958
        %v3983 = vrot.slane %v3958, 4
        %v3984 = vsel %vm258, %v3966, %v3983
        %v3986 = vunpack.c.l.s4 1983009808
        %v3987 = vunpack.c.0.s8 %v3986
        %v3988 = vperm.slane %v3982, %v3987
        %v3990 = vunpack.c.l.s4 1983009808
        %v3991 = vunpack.c.0.s8 %v3990
        %v3992 = vperm.slane %v3984, %v3991
        %v3993 = vrot.slane %v3970, 4
        %v3994 = vsel %vm258, %v3993, %v3962
        %v3995 = vrot.slane %v3962, 4
        %v3996 = vsel %vm258, %v3970, %v3995
        %v3998 = vunpack.c.l.s4 1983009808
        %v3999 = vunpack.c.0.s8 %v3998
        %v4000 = vperm.slane %v3994, %v3999
        %v4002 = vunpack.c.l.s4 1983009808
        %v4003 = vunpack.c.0.s8 %v4002
        %v4004 = vperm.slane %v3996, %v4003
        %v4005 = vrot.slane %v4000, 4
        %v4006 = vsel %vm258, %v4005, %v3988
        %v4007 = vrot.slane %v3988, 4
        %v4008 = vsel %vm258, %v4000, %v4007
        %v4010 = vunpack.c.l.s4 1934713408
        %v4011 = vunpack.c.0.s8 %v4010
        %v4012 = vperm.slane %v4006, %v4011
        %v4014 = vunpack.c.l.s4 1934713408
        %v4015 = vunpack.c.0.s8 %v4014
        %v4016 = vperm.slane %v4008, %v4015
        %v4017 = vrot.slane %v4004, 4
        %v4018 = vsel %vm258, %v4017, %v3992
        %v4019 = vrot.slane %v3992, 4
        %v4020 = vsel %vm258, %v4004, %v4019
        %v4022 = vunpack.c.l.s4 1934713408
        %v4023 = vunpack.c.0.s8 %v4022
        %v4024 = vperm.slane %v4018, %v4023
        %v4026 = vunpack.c.l.s4 1934713408
        %v4027 = vunpack.c.0.s8 %v4026
        %v4028 = vperm.slane %v4020, %v4027
        %v4029 = vrot.slane %v4012, 4
        %v4030 = vsel %vm258, 0.0, %v4029
        %v4031 = vrot.slane %v4016, 4
        %v4032 = vsel %vm258, 0.0, %v4031
        %v4033 = vrot.slane %v4024, 4
        %v4034 = vsel %vm258, 0.0, %v4033
        %v4035 = vrot.slane %v4028, 4
        %v4036 = vsel %vm258, 0.0, %v4035
        %v4037 = vrot.slane %v3968, 4
        %v4038 = vsel %vm258, %v4037, %v3960
        %v4039 = vrot.slane %v3960, 4
        %v4040 = vsel %vm258, %v3968, %v4039
        %v4042 = vunpack.c.l.s4 1983009808
        %v4043 = vunpack.c.0.s8 %v4042
        %v4044 = vperm.slane %v4038, %v4043
        %v4046 = vunpack.c.l.s4 1983009808
        %v4047 = vunpack.c.0.s8 %v4046
        %v4048 = vperm.slane %v4040, %v4047
        %v4049 = vrot.slane %v3972, 4
        %v4050 = vsel %vm258, %v4049, %v3964
        %v4051 = vrot.slane %v3964, 4
        %v4052 = vsel %vm258, %v3972, %v4051
        %v4054 = vunpack.c.l.s4 1983009808
        %v4055 = vunpack.c.0.s8 %v4054
        %v4056 = vperm.slane %v4050, %v4055
        %v4058 = vunpack.c.l.s4 1983009808
        %v4059 = vunpack.c.0.s8 %v4058
        %v4060 = vperm.slane %v4052, %v4059
        %v4061 = vrot.slane %v4056, 4
        %v4062 = vsel %vm258, %v4061, %v4044
        %v4063 = vrot.slane %v4044, 4
        %v4064 = vsel %vm258, %v4056, %v4063
        %v4066 = vunpack.c.l.s4 1934713408
        %v4067 = vunpack.c.0.s8 %v4066
        %v4068 = vperm.slane %v4062, %v4067
        %v4070 = vunpack.c.l.s4 1934713408
        %v4071 = vunpack.c.0.s8 %v4070
        %v4072 = vperm.slane %v4064, %v4071
        %v4073 = vrot.slane %v4060, 4
        %v4074 = vsel %vm258, %v4073, %v4048
        %v4075 = vrot.slane %v4048, 4
        %v4076 = vsel %vm258, %v4060, %v4075
        %v4078 = vunpack.c.l.s4 1934713408
        %v4079 = vunpack.c.0.s8 %v4078
        %v4080 = vperm.slane %v4074, %v4079
        %v4082 = vunpack.c.l.s4 1934713408
        %v4083 = vunpack.c.0.s8 %v4082
        %v4084 = vperm.slane %v4076, %v4083
        %v4085 = vrot.slane %v4068, 4
        %v4086 = vsel %vm258, 0.0, %v4085
        %v4087 = vrot.slane %v4072, 4
        %v4088 = vsel %vm258, 0.0, %v4087
        %v4089 = vrot.slane %v4080, 4
        %v4090 = vsel %vm258, 0.0, %v4089
        %v4091 = vrot.slane %v4084, 4
        %v4092 = vsel %vm258, 0.0, %v4091
        %4094 = vrot.lane.b32.xlu0 %v4030, 16
        %v4095 = vpop.permute.xlu0 %4094
        %4098 = vrot.lane.b32.xlu0 %v4016, 32
        %v4099 = vpop.permute.xlu0 %4098
        %4102 = vrot.lane.b32.xlu0 %v4032, 48
        %v4103 = vpop.permute.xlu0 %4102
        %4106 = vrot.lane.b32.xlu0 %v4024, 64
        %v4107 = vpop.permute.xlu0 %4106
        %4110 = vrot.lane.b32.xlu0 %v4034, 80
        %v4111 = vpop.permute.xlu0 %4110
        %4114 = vrot.lane.b32.xlu0 %v4028, 96
        %v4115 = vpop.permute.xlu0 %4114
        %4118 = vrot.lane.b32.xlu0 %v4036, 112
        %v4119 = vpop.permute.xlu0 %4118
        %4122 = vrot.lane.b32.xlu0 %v4086, 16
        %v4123 = vpop.permute.xlu0 %4122
        %4126 = vrot.lane.b32.xlu0 %v4072, 32
        %v4127 = vpop.permute.xlu0 %4126
        %4130 = vrot.lane.b32.xlu0 %v4088, 48
        %v4131 = vpop.permute.xlu0 %4130
        %4134 = vrot.lane.b32.xlu0 %v4080, 64
        %v4135 = vpop.permute.xlu0 %4134
        %4138 = vrot.lane.b32.xlu0 %v4090, 80
        %v4139 = vpop.permute.xlu0 %4138
        %4142 = vrot.lane.b32.xlu0 %v4084, 96
        %v4143 = vpop.permute.xlu0 %4142
        %4146 = vrot.lane.b32.xlu0 %v4092, 112
        %v4147 = vpop.permute.xlu0 %4146
        %v4149 = vsel %vm772, %v4012, %v4095
        %v4150 = vsel %vm774, %v4149, %v4099
        %v4151 = vsel %vm776, %v4150, %v4103
        %v4152 = vsel %vm778, %v4151, %v4107
        %v4153 = vsel %vm780, %v4152, %v4111
        %v4154 = vsel %vm782, %v4153, %v4115
        %v4155 = vsel %vm784, %v4154, %v4119
        %v4156 = vsel %vm772, %v4068, %v4123
        %v4157 = vsel %vm774, %v4156, %v4127
        %v4158 = vsel %vm776, %v4157, %v4131
        %v4159 = vsel %vm778, %v4158, %v4135
        %v4160 = vsel %vm780, %v4159, %v4139
        %v4161 = vsel %vm782, %v4160, %v4143
        %v4162 = vsel %vm784, %v4161, %v4147
        %v4163 = vrot.slane %v2923, 2
        %v4164 = vrot.slane %v2924, 2
        %v4165 = vsel %vm1840, %v4163, %v4164
        %v4166 = vrot.slane %v2925, 2
        %v4167 = vsel %vm1840, %v4164, %v4166
        %v4168 = vrot.slane %v2926, 2
        %v4169 = vrot.slane %v2927, 2
        %v4170 = vsel %vm1840, %v4168, %v4169
        %v4171 = vrot.slane %v2928, 2
        %v4172 = vsel %vm1840, %v4169, %v4171
        %v4173 = vrot.slane %v2929, 2
        %v4174 = vrot.slane %v2930, 2
        %v4175 = vsel %vm1840, %v4173, %v4174
        %v4176 = vrot.slane %v2931, 2
        %v4177 = vsel %vm1840, %v4174, %v4176
        %v4178 = vrot.slane %v2932, 2
        %v4179 = vrot.slane %v2933, 2
        %v4180 = vsel %vm1840, %v4178, %v4179
        %v4181 = vrot.slane %v2934, 2
        %v4182 = vsel %vm1840, %v4179, %v4181
        %v4191 = vrot.slane %v4175, 4
        %v4192 = vsel %vm258, %v4191, %v4165
        %v4193 = vrot.slane %v4165, 4
        %v4194 = vsel %vm258, %v4175, %v4193
        %v4196 = vunpack.c.l.s4 1983009808
        %v4197 = vunpack.c.0.s8 %v4196
        %v4198 = vperm.slane %v4192, %v4197
        %v4200 = vunpack.c.l.s4 1983009808
        %v4201 = vunpack.c.0.s8 %v4200
        %v4202 = vperm.slane %v4194, %v4201
        %v4203 = vrot.slane %v4180, 4
        %v4204 = vsel %vm258, %v4203, %v4170
        %v4205 = vrot.slane %v4170, 4
        %v4206 = vsel %vm258, %v4180, %v4205
        %v4208 = vunpack.c.l.s4 1983009808
        %v4209 = vunpack.c.0.s8 %v4208
        %v4210 = vperm.slane %v4204, %v4209
        %v4212 = vunpack.c.l.s4 1983009808
        %v4213 = vunpack.c.0.s8 %v4212
        %v4214 = vperm.slane %v4206, %v4213
        %v4215 = vrot.slane %v4210, 4
        %v4216 = vsel %vm258, %v4215, %v4198
        %v4217 = vrot.slane %v4198, 4
        %v4218 = vsel %vm258, %v4210, %v4217
        %v4220 = vunpack.c.l.s4 1934713408
        %v4221 = vunpack.c.0.s8 %v4220
        %v4222 = vperm.slane %v4216, %v4221
        %v4224 = vunpack.c.l.s4 1934713408
        %v4225 = vunpack.c.0.s8 %v4224
        %v4226 = vperm.slane %v4218, %v4225
        %v4227 = vrot.slane %v4214, 4
        %v4228 = vsel %vm258, %v4227, %v4202
        %v4229 = vrot.slane %v4202, 4
        %v4230 = vsel %vm258, %v4214, %v4229
        %v4232 = vunpack.c.l.s4 1934713408
        %v4233 = vunpack.c.0.s8 %v4232
        %v4234 = vperm.slane %v4228, %v4233
        %v4236 = vunpack.c.l.s4 1934713408
        %v4237 = vunpack.c.0.s8 %v4236
        %v4238 = vperm.slane %v4230, %v4237
        %v4239 = vrot.slane %v4222, 4
        %v4240 = vsel %vm258, 0.0, %v4239
        %v4241 = vrot.slane %v4226, 4
        %v4242 = vsel %vm258, 0.0, %v4241
        %v4243 = vrot.slane %v4234, 4
        %v4244 = vsel %vm258, 0.0, %v4243
        %v4245 = vrot.slane %v4238, 4
        %v4246 = vsel %vm258, 0.0, %v4245
        %v4247 = vrot.slane %v4177, 4
        %v4248 = vsel %vm258, %v4247, %v4167
        %v4249 = vrot.slane %v4167, 4
        %v4250 = vsel %vm258, %v4177, %v4249
        %v4252 = vunpack.c.l.s4 1983009808
        %v4253 = vunpack.c.0.s8 %v4252
        %v4254 = vperm.slane %v4248, %v4253
        %v4256 = vunpack.c.l.s4 1983009808
        %v4257 = vunpack.c.0.s8 %v4256
        %v4258 = vperm.slane %v4250, %v4257
        %v4259 = vrot.slane %v4182, 4
        %v4260 = vsel %vm258, %v4259, %v4172
        %v4261 = vrot.slane %v4172, 4
        %v4262 = vsel %vm258, %v4182, %v4261
        %v4264 = vunpack.c.l.s4 1983009808
        %v4265 = vunpack.c.0.s8 %v4264
        %v4266 = vperm.slane %v4260, %v4265
        %v4268 = vunpack.c.l.s4 1983009808
        %v4269 = vunpack.c.0.s8 %v4268
        %v4270 = vperm.slane %v4262, %v4269
        %v4271 = vrot.slane %v4266, 4
        %v4272 = vsel %vm258, %v4271, %v4254
        %v4273 = vrot.slane %v4254, 4
        %v4274 = vsel %vm258, %v4266, %v4273
        %v4276 = vunpack.c.l.s4 1934713408
        %v4277 = vunpack.c.0.s8 %v4276
        %v4278 = vperm.slane %v4272, %v4277
        %v4280 = vunpack.c.l.s4 1934713408
        %v4281 = vunpack.c.0.s8 %v4280
        %v4282 = vperm.slane %v4274, %v4281
        %v4283 = vrot.slane %v4270, 4
        %v4284 = vsel %vm258, %v4283, %v4258
        %v4285 = vrot.slane %v4258, 4
        %v4286 = vsel %vm258, %v4270, %v4285
        %v4288 = vunpack.c.l.s4 1934713408
        %v4289 = vunpack.c.0.s8 %v4288
        %v4290 = vperm.slane %v4284, %v4289
        %v4292 = vunpack.c.l.s4 1934713408
        %v4293 = vunpack.c.0.s8 %v4292
        %v4294 = vperm.slane %v4286, %v4293
        %v4295 = vrot.slane %v4278, 4
        %v4296 = vsel %vm258, 0.0, %v4295
        %v4297 = vrot.slane %v4282, 4
        %v4298 = vsel %vm258, 0.0, %v4297
        %v4299 = vrot.slane %v4290, 4
        %v4300 = vsel %vm258, 0.0, %v4299
        %v4301 = vrot.slane %v4294, 4
        %v4302 = vsel %vm258, 0.0, %v4301
        %4304 = vrot.lane.b32.xlu0 %v4240, 16
        %v4305 = vpop.permute.xlu0 %4304
        %4308 = vrot.lane.b32.xlu0 %v4226, 32
        %v4309 = vpop.permute.xlu0 %4308
        %4312 = vrot.lane.b32.xlu0 %v4242, 48
        %v4313 = vpop.permute.xlu0 %4312
        %4316 = vrot.lane.b32.xlu0 %v4234, 64
        %v4317 = vpop.permute.xlu0 %4316
        %4320 = vrot.lane.b32.xlu0 %v4244, 80
        %v4321 = vpop.permute.xlu0 %4320
        %4324 = vrot.lane.b32.xlu0 %v4238, 96
        %v4325 = vpop.permute.xlu0 %4324
        %4328 = vrot.lane.b32.xlu0 %v4246, 112
        %v4329 = vpop.permute.xlu0 %4328
        %4332 = vrot.lane.b32.xlu0 %v4296, 16
        %v4333 = vpop.permute.xlu0 %4332
        %4336 = vrot.lane.b32.xlu0 %v4282, 32
        %v4337 = vpop.permute.xlu0 %4336
        %4340 = vrot.lane.b32.xlu0 %v4298, 48
        %v4341 = vpop.permute.xlu0 %4340
        %4344 = vrot.lane.b32.xlu0 %v4290, 64
        %v4345 = vpop.permute.xlu0 %4344
        %4348 = vrot.lane.b32.xlu0 %v4300, 80
        %v4349 = vpop.permute.xlu0 %4348
        %4352 = vrot.lane.b32.xlu0 %v4294, 96
        %v4353 = vpop.permute.xlu0 %4352
        %4356 = vrot.lane.b32.xlu0 %v4302, 112
        %v4357 = vpop.permute.xlu0 %4356
        %v4359 = vsel %vm772, %v4222, %v4305
        %v4360 = vsel %vm774, %v4359, %v4309
        %v4361 = vsel %vm776, %v4360, %v4313
        %v4362 = vsel %vm778, %v4361, %v4317
        %v4363 = vsel %vm780, %v4362, %v4321
        %v4364 = vsel %vm782, %v4363, %v4325
        %v4365 = vsel %vm784, %v4364, %v4329
        %v4366 = vsel %vm772, %v4278, %v4333
        %v4367 = vsel %vm774, %v4366, %v4337
        %v4368 = vsel %vm776, %v4367, %v4341
        %v4369 = vsel %vm778, %v4368, %v4345
        %v4370 = vsel %vm780, %v4369, %v4349
        %v4371 = vsel %vm782, %v4370, %v4353
        %v4372 = vsel %vm784, %v4371, %v4357
        %4373 = vrot.lane.b32.xlu0 %v4165, 127
        %v4374 = vpop.permute.xlu0 %4373
        %4375 = vrot.lane.b32.xlu0 %v4167, 127
        %v4376 = vpop.permute.xlu0 %4375
        %4377 = vrot.lane.b32.xlu0 %v4170, 127
        %v4378 = vpop.permute.xlu0 %4377
        %4379 = vrot.lane.b32.xlu0 %v4172, 127
        %v4380 = vpop.permute.xlu0 %4379
        %4381 = vrot.lane.b32.xlu0 %v4175, 127
        %v4382 = vpop.permute.xlu0 %4381
        %4383 = vrot.lane.b32.xlu0 %v4177, 127
        %v4384 = vpop.permute.xlu0 %4383
        %4385 = vrot.lane.b32.xlu0 %v4180, 127
        %v4386 = vpop.permute.xlu0 %4385
        %4387 = vrot.lane.b32.xlu0 %v4182, 127
        %v4388 = vpop.permute.xlu0 %4387
        %v4397 = vrot.slane %v4382, 4
        %v4398 = vsel %vm258, %v4397, %v4374
        %v4399 = vrot.slane %v4374, 4
        %v4400 = vsel %vm258, %v4382, %v4399
        %v4402 = vunpack.c.l.s4 1983009808
        %v4403 = vunpack.c.0.s8 %v4402
        %v4404 = vperm.slane %v4398, %v4403
        %v4406 = vunpack.c.l.s4 1983009808
        %v4407 = vunpack.c.0.s8 %v4406
        %v4408 = vperm.slane %v4400, %v4407
        %v4409 = vrot.slane %v4386, 4
        %v4410 = vsel %vm258, %v4409, %v4378
        %v4411 = vrot.slane %v4378, 4
        %v4412 = vsel %vm258, %v4386, %v4411
        %v4414 = vunpack.c.l.s4 1983009808
        %v4415 = vunpack.c.0.s8 %v4414
        %v4416 = vperm.slane %v4410, %v4415
        %v4418 = vunpack.c.l.s4 1983009808
        %v4419 = vunpack.c.0.s8 %v4418
        %v4420 = vperm.slane %v4412, %v4419
        %v4421 = vrot.slane %v4416, 4
        %v4422 = vsel %vm258, %v4421, %v4404
        %v4423 = vrot.slane %v4404, 4
        %v4424 = vsel %vm258, %v4416, %v4423
        %v4426 = vunpack.c.l.s4 1934713408
        %v4427 = vunpack.c.0.s8 %v4426
        %v4428 = vperm.slane %v4422, %v4427
        %v4430 = vunpack.c.l.s4 1934713408
        %v4431 = vunpack.c.0.s8 %v4430
        %v4432 = vperm.slane %v4424, %v4431
        %v4433 = vrot.slane %v4420, 4
        %v4434 = vsel %vm258, %v4433, %v4408
        %v4435 = vrot.slane %v4408, 4
        %v4436 = vsel %vm258, %v4420, %v4435
        %v4438 = vunpack.c.l.s4 1934713408
        %v4439 = vunpack.c.0.s8 %v4438
        %v4440 = vperm.slane %v4434, %v4439
        %v4442 = vunpack.c.l.s4 1934713408
        %v4443 = vunpack.c.0.s8 %v4442
        %v4444 = vperm.slane %v4436, %v4443
        %v4445 = vrot.slane %v4428, 4
        %v4446 = vsel %vm258, 0.0, %v4445
        %v4447 = vrot.slane %v4432, 4
        %v4448 = vsel %vm258, 0.0, %v4447
        %v4449 = vrot.slane %v4440, 4
        %v4450 = vsel %vm258, 0.0, %v4449
        %v4451 = vrot.slane %v4444, 4
        %v4452 = vsel %vm258, 0.0, %v4451
        %v4453 = vrot.slane %v4384, 4
        %v4454 = vsel %vm258, %v4453, %v4376
        %v4455 = vrot.slane %v4376, 4
        %v4456 = vsel %vm258, %v4384, %v4455
        %v4458 = vunpack.c.l.s4 1983009808
        %v4459 = vunpack.c.0.s8 %v4458
        %v4460 = vperm.slane %v4454, %v4459
        %v4462 = vunpack.c.l.s4 1983009808
        %v4463 = vunpack.c.0.s8 %v4462
        %v4464 = vperm.slane %v4456, %v4463
        %v4465 = vrot.slane %v4388, 4
        %v4466 = vsel %vm258, %v4465, %v4380
        %v4467 = vrot.slane %v4380, 4
        %v4468 = vsel %vm258, %v4388, %v4467
        %v4470 = vunpack.c.l.s4 1983009808
        %v4471 = vunpack.c.0.s8 %v4470
        %v4472 = vperm.slane %v4466, %v4471
        %v4474 = vunpack.c.l.s4 1983009808
        %v4475 = vunpack.c.0.s8 %v4474
        %v4476 = vperm.slane %v4468, %v4475
        %v4477 = vrot.slane %v4472, 4
        %v4478 = vsel %vm258, %v4477, %v4460
        %v4479 = vrot.slane %v4460, 4
        %v4480 = vsel %vm258, %v4472, %v4479
        %v4482 = vunpack.c.l.s4 1934713408
        %v4483 = vunpack.c.0.s8 %v4482
        %v4484 = vperm.slane %v4478, %v4483
        %v4486 = vunpack.c.l.s4 1934713408
        %v4487 = vunpack.c.0.s8 %v4486
        %v4488 = vperm.slane %v4480, %v4487
        %v4489 = vrot.slane %v4476, 4
        %v4490 = vsel %vm258, %v4489, %v4464
        %v4491 = vrot.slane %v4464, 4
        %v4492 = vsel %vm258, %v4476, %v4491
        %v4494 = vunpack.c.l.s4 1934713408
        %v4495 = vunpack.c.0.s8 %v4494
        %v4496 = vperm.slane %v4490, %v4495
        %v4498 = vunpack.c.l.s4 1934713408
        %v4499 = vunpack.c.0.s8 %v4498
        %v4500 = vperm.slane %v4492, %v4499
        %v4501 = vrot.slane %v4484, 4
        %v4502 = vsel %vm258, 0.0, %v4501
        %v4503 = vrot.slane %v4488, 4
        %v4504 = vsel %vm258, 0.0, %v4503
        %v4505 = vrot.slane %v4496, 4
        %v4506 = vsel %vm258, 0.0, %v4505
        %v4507 = vrot.slane %v4500, 4
        %v4508 = vsel %vm258, 0.0, %v4507
        %4510 = vrot.lane.b32.xlu0 %v4446, 16
        %v4511 = vpop.permute.xlu0 %4510
        %4514 = vrot.lane.b32.xlu0 %v4432, 32
        %v4515 = vpop.permute.xlu0 %4514
        %4518 = vrot.lane.b32.xlu0 %v4448, 48
        %v4519 = vpop.permute.xlu0 %4518
        %4522 = vrot.lane.b32.xlu0 %v4440, 64
        %v4523 = vpop.permute.xlu0 %4522
        %4526 = vrot.lane.b32.xlu0 %v4450, 80
        %v4527 = vpop.permute.xlu0 %4526
        %4530 = vrot.lane.b32.xlu0 %v4444, 96
        %v4531 = vpop.permute.xlu0 %4530
        %4534 = vrot.lane.b32.xlu0 %v4452, 112
        %v4535 = vpop.permute.xlu0 %4534
        %4538 = vrot.lane.b32.xlu0 %v4502, 16
        %v4539 = vpop.permute.xlu0 %4538
        %4542 = vrot.lane.b32.xlu0 %v4488, 32
        %v4543 = vpop.permute.xlu0 %4542
        %4546 = vrot.lane.b32.xlu0 %v4504, 48
        %v4547 = vpop.permute.xlu0 %4546
        %4550 = vrot.lane.b32.xlu0 %v4496, 64
        %v4551 = vpop.permute.xlu0 %4550
        %4554 = vrot.lane.b32.xlu0 %v4506, 80
        %v4555 = vpop.permute.xlu0 %4554
        %4558 = vrot.lane.b32.xlu0 %v4500, 96
        %v4559 = vpop.permute.xlu0 %4558
        %4562 = vrot.lane.b32.xlu0 %v4508, 112
        %v4563 = vpop.permute.xlu0 %4562
        %v4565 = vsel %vm772, %v4428, %v4511
        %v4566 = vsel %vm774, %v4565, %v4515
        %v4567 = vsel %vm776, %v4566, %v4519
        %v4568 = vsel %vm778, %v4567, %v4523
        %v4569 = vsel %vm780, %v4568, %v4527
        %v4570 = vsel %vm782, %v4569, %v4531
        %v4571 = vsel %vm784, %v4570, %v4535
        %v4572 = vsel %vm772, %v4484, %v4539
        %v4573 = vsel %vm774, %v4572, %v4543
        %v4574 = vsel %vm776, %v4573, %v4547
        %v4575 = vsel %vm778, %v4574, %v4551
        %v4576 = vsel %vm780, %v4575, %v4555
        %v4577 = vsel %vm782, %v4576, %v4559
        %v4578 = vsel %vm784, %v4577, %v4563
        %4579 = vrot.lane.b32.xlu0 %v4165, 126
        %v4580 = vpop.permute.xlu0 %4579
        %4581 = vrot.lane.b32.xlu0 %v4167, 126
        %v4582 = vpop.permute.xlu0 %4581
        %4583 = vrot.lane.b32.xlu0 %v4170, 126
        %v4584 = vpop.permute.xlu0 %4583
        %4585 = vrot.lane.b32.xlu0 %v4172, 126
        %v4586 = vpop.permute.xlu0 %4585
        %4587 = vrot.lane.b32.xlu0 %v4175, 126
        %v4588 = vpop.permute.xlu0 %4587
        %4589 = vrot.lane.b32.xlu0 %v4177, 126
        %v4590 = vpop.permute.xlu0 %4589
        %4591 = vrot.lane.b32.xlu0 %v4180, 126
        %v4592 = vpop.permute.xlu0 %4591
        %4593 = vrot.lane.b32.xlu0 %v4182, 126
        %v4594 = vpop.permute.xlu0 %4593
        %v4603 = vrot.slane %v4588, 4
        %v4604 = vsel %vm258, %v4603, %v4580
        %v4605 = vrot.slane %v4580, 4
        %v4606 = vsel %vm258, %v4588, %v4605
        %v4608 = vunpack.c.l.s4 1983009808
        %v4609 = vunpack.c.0.s8 %v4608
        %v4610 = vperm.slane %v4604, %v4609
        %v4612 = vunpack.c.l.s4 1983009808
        %v4613 = vunpack.c.0.s8 %v4612
        %v4614 = vperm.slane %v4606, %v4613
        %v4615 = vrot.slane %v4592, 4
        %v4616 = vsel %vm258, %v4615, %v4584
        %v4617 = vrot.slane %v4584, 4
        %v4618 = vsel %vm258, %v4592, %v4617
        %v4620 = vunpack.c.l.s4 1983009808
        %v4621 = vunpack.c.0.s8 %v4620
        %v4622 = vperm.slane %v4616, %v4621
        %v4624 = vunpack.c.l.s4 1983009808
        %v4625 = vunpack.c.0.s8 %v4624
        %v4626 = vperm.slane %v4618, %v4625
        %v4627 = vrot.slane %v4622, 4
        %v4628 = vsel %vm258, %v4627, %v4610
        %v4629 = vrot.slane %v4610, 4
        %v4630 = vsel %vm258, %v4622, %v4629
        %v4632 = vunpack.c.l.s4 1934713408
        %v4633 = vunpack.c.0.s8 %v4632
        %v4634 = vperm.slane %v4628, %v4633
        %v4636 = vunpack.c.l.s4 1934713408
        %v4637 = vunpack.c.0.s8 %v4636
        %v4638 = vperm.slane %v4630, %v4637
        %v4639 = vrot.slane %v4626, 4
        %v4640 = vsel %vm258, %v4639, %v4614
        %v4641 = vrot.slane %v4614, 4
        %v4642 = vsel %vm258, %v4626, %v4641
        %v4644 = vunpack.c.l.s4 1934713408
        %v4645 = vunpack.c.0.s8 %v4644
        %v4646 = vperm.slane %v4640, %v4645
        %v4648 = vunpack.c.l.s4 1934713408
        %v4649 = vunpack.c.0.s8 %v4648
        %v4650 = vperm.slane %v4642, %v4649
        %v4651 = vrot.slane %v4634, 4
        %v4652 = vsel %vm258, 0.0, %v4651
        %v4653 = vrot.slane %v4638, 4
        %v4654 = vsel %vm258, 0.0, %v4653
        %v4655 = vrot.slane %v4646, 4
        %v4656 = vsel %vm258, 0.0, %v4655
        %v4657 = vrot.slane %v4650, 4
        %v4658 = vsel %vm258, 0.0, %v4657
        %v4659 = vrot.slane %v4590, 4
        %v4660 = vsel %vm258, %v4659, %v4582
        %v4661 = vrot.slane %v4582, 4
        %v4662 = vsel %vm258, %v4590, %v4661
        %v4664 = vunpack.c.l.s4 1983009808
        %v4665 = vunpack.c.0.s8 %v4664
        %v4666 = vperm.slane %v4660, %v4665
        %v4668 = vunpack.c.l.s4 1983009808
        %v4669 = vunpack.c.0.s8 %v4668
        %v4670 = vperm.slane %v4662, %v4669
        %v4671 = vrot.slane %v4594, 4
        %v4672 = vsel %vm258, %v4671, %v4586
        %v4673 = vrot.slane %v4586, 4
        %v4674 = vsel %vm258, %v4594, %v4673
        %v4676 = vunpack.c.l.s4 1983009808
        %v4677 = vunpack.c.0.s8 %v4676
        %v4678 = vperm.slane %v4672, %v4677
        %v4680 = vunpack.c.l.s4 1983009808
        %v4681 = vunpack.c.0.s8 %v4680
        %v4682 = vperm.slane %v4674, %v4681
        %v4683 = vrot.slane %v4678, 4
        %v4684 = vsel %vm258, %v4683, %v4666
        %v4685 = vrot.slane %v4666, 4
        %v4686 = vsel %vm258, %v4678, %v4685
        %v4688 = vunpack.c.l.s4 1934713408
        %v4689 = vunpack.c.0.s8 %v4688
        %v4690 = vperm.slane %v4684, %v4689
        %v4692 = vunpack.c.l.s4 1934713408
        %v4693 = vunpack.c.0.s8 %v4692
        %v4694 = vperm.slane %v4686, %v4693
        %v4695 = vrot.slane %v4682, 4
        %v4696 = vsel %vm258, %v4695, %v4670
        %v4697 = vrot.slane %v4670, 4
        %v4698 = vsel %vm258, %v4682, %v4697
        %v4700 = vunpack.c.l.s4 1934713408
        %v4701 = vunpack.c.0.s8 %v4700
        %v4702 = vperm.slane %v4696, %v4701
        %v4704 = vunpack.c.l.s4 1934713408
        %v4705 = vunpack.c.0.s8 %v4704
        %v4706 = vperm.slane %v4698, %v4705
        %v4707 = vrot.slane %v4690, 4
        %v4708 = vsel %vm258, 0.0, %v4707
        %v4709 = vrot.slane %v4694, 4
        %v4710 = vsel %vm258, 0.0, %v4709
        %v4711 = vrot.slane %v4702, 4
        %v4712 = vsel %vm258, 0.0, %v4711
        %v4713 = vrot.slane %v4706, 4
        %v4714 = vsel %vm258, 0.0, %v4713
        %4716 = vrot.lane.b32.xlu0 %v4652, 16
        %v4717 = vpop.permute.xlu0 %4716
        %4720 = vrot.lane.b32.xlu0 %v4638, 32
        %v4721 = vpop.permute.xlu0 %4720
        %4724 = vrot.lane.b32.xlu0 %v4654, 48
        %v4725 = vpop.permute.xlu0 %4724
        %4728 = vrot.lane.b32.xlu0 %v4646, 64
        %v4729 = vpop.permute.xlu0 %4728
        %4732 = vrot.lane.b32.xlu0 %v4656, 80
        %v4733 = vpop.permute.xlu0 %4732
        %4736 = vrot.lane.b32.xlu0 %v4650, 96
        %v4737 = vpop.permute.xlu0 %4736
        %4740 = vrot.lane.b32.xlu0 %v4658, 112
        %v4741 = vpop.permute.xlu0 %4740
        %4744 = vrot.lane.b32.xlu0 %v4708, 16
        %v4745 = vpop.permute.xlu0 %4744
        %4748 = vrot.lane.b32.xlu0 %v4694, 32
        %v4749 = vpop.permute.xlu0 %4748
        %4752 = vrot.lane.b32.xlu0 %v4710, 48
        %v4753 = vpop.permute.xlu0 %4752
        %4756 = vrot.lane.b32.xlu0 %v4702, 64
        %v4757 = vpop.permute.xlu0 %4756
        %4760 = vrot.lane.b32.xlu0 %v4712, 80
        %v4761 = vpop.permute.xlu0 %4760
        %4764 = vrot.lane.b32.xlu0 %v4706, 96
        %v4765 = vpop.permute.xlu0 %4764
        %4768 = vrot.lane.b32.xlu0 %v4714, 112
        %v4769 = vpop.permute.xlu0 %4768
        %v4771 = vsel %vm772, %v4634, %v4717
        %v4772 = vsel %vm774, %v4771, %v4721
        %v4773 = vsel %vm776, %v4772, %v4725
        %v4774 = vsel %vm778, %v4773, %v4729
        %v4775 = vsel %vm780, %v4774, %v4733
        %v4776 = vsel %vm782, %v4775, %v4737
        %v4777 = vsel %vm784, %v4776, %v4741
        %v4778 = vsel %vm772, %v4690, %v4745
        %v4779 = vsel %vm774, %v4778, %v4749
        %v4780 = vsel %vm776, %v4779, %v4753
        %v4781 = vsel %vm778, %v4780, %v4757
        %v4782 = vsel %vm780, %v4781, %v4761
        %v4783 = vsel %vm782, %v4782, %v4765
        %v4784 = vsel %vm784, %v4783, %v4769
        %v4787 = vrot.slane %v3323, 4
        %v4788 = vrot.slane %v3330, 4
        %v4793 = vrot.slane %v3743, 4
        %v4794 = vrot.slane %v3750, 4
        %v4799 = vrot.slane %v4155, 4
        %v4800 = vrot.slane %v4162, 4
        %v4805 = vrot.slane %v4571, 4
        %v4806 = vrot.slane %v4578, 4
        %v4809 = vsel %vm2487, %v3109, %v4787
        %v4810 = vsel %vm2487, %v3116, %v4788
        %v4811 = vsel %vm2487, %v3529, %v4793
        %v4812 = vsel %vm2487, %v3536, %v4794
        %v4813 = vsel %vm2487, %v3949, %v4799
        %v4814 = vsel %vm2487, %v3956, %v4800
        %v4815 = vsel %vm2487, %v4365, %v4805
        %v4816 = vsel %vm2487, %v4372, %v4806
        %v4817 = vld [vmem:[#allocation7] sm:$0xf]
        %v4819 = vsel %vm2497, %v4817, 0
        %v4822 = vsel %vm2487, %v4777, 0
        %v4825 = vsel %vm2487, %v4784, 0
        %4827 = vmatpush.msra.mxu0 0.0
        %4828 = vmatpush.msra.mxu0 0.0
        %4829 = vmatpush.msra.mxu0 0.0
        %4830 = vmatpush.msra.mxu0 0.0
        %4831 = vmatpush.msra.mxu0 0.0
        %4832 = vmatpush.msra.mxu0 0.0
        %4833 = vmatpush.msra.mxu0 0.0
        %4834 = vmatpush.msra.mxu0 0.0
        %4835 = vmatpush.msra.mxu0 0.0
        %4836 = vmatpush.msra.mxu0 0.0
        %4837 = vmatpush.msra.mxu0 0.0
        %4838 = vmatpush.msra.mxu0 %v4822
        %4839 = vmatpush.msra.mxu0 %v4815
        %4840 = vmatpush.msra.mxu0 %v4813
        %4841 = vmatpush.msra.mxu0 %v4811
        %4842 = vmatpush.msra.mxu0 %v4809
        %4843 = vmatmul.f32.gmra.mxu0 %v4819
        %v4844 = vpop.f32.mrf.mxu0
        %v4845 = vadd.f32 0.0, %v4844
        %4846 = vdwg.mxu0
        %4847 = vmatpush.msra.mxu0 0.0
        %4848 = vmatpush.msra.mxu0 0.0
        %4849 = vmatpush.msra.mxu0 0.0
        %4850 = vmatpush.msra.mxu0 0.0
        %4851 = vmatpush.msra.mxu0 0.0
        %4852 = vmatpush.msra.mxu0 0.0
        %4853 = vmatpush.msra.mxu0 0.0
        %4854 = vmatpush.msra.mxu0 0.0
        %4855 = vmatpush.msra.mxu0 0.0
        %4856 = vmatpush.msra.mxu0 0.0
        %4857 = vmatpush.msra.mxu0 0.0
        %4858 = vmatpush.msra.mxu0 %v4825
        %4859 = vmatpush.msra.mxu0 %v4816
        %4860 = vmatpush.msra.mxu0 %v4814
        %4861 = vmatpush.msra.mxu0 %v4812
        %4862 = vmatpush.msra.mxu0 %v4810
        %4863 = vmatmul.f32.gmra.mxu0 %v4819
        %v4864 = vpop.f32.mrf.mxu0
        %v4865 = vadd.f32 0.0, %v4864
        %4866 = vdwg.mxu0
        %v4867 = vsel %vm2487, %v4845, 0.0
        %v4868 = vsel %vm2487, %v4865, 0.0
        %v4869 = vadd.f32 %v4867, %v4868
        %4870 = vadd.xlane.f32.xlu0 %v4869
        %v4871 = vpop.xlane.xlu0 %4870
        %v4872 = vmul.f32 %v4871, %v2558
        %v4873 = vmul.f32 %v4845, %v4845
        %v4874 = vmul.f32 %v4865, %v4865
        %v4875 = vsel %vm2487, %v4873, 0.0
        %v4876 = vsel %vm2487, %v4874, 0.0
        %v4877 = vadd.f32 %v4875, %v4876
        %4878 = vadd.xlane.f32.xlu0 %v4877
        %v4879 = vpop.xlane.xlu0 %4878
        %v4880 = vmul.f32 %v4879, %v2558
        %v4881 = vmul.f32 %v4872, %v4872
        %v4882 = vsub.f32 %v4880, %v4881
        %v4883 = vsub.f32 %v4845, %v4872
        %v4884 = vsub.f32 %v4865, %v4872
        %v4885 = vadd.f32 %v4882, 1e-05
        %v4886 = vrsqrt.pop %v4885
        %v4887 = vmul.f32 %v4886, %v4885
        %v4888 = vmul.f32 %v4887, %v4886
        %v4889 = vmul.f32 0.5, %v4888
        %v4890 = vsub.f32 1.5, %v4889
        %v4891 = vmul.f32 %v4886, %v4890
        %vm4892 = vweird.f32 %v4885
        %vm4893 = vweird.f32 %v4886
        %vm4894 = vmor %vm4892, %vm4893
        %v4895 = vsel %vm4894, %v4886, %v4891
        %v4896 = vmul.f32 %v4883, %v4895
        %v4897 = vmul.f32 %v4884, %v4895
        %v4900 = vrot.slane %v4897, 4
        %v4901 = vsel %vm2487, %v4896, %v4900
        %v4903 = vadd.f32 %v218, %v4901
        %4904 = vst [vmem:[%s217] sm:$0xff] %v4903
        %s4905 = sand.u32 %s97, 1
        %s4906 = scalar_lea.sflag [#allocation4], %s4905
        %s4907 = sand.u32 %s97, 1
        %s4908 = smul.addr %s4907, 8
        %s4909 = scalar_lea.vmem [#allocation8], %s4908
        // Predicated region
        $region45: #{tpu_custom_call.1} parent=31 // pred_check
          %p4910 = pneg %p107
        $region46: #{tpu_custom_call.1} parent=31 // pred_check_branch
          %4912 = sbr.rel (%p4910) target = $region48
        $region47: #{tpu_custom_call.1} parent=31 // pred_region
          %4914 = vsyncadd %s4906, 0
          %s4915 = smul.addr %s21, 2
          %s4916 = smul.addr %s4915, 4
          %s4917 = scalar_lea.hbm %s3, %s4916
          %s4919 = sshll.u32 %s4909, 4
          %s4920 = int_to_ptr.vmem [resolvable:$true] %s4919
          %s4921 = sshll.u32 %s4917, 4
          %s4922 = int_to_ptr.hbm [resolvable:$true] %s4921
          %4924 = dma.vmem_to_hbm [thread:$0]  %s4920, 128, %s4922, %s4906
        $region48: #{tpu_custom_call.1} parent=31 // pred_fallthru
          _
      $region32: #{tpu_custom_call.1} parent=5 // pred_fallthru
        _
      %p4925 = scmp.le.s32.totalorder 2, %s16
      // Predicated region
      $region49: #{tpu_custom_call.1} parent=5 // pred_check
        %p4926 = pneg %p4925
      $region50: #{tpu_custom_call.1} parent=5 // pred_check_branch
        %4928 = sbr.rel (%p4926) target = $region52
      $region51: #{tpu_custom_call.1} parent=5 // pred_region
        %s4929 = ssub.s32 %s16, 2
        // Predicated region
        $region53: #{tpu_custom_call.1} parent=51 // pred_check
          %p4930 = pneg %p113
        $region54: #{tpu_custom_call.1} parent=51 // pred_check_branch
          %4932 = sbr.rel (%p4930) target = $region56
        $region55: #{tpu_custom_call.1} parent=51 // pred_region
          %s4933 = sand.u32 %s98, 1
          %s4934 = scalar_lea.sflag [#allocation4], %s4933
          %s4935 = sand.u32 %s98, 1
          %s4936 = smul.addr %s4935, 8
          %s4937 = scalar_lea.vmem [#allocation8], %s4936
          %4939 = dma.done %s4934, 128
        $region56: #{tpu_custom_call.1} parent=51 // pred_fallthru
          _
      $region52: #{tpu_custom_call.1} parent=5 // pred_fallthru
        _
    $region6: #{tpu_custom_call.1} parent=1 // loop_footer
      %s20 = sadd.s32 1, %s16
    $region7: #{tpu_custom_call.1} parent=1 // loop_footer_branch
      %15 = sbr.rel target = $region3
    $region8: #{tpu_custom_call.1} parent=1 // loop_exit
      _
    %4940 = vsyncpa [#allocation3], 1
    %s4941 = scalar_lea.sflag [#allocation3], 1
    %4942 = vsyncpa %s4941, 1
    %4943 = vsyncpa [#allocation6], 1
    %4944 = vsyncpa [#allocation4], 1
    %s4945 = scalar_lea.sflag [#allocation4], 1
    %4946 = vsyncpa %s4945, 1

</llo_original>
